<compile_context>
chip_gen: v7x
topology: tpu7x:2x2x1
jax: 0.10.0
libtpu: 0.0.40
codegen_flags: <defaults>
</compile_context>

<pallas_src>
import functools

import jax
import jax.numpy as jnp
from jax.experimental import pallas as pl
from jax.experimental.pallas import tpu as pltpu

# ----------------------------- config ---------------------------------------
B, S, H = 2, 8, 32          # batch, seq_len, bert hidden size
NH, HD = 2, 16              # num heads, head dim (NH * HD == H)
FFN = 4 * H                 # intermediate size (= 128, lane-aligned)
NUM_LAYERS = 2              # synthetic small BERT
VOCAB, MAXPOS, NTYPE = 50, 16, 2
VOCAB_PAD = 64              # pad vocab rows for the one-hot MXU gather
PROJ = H                    # args.proj_fea_dim == bert hidden size (CLS feature dim)
OUT_LANES = 128             # lane-dense merged output slab width
LN_EPS = 1e-12              # BERT layernorm eps

# bias-slab row layout (per layer, each row zero-padded to FFN lanes; row 7 spare)
ROW_BO, ROW_LN1G, ROW_LN1B, ROW_B1, ROW_B2, ROW_LN2G, ROW_LN2B = range(7)


# --------------------------- kernel helpers ----------------------------------
def _layernorm(x, g, b):
    mean = jnp.mean(x, axis=-1, keepdims=True)
    var = jnp.mean((x - mean) ** 2, axis=-1, keepdims=True)
    return (x - mean) * jax.lax.rsqrt(var + LN_EPS) * g + b


def _gelu(x):
    # TODO(synk): tanh-approximate GELU; HF BERT 'gelu' is the exact erf form
    # (deviation < 1e-3).
    c = jnp.float32(0.7978845608028654)  # sqrt(2/pi)
    return 0.5 * x * (1.0 + jnp.tanh(c * (x + 0.044715 * x * x * x)))


# ------------------------------ fused kernel ---------------------------------
def fused_forward_kernel(ids_ref, seg_ref, mask_ref,
                         wemb_ref, pos_ref, temb_ref, emb_ln_ref,
                         wqkv_ref, bqkv_ref, wo_ref, w1_ref, w2_ref, bias_ref,
                         clf_w_ref, clf_b_ref, out_ref):
    BS = B * S

    # ---- embeddings: one-hot MXU gather (word), add (pos), select (type) ----
    vocab_iota = jax.lax.broadcasted_iota(jnp.int32, (BS, VOCAB_PAD), 1)
    onehot = jnp.where(ids_ref[...] == vocab_iota, 1.0, 0.0).astype(jnp.bfloat16)
    word = jnp.dot(onehot, wemb_ref[...], preferred_element_type=jnp.float32)
    type_add = jnp.where(seg_ref[...] == 0, temb_ref[0], temb_ref[1])   # (BS, H)
    x = _layernorm(word + pos_ref[...] + type_add, emb_ln_ref[0], emb_ln_ref[1])

    # Layer-invariant flattened additive attention mask (block-diag + padding).
    addmask = mask_ref[...]                                   # (BS, BS), f32
    scale = jnp.float32(1.0 / (HD ** 0.5))

    for l in range(NUM_LAYERS):                               # static unroll
        xb = x.astype(jnp.bfloat16)
        attn = jnp.zeros((BS, H), jnp.float32)

        for h in range(NH):                                   # static unroll
            def qkv_proj(qi, _l=l, _h=h):
                idx = (_l * 3 + qi) * NH + _h                 # static leading index
                r = jnp.dot(xb, wqkv_ref[idx], preferred_element_type=jnp.float32)
                return r + bqkv_ref[idx]                      # (BS, HD) f32
            q, k, v = qkv_proj(0), qkv_proj(1), qkv_proj(2)

            # scores over all flattened B*S keys; mask keeps batches separate.
            s = jax.lax.dot_general(
                q.astype(jnp.bfloat16), k.astype(jnp.bfloat16),
                dimension_numbers=(((1,), (1,)), ((), ())),
                preferred_element_type=jnp.float32) * scale + addmask
            m = jnp.max(s, axis=-1, keepdims=True)
            e = jnp.exp(s - m)
            p = e * pl.reciprocal(jnp.sum(e, axis=-1, keepdims=True), approx=True)
            ctx = jnp.dot(p.astype(jnp.bfloat16), v.astype(jnp.bfloat16),
                          preferred_element_type=jnp.float32)             # (BS, HD)
            # fold this head's context straight into the output projection
            attn = attn + jnp.dot(ctx.astype(jnp.bfloat16), wo_ref[l * NH + h],
                                  preferred_element_type=jnp.float32)     # (BS, H)

        bl = bias_ref[l]                                      # (8, FFN) f32
        bo = bl[ROW_BO:ROW_BO + 1, :H]
        ln1g = bl[ROW_LN1G:ROW_LN1G + 1, :H]
        ln1b = bl[ROW_LN1B:ROW_LN1B + 1, :H]
        b1 = bl[ROW_B1:ROW_B1 + 1, :]
        b2 = bl[ROW_B2:ROW_B2 + 1, :H]
        ln2g = bl[ROW_LN2G:ROW_LN2G + 1, :H]
        ln2b = bl[ROW_LN2B:ROW_LN2B + 1, :H]

        x1 = _layernorm(x + attn + bo, ln1g, ln1b)            # (BS, H) f32
        hmid = _gelu(jnp.dot(x1.astype(jnp.bfloat16), w1_ref[l],
                             preferred_element_type=jnp.float32) + b1)
        ffn = jnp.dot(hmid.astype(jnp.bfloat16), w2_ref[l],
                      preferred_element_type=jnp.float32) + b2
        x = _layernorm(x1 + ffn, ln2g, ln2b)

    # ---- CLS token features: last_hidden[:, 0, :] (rows 0, S, 2S, ...) ----
    cls = jnp.concatenate([x[b * S:b * S + 1, :] for b in range(B)], axis=0)  # (B, H)

    # ---- BaseClassifier: 3x [Linear+ReLU(+Dropout=identity)] + Linear ----
    # Weights zero-padded to PROJ-wide square slabs; padding stays exactly zero
    # through ReLU, so results match the unpadded MLP.
    # TODO(synk): Dropout is identity in eval mode; not modeled here.
    hcl = cls
    for i in range(3):
        hcl = jnp.maximum(
            jnp.dot(hcl.astype(jnp.bfloat16), clf_w_ref[i],
                    preferred_element_type=jnp.float32) + clf_b_ref[i], 0.0)
    clf_out = jnp.dot(hcl.astype(jnp.bfloat16), clf_w_ref[3],
                      preferred_element_type=jnp.float32) + clf_b_ref[3]  # (B, PROJ)

    # ---- single lane-dense (B, 128) output slab: [cls | clf_out | zeros] ----
    out_ref[...] = jnp.concatenate(
        [cls, clf_out, jnp.zeros((B, OUT_LANES - H - PROJ), jnp.float32)], axis=-1)


# --------------------------- parameter setup ---------------------------------
def init_params(key):
    ks = iter(jax.random.split(key, 64))
    std = 0.02

    def w(shape):
        return jax.random.normal(next(ks), shape, jnp.float32) * std

    word = w((VOCAB, H))
    word_pad = jnp.zeros((VOCAB_PAD, H), jnp.float32).at[:VOCAB].set(word)
    pos = w((MAXPOS, H))
    type_emb = w((NTYPE, H))

    wqkv_l, bqkv_l, wo_l, w1_l, w2_l, bias_l = [], [], [], [], [], []
    for _ in range(NUM_LAYERS):
        wq, wk, wv = w((H, H)), w((H, H)), w((H, H))
        for m in (wq, wk, wv):                               # qi = 0,1,2
            for h in range(NH):
                wqkv_l.append(m[:, h * HD:(h + 1) * HD])     # (H, HD)
                bqkv_l.append(jnp.zeros((1, HD), jnp.float32))
        wo_full = w((H, H))
        for h in range(NH):
            wo_l.append(wo_full[h * HD:(h + 1) * HD, :])     # (HD, H)
        w1_l.append(w((H, FFN)))
        w2_l.append(w((FFN, H)))
        rows = jnp.zeros((8, FFN), jnp.float32)              # linear biases / LN betas = 0
        rows = rows.at[ROW_LN1G, :H].set(1.0)                # LN gammas = 1
        rows = rows.at[ROW_LN2G, :H].set(1.0)
        bias_l.append(rows)

    # Classifier: PROJ -> PROJ/2 -> PROJ/4 -> PROJ/8 -> 1, zero-padded slabs.
    h1, h2, h3 = PROJ // 2, PROJ // 4, PROJ // 8

    def pad_w(mat):
        slab = jnp.zeros((PROJ, PROJ), jnp.float32)
        return slab.at[:mat.shape[0], :mat.shape[1]].set(mat)

    clf_w = jnp.stack([pad_w(w((PROJ, h1))), pad_w(w((h1, h2))),
                       pad_w(w((h2, h3))), pad_w(w((h3, 1)))])

    return {
        'word_emb': word_pad.astype(jnp.bfloat16),                 # (64, H) bf16
        'pos_add': jnp.tile(pos[:S], (B, 1)),                      # (B*S, H) f32
        'type_emb': type_emb.reshape(NTYPE, 1, H),                 # (2, 1, H) f32
        'emb_ln': jnp.stack([jnp.ones((1, H), jnp.float32),
                             jnp.zeros((1, H), jnp.float32)]),     # (2, 1, H)
        'wqkv': jnp.stack(wqkv_l).astype(jnp.bfloat16),            # (L*3*NH, H, HD)
        'bqkv': jnp.stack(bqkv_l),                                 # (L*3*NH, 1, HD) f32
        'wo': jnp.stack(wo_l).astype(jnp.bfloat16),                # (L*NH, HD, H)
        'w1': jnp.stack(w1_l).astype(jnp.bfloat16),                # (L, H, FFN)
        'w2': jnp.stack(w2_l).astype(jnp.bfloat16),                # (L, FFN, H)
        'bias': jnp.stack(bias_l),                                 # (L, 8, FFN) f32
        'clf_w': clf_w.astype(jnp.bfloat16),                       # (4, PROJ, PROJ)
        'clf_b': jnp.zeros((4, 1, PROJ), jnp.float32),             # (4, 1, PROJ)
    }


# ------------------------------ forward --------------------------------------
def bert_text_encoder_pretrain_forward(params, text, label):
    """text: (B, 3, S) float; [:,0]=input_ids, [:,1]=attention_mask, [:,2]=token_type_ids.
    Returns (pred (B,1), cls_features (B,H)) — matches PyTorch forward(text, label)."""
    del label  # unused in forward, as in the reference module
    input_ids = text[:, 0, :].astype(jnp.int32).reshape(B * S, 1)
    input_mask = text[:, 1, :].astype(jnp.float32)                 # (B, S)
    segment_ids = text[:, 2, :].astype(jnp.int32).reshape(B * S, 1)

    # Flattened (B*S, B*S) additive mask: block-diagonal over batches + key padding.
    mask_flat = input_mask.reshape(1, B * S)
    batch_row = jnp.repeat(jnp.arange(B, dtype=jnp.int32), S).reshape(B * S, 1)
    batch_col = batch_row.reshape(1, B * S)
    valid = (batch_row == batch_col).astype(jnp.float32) * mask_flat
    addmask = (1.0 - valid) * jnp.float32(-10000.0)                # (B*S, B*S)

    vmem = pl.BlockSpec(memory_space=pltpu.MemorySpace.VMEM)
    merged = pl.pallas_call(
        fused_forward_kernel,
        out_shape=jax.ShapeDtypeStruct((B, OUT_LANES), jnp.float32),
        in_specs=[vmem] * 15,
        out_specs=vmem,
    )(input_ids, segment_ids, addmask,
      params['word_emb'], params['pos_add'], params['type_emb'], params['emb_ln'],
      params['wqkv'], params['bqkv'], params['wo'], params['w1'], params['w2'],
      params['bias'], params['clf_w'], params['clf_b'])

    cls = merged[:, :H]            # CLS features (lanes 0..H-1)
    pred = merged[:, H:H + 1]      # classifier logit (lane H)
    return pred, cls


# -------------------------------- main ----------------------------------------
if __name__ == "__main__":
    key = jax.random.PRNGKey(0)
    k_par, k_ids, k_seg, k_lbl = jax.random.split(key, 4)

    params = init_params(k_par)

    input_ids = jax.random.randint(k_ids, (B, S), 0, VOCAB).astype(jnp.float32)
    lengths = jnp.array([S, S - 3], dtype=jnp.int32)
    input_mask = (jnp.arange(S)[None, :] < lengths[:, None]).astype(jnp.float32)
    segment_ids = jax.random.randint(k_seg, (B, S), 0, NTYPE).astype(jnp.float32)
    text = jnp.stack([input_ids, input_mask, segment_ids], axis=1)  # (B, 3, S)
    label = jax.random.normal(k_lbl, (B, 1), jnp.float32)

    fwd = jax.jit(functools.partial(bert_text_encoder_pretrain_forward, params))
    pred, feat = fwd(text, label)
    jax.block_until_ready((pred, feat))

    assert pred.shape == (B, 1) and feat.shape == (B, H)
    assert jnp.all(jnp.isfinite(pred)) and jnp.all(jnp.isfinite(feat))
    print("KERNEL_OK")
</pallas_src>

<mosaic_0001>
module attributes {stable_mosaic.version = 11 : i64} {
  func.func @fused_forward_kernel(%arg0: memref<16x1xi32, #tpu.memory_space<vmem>>, %arg1: memref<16x1xi32, #tpu.memory_space<vmem>>, %arg2: memref<16x16xf32, #tpu.memory_space<vmem>>, %arg3: memref<64x32xbf16, #tpu.memory_space<vmem>>, %arg4: memref<16x32xf32, #tpu.memory_space<vmem>>, %arg5: memref<2x1x32xf32, #tpu.memory_space<vmem>>, %arg6: memref<2x1x32xf32, #tpu.memory_space<vmem>>, %arg7: memref<12x32x16xbf16, #tpu.memory_space<vmem>>, %arg8: memref<12x1x16xf32, #tpu.memory_space<vmem>>, %arg9: memref<4x16x32xbf16, #tpu.memory_space<vmem>>, %arg10: memref<2x32x128xbf16, #tpu.memory_space<vmem>>, %arg11: memref<2x128x32xbf16, #tpu.memory_space<vmem>>, %arg12: memref<2x8x128xf32, #tpu.memory_space<vmem>>, %arg13: memref<4x32x32xbf16, #tpu.memory_space<vmem>>, %arg14: memref<4x1x32xf32, #tpu.memory_space<vmem>>, %arg15: memref<2x128xf32, #tpu.memory_space<vmem>>) attributes {dimension_semantics = [], scalar_prefetch = 0 : i64, scratch_operands = 0 : i64, tpu.core_type = #tpu.core_type<tc>} {
    %0 = tpu.iota {dimensions = array<i32: 1>} : vector<16x64xi32>
    %c0 = arith.constant 0 : index
    %c0_0 = arith.constant 0 : index
    %1 = vector.load %arg0[%c0, %c0_0] : memref<16x1xi32, #tpu.memory_space<vmem>>, vector<16x1xi32>
    %2 = vector.broadcast %1 : vector<16x1xi32> to vector<16x64xi32>
    %3 = arith.cmpi eq, %2, %0 : vector<16x64xi32>
    %cst = arith.constant 1.000000e+00 : f32
    %cst_1 = arith.constant 0.000000e+00 : f32
    %4 = vector.broadcast %cst : f32 to vector<16x64xf32>
    %5 = vector.broadcast %cst_1 : f32 to vector<16x64xf32>
    %6 = arith.select %3, %4, %5 : vector<16x64xi1>, vector<16x64xf32>
    %7 = arith.truncf %6 : vector<16x64xf32> to vector<16x64xbf16>
    %c0_2 = arith.constant 0 : index
    %c0_3 = arith.constant 0 : index
    %8 = vector.load %arg3[%c0_2, %c0_3] : memref<64x32xbf16, #tpu.memory_space<vmem>>, vector<64x32xbf16>
    %cst_4 = arith.constant dense<0.000000e+00> : vector<16x32xf32>
    %9 = tpu.matmul %7, %8, %cst_4 {dimension_numbers = #tpu.dot_dimension_numbers<[1], [0], [0], [1], [0, 0, 1, 1], [], []>} : vector<16x64xbf16>, vector<64x32xbf16>, vector<16x32xf32> -> vector<16x32xf32>
    %c0_5 = arith.constant 0 : index
    %c0_6 = arith.constant 0 : index
    %10 = vector.load %arg1[%c0_5, %c0_6] : memref<16x1xi32, #tpu.memory_space<vmem>>, vector<16x1xi32>
    %c0_i32 = arith.constant 0 : i32
    %11 = vector.broadcast %c0_i32 : i32 to vector<16x1xi32>
    %12 = arith.cmpi eq, %10, %11 : vector<16x1xi32>
    %c0_7 = arith.constant 0 : index
    %c0_8 = arith.constant 0 : index
    %c0_9 = arith.constant 0 : index
    %13 = vector.load %arg5[%c0_7, %c0_8, %c0_9] : memref<2x1x32xf32, #tpu.memory_space<vmem>>, vector<1x1x32xf32>
    %14 = vector.shape_cast %13 : vector<1x1x32xf32> to vector<1x32xf32>
    %c1 = arith.constant 1 : index
    %c0_10 = arith.constant 0 : index
    %c0_11 = arith.constant 0 : index
    %15 = vector.load %arg5[%c1, %c0_10, %c0_11] : memref<2x1x32xf32, #tpu.memory_space<vmem>>, vector<1x1x32xf32>
    %16 = vector.shape_cast %15 : vector<1x1x32xf32> to vector<1x32xf32>
    %17 = vector.shape_cast %12 : vector<16x1xi1> to vector<16x1xi1>
    %18 = vector.broadcast %17 : vector<16x1xi1> to vector<16x32xi1>
    %19 = vector.shape_cast %14 : vector<1x32xf32> to vector<1x32xf32>
    %20 = vector.broadcast %19 : vector<1x32xf32> to vector<16x32xf32>
    %21 = vector.shape_cast %16 : vector<1x32xf32> to vector<1x32xf32>
    %22 = vector.broadcast %21 : vector<1x32xf32> to vector<16x32xf32>
    %23 = arith.select %18, %20, %22 : vector<16x32xi1>, vector<16x32xf32>
    %c0_12 = arith.constant 0 : index
    %c0_13 = arith.constant 0 : index
    %24 = vector.load %arg4[%c0_12, %c0_13] : memref<16x32xf32, #tpu.memory_space<vmem>>, vector<16x32xf32>
    %25 = arith.addf %9, %24 : vector<16x32xf32>
    %26 = arith.addf %25, %23 : vector<16x32xf32>
    %c0_14 = arith.constant 0 : index
    %c0_15 = arith.constant 0 : index
    %c0_16 = arith.constant 0 : index
    %27 = vector.load %arg6[%c0_14, %c0_15, %c0_16] : memref<2x1x32xf32, #tpu.memory_space<vmem>>, vector<1x1x32xf32>
    %28 = vector.shape_cast %27 : vector<1x1x32xf32> to vector<1x32xf32>
    %c1_17 = arith.constant 1 : index
    %c0_18 = arith.constant 0 : index
    %c0_19 = arith.constant 0 : index
    %29 = vector.load %arg6[%c1_17, %c0_18, %c0_19] : memref<2x1x32xf32, #tpu.memory_space<vmem>>, vector<1x1x32xf32>
    %30 = vector.shape_cast %29 : vector<1x1x32xf32> to vector<1x32xf32>
    %cst_20 = arith.constant dense<0.000000e+00> : vector<16xf32>
    %31 = vector.multi_reduction <add>, %26, %cst_20 [1] : vector<16x32xf32> to vector<16xf32>
    %32 = vector.shape_cast %31 : vector<16xf32> to vector<16x1xf32>
    %cst_21 = arith.constant 3.200000e+01 : f32
    %33 = vector.broadcast %cst_21 : f32 to vector<16x1xf32>
    %34 = arith.divf %32, %33 : vector<16x1xf32>
    %35 = vector.broadcast %34 : vector<16x1xf32> to vector<16x32xf32>
    %36 = arith.subf %26, %35 : vector<16x32xf32>
    %37 = arith.mulf %36, %36 : vector<16x32xf32>
    %cst_22 = arith.constant dense<0.000000e+00> : vector<16xf32>
    %38 = vector.multi_reduction <add>, %37, %cst_22 [1] : vector<16x32xf32> to vector<16xf32>
    %39 = vector.shape_cast %38 : vector<16xf32> to vector<16x1xf32>
    %cst_23 = arith.constant 3.200000e+01 : f32
    %40 = vector.broadcast %cst_23 : f32 to vector<16x1xf32>
    %41 = arith.divf %39, %40 : vector<16x1xf32>
    %42 = vector.broadcast %34 : vector<16x1xf32> to vector<16x32xf32>
    %43 = arith.subf %26, %42 : vector<16x32xf32>
    %cst_24 = arith.constant 9.99999996E-13 : f32
    %44 = vector.broadcast %cst_24 : f32 to vector<16x1xf32>
    %45 = arith.addf %41, %44 : vector<16x1xf32>
    %46 = math.rsqrt %45 : vector<16x1xf32>
    %47 = vector.broadcast %46 : vector<16x1xf32> to vector<16x32xf32>
    %48 = arith.mulf %43, %47 : vector<16x32xf32>
    %49 = vector.broadcast %28 : vector<1x32xf32> to vector<16x32xf32>
    %50 = arith.mulf %48, %49 : vector<16x32xf32>
    %51 = vector.broadcast %30 : vector<1x32xf32> to vector<16x32xf32>
    %52 = arith.addf %50, %51 : vector<16x32xf32>
    %c0_25 = arith.constant 0 : index
    %c0_26 = arith.constant 0 : index
    %53 = vector.load %arg2[%c0_25, %c0_26] : memref<16x16xf32, #tpu.memory_space<vmem>>, vector<16x16xf32>
    %54 = arith.truncf %52 : vector<16x32xf32> to vector<16x32xbf16>
    %cst_27 = arith.constant 0.000000e+00 : f32
    %55 = vector.broadcast %cst_27 : f32 to vector<16x32xf32>
    %c0_28 = arith.constant 0 : index
    %c0_29 = arith.constant 0 : index
    %c0_30 = arith.constant 0 : index
    %56 = vector.load %arg7[%c0_28, %c0_29, %c0_30] : memref<12x32x16xbf16, #tpu.memory_space<vmem>>, vector<1x32x16xbf16>
    %57 = vector.shape_cast %56 : vector<1x32x16xbf16> to vector<32x16xbf16>
    %cst_31 = arith.constant dense<0.000000e+00> : vector<16x16xf32>
    %58 = tpu.matmul %54, %57, %cst_31 {dimension_numbers = #tpu.dot_dimension_numbers<[1], [0], [0], [1], [0, 0, 1, 1], [], []>} : vector<16x32xbf16>, vector<32x16xbf16>, vector<16x16xf32> -> vector<16x16xf32>
    %c0_32 = arith.constant 0 : index
    %c0_33 = arith.constant 0 : index
    %c0_34 = arith.constant 0 : index
    %59 = vector.load %arg8[%c0_32, %c0_33, %c0_34] : memref<12x1x16xf32, #tpu.memory_space<vmem>>, vector<1x1x16xf32>
    %60 = vector.shape_cast %59 : vector<1x1x16xf32> to vector<1x16xf32>
    %61 = vector.broadcast %60 : vector<1x16xf32> to vector<16x16xf32>
    %62 = arith.addf %58, %61 : vector<16x16xf32>
    %c2 = arith.constant 2 : index
    %c0_35 = arith.constant 0 : index
    %c0_36 = arith.constant 0 : index
    %63 = vector.load %arg7[%c2, %c0_35, %c0_36] : memref<12x32x16xbf16, #tpu.memory_space<vmem>>, vector<1x32x16xbf16>
    %64 = vector.shape_cast %63 : vector<1x32x16xbf16> to vector<32x16xbf16>
    %cst_37 = arith.constant dense<0.000000e+00> : vector<16x16xf32>
    %65 = tpu.matmul %54, %64, %cst_37 {dimension_numbers = #tpu.dot_dimension_numbers<[1], [0], [0], [1], [0, 0, 1, 1], [], []>} : vector<16x32xbf16>, vector<32x16xbf16>, vector<16x16xf32> -> vector<16x16xf32>
    %c2_38 = arith.constant 2 : index
    %c0_39 = arith.constant 0 : index
    %c0_40 = arith.constant 0 : index
    %66 = vector.load %arg8[%c2_38, %c0_39, %c0_40] : memref<12x1x16xf32, #tpu.memory_space<vmem>>, vector<1x1x16xf32>
    %67 = vector.shape_cast %66 : vector<1x1x16xf32> to vector<1x16xf32>
    %68 = vector.broadcast %67 : vector<1x16xf32> to vector<16x16xf32>
    %69 = arith.addf %65, %68 : vector<16x16xf32>
    %c4 = arith.constant 4 : index
    %c0_41 = arith.constant 0 : index
    %c0_42 = arith.constant 0 : index
    %70 = vector.load %arg7[%c4, %c0_41, %c0_42] : memref<12x32x16xbf16, #tpu.memory_space<vmem>>, vector<1x32x16xbf16>
    %71 = vector.shape_cast %70 : vector<1x32x16xbf16> to vector<32x16xbf16>
    %cst_43 = arith.constant dense<0.000000e+00> : vector<16x16xf32>
    %72 = tpu.matmul %54, %71, %cst_43 {dimension_numbers = #tpu.dot_dimension_numbers<[1], [0], [0], [1], [0, 0, 1, 1], [], []>} : vector<16x32xbf16>, vector<32x16xbf16>, vector<16x16xf32> -> vector<16x16xf32>
    %c4_44 = arith.constant 4 : index
    %c0_45 = arith.constant 0 : index
    %c0_46 = arith.constant 0 : index
    %73 = vector.load %arg8[%c4_44, %c0_45, %c0_46] : memref<12x1x16xf32, #tpu.memory_space<vmem>>, vector<1x1x16xf32>
    %74 = vector.shape_cast %73 : vector<1x1x16xf32> to vector<1x16xf32>
    %75 = vector.broadcast %74 : vector<1x16xf32> to vector<16x16xf32>
    %76 = arith.addf %72, %75 : vector<16x16xf32>
    %77 = arith.truncf %62 : vector<16x16xf32> to vector<16x16xbf16>
    %78 = arith.truncf %69 : vector<16x16xf32> to vector<16x16xbf16>
    %cst_47 = arith.constant dense<0.000000e+00> : vector<16x16xf32>
    %79 = tpu.matmul %77, %78, %cst_47 {dimension_numbers = #tpu.dot_dimension_numbers<[1], [1], [0], [0], [0, 0, 1, 0], [], []>} : vector<16x16xbf16>, vector<16x16xbf16>, vector<16x16xf32> -> vector<16x16xf32>
    %cst_48 = arith.constant 2.500000e-01 : f32
    %80 = vector.broadcast %cst_48 : f32 to vector<16x16xf32>
    %81 = arith.mulf %79, %80 : vector<16x16xf32>
    %82 = arith.addf %81, %53 : vector<16x16xf32>
    %cst_49 = arith.constant dense<0xFF800000> : vector<16xf32>
    %83 = vector.multi_reduction <maximumf>, %82, %cst_49 [1] : vector<16x16xf32> to vector<16xf32>
    %84 = vector.shape_cast %83 : vector<16xf32> to vector<16x1xf32>
    %85 = vector.broadcast %84 : vector<16x1xf32> to vector<16x16xf32>
    %86 = arith.subf %82, %85 : vector<16x16xf32>
    %87 = math.exp %86 : vector<16x16xf32>
    %cst_50 = arith.constant dense<0.000000e+00> : vector<16xf32>
    %88 = vector.multi_reduction <add>, %87, %cst_50 [1] : vector<16x16xf32> to vector<16xf32>
    %89 = vector.shape_cast %88 : vector<16xf32> to vector<16x1xf32>
    %90 = tpu.reciprocal %89 {approx = true} : vector<16x1xf32> -> vector<16x1xf32>
    %91 = vector.broadcast %90 : vector<16x1xf32> to vector<16x16xf32>
    %92 = arith.mulf %87, %91 : vector<16x16xf32>
    %93 = arith.truncf %92 : vector<16x16xf32> to vector<16x16xbf16>
    %94 = arith.truncf %76 : vector<16x16xf32> to vector<16x16xbf16>
    %cst_51 = arith.constant dense<0.000000e+00> : vector<16x16xf32>
    %95 = tpu.matmul %93, %94, %cst_51 {dimension_numbers = #tpu.dot_dimension_numbers<[1], [0], [0], [1], [0, 0, 1, 1], [], []>} : vector<16x16xbf16>, vector<16x16xbf16>, vector<16x16xf32> -> vector<16x16xf32>
    %96 = arith.truncf %95 : vector<16x16xf32> to vector<16x16xbf16>
    %c0_52 = arith.constant 0 : index
    %c0_53 = arith.constant 0 : index
    %c0_54 = arith.constant 0 : index
    %97 = vector.load %arg9[%c0_52, %c0_53, %c0_54] : memref<4x16x32xbf16, #tpu.memory_space<vmem>>, vector<1x16x32xbf16>
    %98 = vector.shape_cast %97 : vector<1x16x32xbf16> to vector<16x32xbf16>
    %cst_55 = arith.constant dense<0.000000e+00> : vector<16x32xf32>
    %99 = tpu.matmul %96, %98, %cst_55 {dimension_numbers = #tpu.dot_dimension_numbers<[1], [0], [0], [1], [0, 0, 1, 1], [], []>} : vector<16x16xbf16>, vector<16x32xbf16>, vector<16x32xf32> -> vector<16x32xf32>
    %100 = arith.addf %55, %99 : vector<16x32xf32>
    %c1_56 = arith.constant 1 : index
    %c0_57 = arith.constant 0 : index
    %c0_58 = arith.constant 0 : index
    %101 = vector.load %arg7[%c1_56, %c0_57, %c0_58] : memref<12x32x16xbf16, #tpu.memory_space<vmem>>, vector<1x32x16xbf16>
    %102 = vector.shape_cast %101 : vector<1x32x16xbf16> to vector<32x16xbf16>
    %cst_59 = arith.constant dense<0.000000e+00> : vector<16x16xf32>
    %103 = tpu.matmul %54, %102, %cst_59 {dimension_numbers = #tpu.dot_dimension_numbers<[1], [0], [0], [1], [0, 0, 1, 1], [], []>} : vector<16x32xbf16>, vector<32x16xbf16>, vector<16x16xf32> -> vector<16x16xf32>
    %c1_60 = arith.constant 1 : index
    %c0_61 = arith.constant 0 : index
    %c0_62 = arith.constant 0 : index
    %104 = vector.load %arg8[%c1_60, %c0_61, %c0_62] : memref<12x1x16xf32, #tpu.memory_space<vmem>>, vector<1x1x16xf32>
    %105 = vector.shape_cast %104 : vector<1x1x16xf32> to vector<1x16xf32>
    %106 = vector.broadcast %105 : vector<1x16xf32> to vector<16x16xf32>
    %107 = arith.addf %103, %106 : vector<16x16xf32>
    %c3 = arith.constant 3 : index
    %c0_63 = arith.constant 0 : index
    %c0_64 = arith.constant 0 : index
    %108 = vector.load %arg7[%c3, %c0_63, %c0_64] : memref<12x32x16xbf16, #tpu.memory_space<vmem>>, vector<1x32x16xbf16>
    %109 = vector.shape_cast %108 : vector<1x32x16xbf16> to vector<32x16xbf16>
    %cst_65 = arith.constant dense<0.000000e+00> : vector<16x16xf32>
    %110 = tpu.matmul %54, %109, %cst_65 {dimension_numbers = #tpu.dot_dimension_numbers<[1], [0], [0], [1], [0, 0, 1, 1], [], []>} : vector<16x32xbf16>, vector<32x16xbf16>, vector<16x16xf32> -> vector<16x16xf32>
    %c3_66 = arith.constant 3 : index
    %c0_67 = arith.constant 0 : index
    %c0_68 = arith.constant 0 : index
    %111 = vector.load %arg8[%c3_66, %c0_67, %c0_68] : memref<12x1x16xf32, #tpu.memory_space<vmem>>, vector<1x1x16xf32>
    %112 = vector.shape_cast %111 : vector<1x1x16xf32> to vector<1x16xf32>
    %113 = vector.broadcast %112 : vector<1x16xf32> to vector<16x16xf32>
    %114 = arith.addf %110, %113 : vector<16x16xf32>
    %c5 = arith.constant 5 : index
    %c0_69 = arith.constant 0 : index
    %c0_70 = arith.constant 0 : index
    %115 = vector.load %arg7[%c5, %c0_69, %c0_70] : memref<12x32x16xbf16, #tpu.memory_space<vmem>>, vector<1x32x16xbf16>
    %116 = vector.shape_cast %115 : vector<1x32x16xbf16> to vector<32x16xbf16>
    %cst_71 = arith.constant dense<0.000000e+00> : vector<16x16xf32>
    %117 = tpu.matmul %54, %116, %cst_71 {dimension_numbers = #tpu.dot_dimension_numbers<[1], [0], [0], [1], [0, 0, 1, 1], [], []>} : vector<16x32xbf16>, vector<32x16xbf16>, vector<16x16xf32> -> vector<16x16xf32>
    %c5_72 = arith.constant 5 : index
    %c0_73 = arith.constant 0 : index
    %c0_74 = arith.constant 0 : index
    %118 = vector.load %arg8[%c5_72, %c0_73, %c0_74] : memref<12x1x16xf32, #tpu.memory_space<vmem>>, vector<1x1x16xf32>
    %119 = vector.shape_cast %118 : vector<1x1x16xf32> to vector<1x16xf32>
    %120 = vector.broadcast %119 : vector<1x16xf32> to vector<16x16xf32>
    %121 = arith.addf %117, %120 : vector<16x16xf32>
    %122 = arith.truncf %107 : vector<16x16xf32> to vector<16x16xbf16>
    %123 = arith.truncf %114 : vector<16x16xf32> to vector<16x16xbf16>
    %cst_75 = arith.constant dense<0.000000e+00> : vector<16x16xf32>
    %124 = tpu.matmul %122, %123, %cst_75 {dimension_numbers = #tpu.dot_dimension_numbers<[1], [1], [0], [0], [0, 0, 1, 0], [], []>} : vector<16x16xbf16>, vector<16x16xbf16>, vector<16x16xf32> -> vector<16x16xf32>
    %cst_76 = arith.constant 2.500000e-01 : f32
    %125 = vector.broadcast %cst_76 : f32 to vector<16x16xf32>
    %126 = arith.mulf %124, %125 : vector<16x16xf32>
    %127 = arith.addf %126, %53 : vector<16x16xf32>
    %cst_77 = arith.constant dense<0xFF800000> : vector<16xf32>
    %128 = vector.multi_reduction <maximumf>, %127, %cst_77 [1] : vector<16x16xf32> to vector<16xf32>
    %129 = vector.shape_cast %128 : vector<16xf32> to vector<16x1xf32>
    %130 = vector.broadcast %129 : vector<16x1xf32> to vector<16x16xf32>
    %131 = arith.subf %127, %130 : vector<16x16xf32>
    %132 = math.exp %131 : vector<16x16xf32>
    %cst_78 = arith.constant dense<0.000000e+00> : vector<16xf32>
    %133 = vector.multi_reduction <add>, %132, %cst_78 [1] : vector<16x16xf32> to vector<16xf32>
    %134 = vector.shape_cast %133 : vector<16xf32> to vector<16x1xf32>
    %135 = tpu.reciprocal %134 {approx = true} : vector<16x1xf32> -> vector<16x1xf32>
    %136 = vector.broadcast %135 : vector<16x1xf32> to vector<16x16xf32>
    %137 = arith.mulf %132, %136 : vector<16x16xf32>
    %138 = arith.truncf %137 : vector<16x16xf32> to vector<16x16xbf16>
    %139 = arith.truncf %121 : vector<16x16xf32> to vector<16x16xbf16>
    %cst_79 = arith.constant dense<0.000000e+00> : vector<16x16xf32>
    %140 = tpu.matmul %138, %139, %cst_79 {dimension_numbers = #tpu.dot_dimension_numbers<[1], [0], [0], [1], [0, 0, 1, 1], [], []>} : vector<16x16xbf16>, vector<16x16xbf16>, vector<16x16xf32> -> vector<16x16xf32>
    %141 = arith.truncf %140 : vector<16x16xf32> to vector<16x16xbf16>
    %c1_80 = arith.constant 1 : index
    %c0_81 = arith.constant 0 : index
    %c0_82 = arith.constant 0 : index
    %142 = vector.load %arg9[%c1_80, %c0_81, %c0_82] : memref<4x16x32xbf16, #tpu.memory_space<vmem>>, vector<1x16x32xbf16>
    %143 = vector.shape_cast %142 : vector<1x16x32xbf16> to vector<16x32xbf16>
    %cst_83 = arith.constant dense<0.000000e+00> : vector<16x32xf32>
    %144 = tpu.matmul %141, %143, %cst_83 {dimension_numbers = #tpu.dot_dimension_numbers<[1], [0], [0], [1], [0, 0, 1, 1], [], []>} : vector<16x16xbf16>, vector<16x32xbf16>, vector<16x32xf32> -> vector<16x32xf32>
    %145 = arith.addf %100, %144 : vector<16x32xf32>
    %c0_84 = arith.constant 0 : index
    %c0_85 = arith.constant 0 : index
    %c0_86 = arith.constant 0 : index
    %146 = vector.load %arg12[%c0_84, %c0_85, %c0_86] : memref<2x8x128xf32, #tpu.memory_space<vmem>>, vector<1x8x128xf32>
    %147 = vector.shape_cast %146 : vector<1x8x128xf32> to vector<8x128xf32>
    %148 = vector.extract_strided_slice %147 {offsets = [0, 0], sizes = [1, 32], strides = [1, 1]} : vector<8x128xf32> to vector<1x32xf32>
    %149 = vector.extract_strided_slice %147 {offsets = [1, 0], sizes = [1, 32], strides = [1, 1]} : vector<8x128xf32> to vector<1x32xf32>
    %150 = vector.extract_strided_slice %147 {offsets = [2, 0], sizes = [1, 32], strides = [1, 1]} : vector<8x128xf32> to vector<1x32xf32>
    %151 = vector.extract_strided_slice %147 {offsets = [3, 0], sizes = [1, 128], strides = [1, 1]} : vector<8x128xf32> to vector<1x128xf32>
    %152 = vector.extract_strided_slice %147 {offsets = [4, 0], sizes = [1, 32], strides = [1, 1]} : vector<8x128xf32> to vector<1x32xf32>
    %153 = vector.extract_strided_slice %147 {offsets = [5, 0], sizes = [1, 32], strides = [1, 1]} : vector<8x128xf32> to vector<1x32xf32>
    %154 = vector.extract_strided_slice %147 {offsets = [6, 0], sizes = [1, 32], strides = [1, 1]} : vector<8x128xf32> to vector<1x32xf32>
    %155 = arith.addf %52, %145 : vector<16x32xf32>
    %156 = vector.broadcast %148 : vector<1x32xf32> to vector<16x32xf32>
    %157 = arith.addf %155, %156 : vector<16x32xf32>
    %cst_87 = arith.constant dense<0.000000e+00> : vector<16xf32>
    %158 = vector.multi_reduction <add>, %157, %cst_87 [1] : vector<16x32xf32> to vector<16xf32>
    %159 = vector.shape_cast %158 : vector<16xf32> to vector<16x1xf32>
    %cst_88 = arith.constant 3.200000e+01 : f32
    %160 = vector.broadcast %cst_88 : f32 to vector<16x1xf32>
    %161 = arith.divf %159, %160 : vector<16x1xf32>
    %162 = vector.broadcast %161 : vector<16x1xf32> to vector<16x32xf32>
    %163 = arith.subf %157, %162 : vector<16x32xf32>
    %164 = arith.mulf %163, %163 : vector<16x32xf32>
    %cst_89 = arith.constant dense<0.000000e+00> : vector<16xf32>
    %165 = vector.multi_reduction <add>, %164, %cst_89 [1] : vector<16x32xf32> to vector<16xf32>
    %166 = vector.shape_cast %165 : vector<16xf32> to vector<16x1xf32>
    %cst_90 = arith.constant 3.200000e+01 : f32
    %167 = vector.broadcast %cst_90 : f32 to vector<16x1xf32>
    %168 = arith.divf %166, %167 : vector<16x1xf32>
    %169 = vector.broadcast %161 : vector<16x1xf32> to vector<16x32xf32>
    %170 = arith.subf %157, %169 : vector<16x32xf32>
    %cst_91 = arith.constant 9.99999996E-13 : f32
    %171 = vector.broadcast %cst_91 : f32 to vector<16x1xf32>
    %172 = arith.addf %168, %171 : vector<16x1xf32>
    %173 = math.rsqrt %172 : vector<16x1xf32>
    %174 = vector.broadcast %173 : vector<16x1xf32> to vector<16x32xf32>
    %175 = arith.mulf %170, %174 : vector<16x32xf32>
    %176 = vector.broadcast %149 : vector<1x32xf32> to vector<16x32xf32>
    %177 = arith.mulf %175, %176 : vector<16x32xf32>
    %178 = vector.broadcast %150 : vector<1x32xf32> to vector<16x32xf32>
    %179 = arith.addf %177, %178 : vector<16x32xf32>
    %180 = arith.truncf %179 : vector<16x32xf32> to vector<16x32xbf16>
    %c0_92 = arith.constant 0 : index
    %c0_93 = arith.constant 0 : index
    %c0_94 = arith.constant 0 : index
    %181 = vector.load %arg10[%c0_92, %c0_93, %c0_94] : memref<2x32x128xbf16, #tpu.memory_space<vmem>>, vector<1x32x128xbf16>
    %182 = vector.shape_cast %181 : vector<1x32x128xbf16> to vector<32x128xbf16>
    %cst_95 = arith.constant dense<0.000000e+00> : vector<16x128xf32>
    %183 = tpu.matmul %180, %182, %cst_95 {dimension_numbers = #tpu.dot_dimension_numbers<[1], [0], [0], [1], [0, 0, 1, 1], [], []>} : vector<16x32xbf16>, vector<32x128xbf16>, vector<16x128xf32> -> vector<16x128xf32>
    %184 = vector.broadcast %151 : vector<1x128xf32> to vector<16x128xf32>
    %185 = arith.addf %183, %184 : vector<16x128xf32>
    %cst_96 = arith.constant 5.000000e-01 : f32
    %186 = vector.broadcast %cst_96 : f32 to vector<16x128xf32>
    %187 = arith.mulf %186, %185 : vector<16x128xf32>
    %cst_97 = arith.constant 4.471500e-02 : f32
    %188 = vector.broadcast %cst_97 : f32 to vector<16x128xf32>
    %189 = arith.mulf %188, %185 : vector<16x128xf32>
    %190 = arith.mulf %189, %185 : vector<16x128xf32>
    %191 = arith.mulf %190, %185 : vector<16x128xf32>
    %192 = arith.addf %185, %191 : vector<16x128xf32>
    %cst_98 = arith.constant 0.797884583 : f32
    %193 = vector.broadcast %cst_98 : f32 to vector<16x128xf32>
    %194 = arith.mulf %193, %192 : vector<16x128xf32>
    %195 = math.tanh %194 : vector<16x128xf32>
    %cst_99 = arith.constant 1.000000e+00 : f32
    %196 = vector.broadcast %cst_99 : f32 to vector<16x128xf32>
    %197 = arith.addf %196, %195 : vector<16x128xf32>
    %198 = arith.mulf %187, %197 : vector<16x128xf32>
    %199 = arith.truncf %198 : vector<16x128xf32> to vector<16x128xbf16>
    %c0_100 = arith.constant 0 : index
    %c0_101 = arith.constant 0 : index
    %c0_102 = arith.constant 0 : index
    %200 = vector.load %arg11[%c0_100, %c0_101, %c0_102] : memref<2x128x32xbf16, #tpu.memory_space<vmem>>, vector<1x128x32xbf16>
    %201 = vector.shape_cast %200 : vector<1x128x32xbf16> to vector<128x32xbf16>
    %cst_103 = arith.constant dense<0.000000e+00> : vector<16x32xf32>
    %202 = tpu.matmul %199, %201, %cst_103 {dimension_numbers = #tpu.dot_dimension_numbers<[1], [0], [0], [1], [0, 0, 1, 1], [], []>} : vector<16x128xbf16>, vector<128x32xbf16>, vector<16x32xf32> -> vector<16x32xf32>
    %203 = vector.broadcast %152 : vector<1x32xf32> to vector<16x32xf32>
    %204 = arith.addf %202, %203 : vector<16x32xf32>
    %205 = arith.addf %179, %204 : vector<16x32xf32>
    %cst_104 = arith.constant dense<0.000000e+00> : vector<16xf32>
    %206 = vector.multi_reduction <add>, %205, %cst_104 [1] : vector<16x32xf32> to vector<16xf32>
    %207 = vector.shape_cast %206 : vector<16xf32> to vector<16x1xf32>
    %cst_105 = arith.constant 3.200000e+01 : f32
    %208 = vector.broadcast %cst_105 : f32 to vector<16x1xf32>
    %209 = arith.divf %207, %208 : vector<16x1xf32>
    %210 = vector.broadcast %209 : vector<16x1xf32> to vector<16x32xf32>
    %211 = arith.subf %205, %210 : vector<16x32xf32>
    %212 = arith.mulf %211, %211 : vector<16x32xf32>
    %cst_106 = arith.constant dense<0.000000e+00> : vector<16xf32>
    %213 = vector.multi_reduction <add>, %212, %cst_106 [1] : vector<16x32xf32> to vector<16xf32>
    %214 = vector.shape_cast %213 : vector<16xf32> to vector<16x1xf32>
    %cst_107 = arith.constant 3.200000e+01 : f32
    %215 = vector.broadcast %cst_107 : f32 to vector<16x1xf32>
    %216 = arith.divf %214, %215 : vector<16x1xf32>
    %217 = vector.broadcast %209 : vector<16x1xf32> to vector<16x32xf32>
    %218 = arith.subf %205, %217 : vector<16x32xf32>
    %cst_108 = arith.constant 9.99999996E-13 : f32
    %219 = vector.broadcast %cst_108 : f32 to vector<16x1xf32>
    %220 = arith.addf %216, %219 : vector<16x1xf32>
    %221 = math.rsqrt %220 : vector<16x1xf32>
    %222 = vector.broadcast %221 : vector<16x1xf32> to vector<16x32xf32>
    %223 = arith.mulf %218, %222 : vector<16x32xf32>
    %224 = vector.broadcast %153 : vector<1x32xf32> to vector<16x32xf32>
    %225 = arith.mulf %223, %224 : vector<16x32xf32>
    %226 = vector.broadcast %154 : vector<1x32xf32> to vector<16x32xf32>
    %227 = arith.addf %225, %226 : vector<16x32xf32>
    %228 = arith.truncf %227 : vector<16x32xf32> to vector<16x32xbf16>
    %cst_109 = arith.constant 0.000000e+00 : f32
    %229 = vector.broadcast %cst_109 : f32 to vector<16x32xf32>
    %c6 = arith.constant 6 : index
    %c0_110 = arith.constant 0 : index
    %c0_111 = arith.constant 0 : index
    %230 = vector.load %arg7[%c6, %c0_110, %c0_111] : memref<12x32x16xbf16, #tpu.memory_space<vmem>>, vector<1x32x16xbf16>
    %231 = vector.shape_cast %230 : vector<1x32x16xbf16> to vector<32x16xbf16>
    %cst_112 = arith.constant dense<0.000000e+00> : vector<16x16xf32>
    %232 = tpu.matmul %228, %231, %cst_112 {dimension_numbers = #tpu.dot_dimension_numbers<[1], [0], [0], [1], [0, 0, 1, 1], [], []>} : vector<16x32xbf16>, vector<32x16xbf16>, vector<16x16xf32> -> vector<16x16xf32>
    %c6_113 = arith.constant 6 : index
    %c0_114 = arith.constant 0 : index
    %c0_115 = arith.constant 0 : index
    %233 = vector.load %arg8[%c6_113, %c0_114, %c0_115] : memref<12x1x16xf32, #tpu.memory_space<vmem>>, vector<1x1x16xf32>
    %234 = vector.shape_cast %233 : vector<1x1x16xf32> to vector<1x16xf32>
    %235 = vector.broadcast %234 : vector<1x16xf32> to vector<16x16xf32>
    %236 = arith.addf %232, %235 : vector<16x16xf32>
    %c8 = arith.constant 8 : index
    %c0_116 = arith.constant 0 : index
    %c0_117 = arith.constant 0 : index
    %237 = vector.load %arg7[%c8, %c0_116, %c0_117] : memref<12x32x16xbf16, #tpu.memory_space<vmem>>, vector<1x32x16xbf16>
    %238 = vector.shape_cast %237 : vector<1x32x16xbf16> to vector<32x16xbf16>
    %cst_118 = arith.constant dense<0.000000e+00> : vector<16x16xf32>
    %239 = tpu.matmul %228, %238, %cst_118 {dimension_numbers = #tpu.dot_dimension_numbers<[1], [0], [0], [1], [0, 0, 1, 1], [], []>} : vector<16x32xbf16>, vector<32x16xbf16>, vector<16x16xf32> -> vector<16x16xf32>
    %c8_119 = arith.constant 8 : index
    %c0_120 = arith.constant 0 : index
    %c0_121 = arith.constant 0 : index
    %240 = vector.load %arg8[%c8_119, %c0_120, %c0_121] : memref<12x1x16xf32, #tpu.memory_space<vmem>>, vector<1x1x16xf32>
    %241 = vector.shape_cast %240 : vector<1x1x16xf32> to vector<1x16xf32>
    %242 = vector.broadcast %241 : vector<1x16xf32> to vector<16x16xf32>
    %243 = arith.addf %239, %242 : vector<16x16xf32>
    %c10 = arith.constant 10 : index
    %c0_122 = arith.constant 0 : index
    %c0_123 = arith.constant 0 : index
    %244 = vector.load %arg7[%c10, %c0_122, %c0_123] : memref<12x32x16xbf16, #tpu.memory_space<vmem>>, vector<1x32x16xbf16>
    %245 = vector.shape_cast %244 : vector<1x32x16xbf16> to vector<32x16xbf16>
    %cst_124 = arith.constant dense<0.000000e+00> : vector<16x16xf32>
    %246 = tpu.matmul %228, %245, %cst_124 {dimension_numbers = #tpu.dot_dimension_numbers<[1], [0], [0], [1], [0, 0, 1, 1], [], []>} : vector<16x32xbf16>, vector<32x16xbf16>, vector<16x16xf32> -> vector<16x16xf32>
    %c10_125 = arith.constant 10 : index
    %c0_126 = arith.constant 0 : index
    %c0_127 = arith.constant 0 : index
    %247 = vector.load %arg8[%c10_125, %c0_126, %c0_127] : memref<12x1x16xf32, #tpu.memory_space<vmem>>, vector<1x1x16xf32>
    %248 = vector.shape_cast %247 : vector<1x1x16xf32> to vector<1x16xf32>
    %249 = vector.broadcast %248 : vector<1x16xf32> to vector<16x16xf32>
    %250 = arith.addf %246, %249 : vector<16x16xf32>
    %251 = arith.truncf %236 : vector<16x16xf32> to vector<16x16xbf16>
    %252 = arith.truncf %243 : vector<16x16xf32> to vector<16x16xbf16>
    %cst_128 = arith.constant dense<0.000000e+00> : vector<16x16xf32>
    %253 = tpu.matmul %251, %252, %cst_128 {dimension_numbers = #tpu.dot_dimension_numbers<[1], [1], [0], [0], [0, 0, 1, 0], [], []>} : vector<16x16xbf16>, vector<16x16xbf16>, vector<16x16xf32> -> vector<16x16xf32>
    %cst_129 = arith.constant 2.500000e-01 : f32
    %254 = vector.broadcast %cst_129 : f32 to vector<16x16xf32>
    %255 = arith.mulf %253, %254 : vector<16x16xf32>
    %256 = arith.addf %255, %53 : vector<16x16xf32>
    %cst_130 = arith.constant dense<0xFF800000> : vector<16xf32>
    %257 = vector.multi_reduction <maximumf>, %256, %cst_130 [1] : vector<16x16xf32> to vector<16xf32>
    %258 = vector.shape_cast %257 : vector<16xf32> to vector<16x1xf32>
    %259 = vector.broadcast %258 : vector<16x1xf32> to vector<16x16xf32>
    %260 = arith.subf %256, %259 : vector<16x16xf32>
    %261 = math.exp %260 : vector<16x16xf32>
    %cst_131 = arith.constant dense<0.000000e+00> : vector<16xf32>
    %262 = vector.multi_reduction <add>, %261, %cst_131 [1] : vector<16x16xf32> to vector<16xf32>
    %263 = vector.shape_cast %262 : vector<16xf32> to vector<16x1xf32>
    %264 = tpu.reciprocal %263 {approx = true} : vector<16x1xf32> -> vector<16x1xf32>
    %265 = vector.broadcast %264 : vector<16x1xf32> to vector<16x16xf32>
    %266 = arith.mulf %261, %265 : vector<16x16xf32>
    %267 = arith.truncf %266 : vector<16x16xf32> to vector<16x16xbf16>
    %268 = arith.truncf %250 : vector<16x16xf32> to vector<16x16xbf16>
    %cst_132 = arith.constant dense<0.000000e+00> : vector<16x16xf32>
    %269 = tpu.matmul %267, %268, %cst_132 {dimension_numbers = #tpu.dot_dimension_numbers<[1], [0], [0], [1], [0, 0, 1, 1], [], []>} : vector<16x16xbf16>, vector<16x16xbf16>, vector<16x16xf32> -> vector<16x16xf32>
    %270 = arith.truncf %269 : vector<16x16xf32> to vector<16x16xbf16>
    %c2_133 = arith.constant 2 : index
    %c0_134 = arith.constant 0 : index
    %c0_135 = arith.constant 0 : index
    %271 = vector.load %arg9[%c2_133, %c0_134, %c0_135] : memref<4x16x32xbf16, #tpu.memory_space<vmem>>, vector<1x16x32xbf16>
    %272 = vector.shape_cast %271 : vector<1x16x32xbf16> to vector<16x32xbf16>
    %cst_136 = arith.constant dense<0.000000e+00> : vector<16x32xf32>
    %273 = tpu.matmul %270, %272, %cst_136 {dimension_numbers = #tpu.dot_dimension_numbers<[1], [0], [0], [1], [0, 0, 1, 1], [], []>} : vector<16x16xbf16>, vector<16x32xbf16>, vector<16x32xf32> -> vector<16x32xf32>
    %274 = arith.addf %229, %273 : vector<16x32xf32>
    %c7 = arith.constant 7 : index
    %c0_137 = arith.constant 0 : index
    %c0_138 = arith.constant 0 : index
    %275 = vector.load %arg7[%c7, %c0_137, %c0_138] : memref<12x32x16xbf16, #tpu.memory_space<vmem>>, vector<1x32x16xbf16>
    %276 = vector.shape_cast %275 : vector<1x32x16xbf16> to vector<32x16xbf16>
    %cst_139 = arith.constant dense<0.000000e+00> : vector<16x16xf32>
    %277 = tpu.matmul %228, %276, %cst_139 {dimension_numbers = #tpu.dot_dimension_numbers<[1], [0], [0], [1], [0, 0, 1, 1], [], []>} : vector<16x32xbf16>, vector<32x16xbf16>, vector<16x16xf32> -> vector<16x16xf32>
    %c7_140 = arith.constant 7 : index
    %c0_141 = arith.constant 0 : index
    %c0_142 = arith.constant 0 : index
    %278 = vector.load %arg8[%c7_140, %c0_141, %c0_142] : memref<12x1x16xf32, #tpu.memory_space<vmem>>, vector<1x1x16xf32>
    %279 = vector.shape_cast %278 : vector<1x1x16xf32> to vector<1x16xf32>
    %280 = vector.broadcast %279 : vector<1x16xf32> to vector<16x16xf32>
    %281 = arith.addf %277, %280 : vector<16x16xf32>
    %c9 = arith.constant 9 : index
    %c0_143 = arith.constant 0 : index
    %c0_144 = arith.constant 0 : index
    %282 = vector.load %arg7[%c9, %c0_143, %c0_144] : memref<12x32x16xbf16, #tpu.memory_space<vmem>>, vector<1x32x16xbf16>
    %283 = vector.shape_cast %282 : vector<1x32x16xbf16> to vector<32x16xbf16>
    %cst_145 = arith.constant dense<0.000000e+00> : vector<16x16xf32>
    %284 = tpu.matmul %228, %283, %cst_145 {dimension_numbers = #tpu.dot_dimension_numbers<[1], [0], [0], [1], [0, 0, 1, 1], [], []>} : vector<16x32xbf16>, vector<32x16xbf16>, vector<16x16xf32> -> vector<16x16xf32>
    %c9_146 = arith.constant 9 : index
    %c0_147 = arith.constant 0 : index
    %c0_148 = arith.constant 0 : index
    %285 = vector.load %arg8[%c9_146, %c0_147, %c0_148] : memref<12x1x16xf32, #tpu.memory_space<vmem>>, vector<1x1x16xf32>
    %286 = vector.shape_cast %285 : vector<1x1x16xf32> to vector<1x16xf32>
    %287 = vector.broadcast %286 : vector<1x16xf32> to vector<16x16xf32>
    %288 = arith.addf %284, %287 : vector<16x16xf32>
    %c11 = arith.constant 11 : index
    %c0_149 = arith.constant 0 : index
    %c0_150 = arith.constant 0 : index
    %289 = vector.load %arg7[%c11, %c0_149, %c0_150] : memref<12x32x16xbf16, #tpu.memory_space<vmem>>, vector<1x32x16xbf16>
    %290 = vector.shape_cast %289 : vector<1x32x16xbf16> to vector<32x16xbf16>
    %cst_151 = arith.constant dense<0.000000e+00> : vector<16x16xf32>
    %291 = tpu.matmul %228, %290, %cst_151 {dimension_numbers = #tpu.dot_dimension_numbers<[1], [0], [0], [1], [0, 0, 1, 1], [], []>} : vector<16x32xbf16>, vector<32x16xbf16>, vector<16x16xf32> -> vector<16x16xf32>
    %c11_152 = arith.constant 11 : index
    %c0_153 = arith.constant 0 : index
    %c0_154 = arith.constant 0 : index
    %292 = vector.load %arg8[%c11_152, %c0_153, %c0_154] : memref<12x1x16xf32, #tpu.memory_space<vmem>>, vector<1x1x16xf32>
    %293 = vector.shape_cast %292 : vector<1x1x16xf32> to vector<1x16xf32>
    %294 = vector.broadcast %293 : vector<1x16xf32> to vector<16x16xf32>
    %295 = arith.addf %291, %294 : vector<16x16xf32>
    %296 = arith.truncf %281 : vector<16x16xf32> to vector<16x16xbf16>
    %297 = arith.truncf %288 : vector<16x16xf32> to vector<16x16xbf16>
    %cst_155 = arith.constant dense<0.000000e+00> : vector<16x16xf32>
    %298 = tpu.matmul %296, %297, %cst_155 {dimension_numbers = #tpu.dot_dimension_numbers<[1], [1], [0], [0], [0, 0, 1, 0], [], []>} : vector<16x16xbf16>, vector<16x16xbf16>, vector<16x16xf32> -> vector<16x16xf32>
    %cst_156 = arith.constant 2.500000e-01 : f32
    %299 = vector.broadcast %cst_156 : f32 to vector<16x16xf32>
    %300 = arith.mulf %298, %299 : vector<16x16xf32>
    %301 = arith.addf %300, %53 : vector<16x16xf32>
    %cst_157 = arith.constant dense<0xFF800000> : vector<16xf32>
    %302 = vector.multi_reduction <maximumf>, %301, %cst_157 [1] : vector<16x16xf32> to vector<16xf32>
    %303 = vector.shape_cast %302 : vector<16xf32> to vector<16x1xf32>
    %304 = vector.broadcast %303 : vector<16x1xf32> to vector<16x16xf32>
    %305 = arith.subf %301, %304 : vector<16x16xf32>
    %306 = math.exp %305 : vector<16x16xf32>
    %cst_158 = arith.constant dense<0.000000e+00> : vector<16xf32>
    %307 = vector.multi_reduction <add>, %306, %cst_158 [1] : vector<16x16xf32> to vector<16xf32>
    %308 = vector.shape_cast %307 : vector<16xf32> to vector<16x1xf32>
    %309 = tpu.reciprocal %308 {approx = true} : vector<16x1xf32> -> vector<16x1xf32>
    %310 = vector.broadcast %309 : vector<16x1xf32> to vector<16x16xf32>
    %311 = arith.mulf %306, %310 : vector<16x16xf32>
    %312 = arith.truncf %311 : vector<16x16xf32> to vector<16x16xbf16>
    %313 = arith.truncf %295 : vector<16x16xf32> to vector<16x16xbf16>
    %cst_159 = arith.constant dense<0.000000e+00> : vector<16x16xf32>
    %314 = tpu.matmul %312, %313, %cst_159 {dimension_numbers = #tpu.dot_dimension_numbers<[1], [0], [0], [1], [0, 0, 1, 1], [], []>} : vector<16x16xbf16>, vector<16x16xbf16>, vector<16x16xf32> -> vector<16x16xf32>
    %315 = arith.truncf %314 : vector<16x16xf32> to vector<16x16xbf16>
    %c3_160 = arith.constant 3 : index
    %c0_161 = arith.constant 0 : index
    %c0_162 = arith.constant 0 : index
    %316 = vector.load %arg9[%c3_160, %c0_161, %c0_162] : memref<4x16x32xbf16, #tpu.memory_space<vmem>>, vector<1x16x32xbf16>
    %317 = vector.shape_cast %316 : vector<1x16x32xbf16> to vector<16x32xbf16>
    %cst_163 = arith.constant dense<0.000000e+00> : vector<16x32xf32>
    %318 = tpu.matmul %315, %317, %cst_163 {dimension_numbers = #tpu.dot_dimension_numbers<[1], [0], [0], [1], [0, 0, 1, 1], [], []>} : vector<16x16xbf16>, vector<16x32xbf16>, vector<16x32xf32> -> vector<16x32xf32>
    %319 = arith.addf %274, %318 : vector<16x32xf32>
    %c1_164 = arith.constant 1 : index
    %c0_165 = arith.constant 0 : index
    %c0_166 = arith.constant 0 : index
    %320 = vector.load %arg12[%c1_164, %c0_165, %c0_166] : memref<2x8x128xf32, #tpu.memory_space<vmem>>, vector<1x8x128xf32>
    %321 = vector.shape_cast %320 : vector<1x8x128xf32> to vector<8x128xf32>
    %322 = vector.extract_strided_slice %321 {offsets = [0, 0], sizes = [1, 32], strides = [1, 1]} : vector<8x128xf32> to vector<1x32xf32>
    %323 = vector.extract_strided_slice %321 {offsets = [1, 0], sizes = [1, 32], strides = [1, 1]} : vector<8x128xf32> to vector<1x32xf32>
    %324 = vector.extract_strided_slice %321 {offsets = [2, 0], sizes = [1, 32], strides = [1, 1]} : vector<8x128xf32> to vector<1x32xf32>
    %325 = vector.extract_strided_slice %321 {offsets = [3, 0], sizes = [1, 128], strides = [1, 1]} : vector<8x128xf32> to vector<1x128xf32>
    %326 = vector.extract_strided_slice %321 {offsets = [4, 0], sizes = [1, 32], strides = [1, 1]} : vector<8x128xf32> to vector<1x32xf32>
    %327 = vector.extract_strided_slice %321 {offsets = [5, 0], sizes = [1, 32], strides = [1, 1]} : vector<8x128xf32> to vector<1x32xf32>
    %328 = vector.extract_strided_slice %321 {offsets = [6, 0], sizes = [1, 32], strides = [1, 1]} : vector<8x128xf32> to vector<1x32xf32>
    %329 = arith.addf %227, %319 : vector<16x32xf32>
    %330 = vector.broadcast %322 : vector<1x32xf32> to vector<16x32xf32>
    %331 = arith.addf %329, %330 : vector<16x32xf32>
    %cst_167 = arith.constant dense<0.000000e+00> : vector<16xf32>
    %332 = vector.multi_reduction <add>, %331, %cst_167 [1] : vector<16x32xf32> to vector<16xf32>
    %333 = vector.shape_cast %332 : vector<16xf32> to vector<16x1xf32>
    %cst_168 = arith.constant 3.200000e+01 : f32
    %334 = vector.broadcast %cst_168 : f32 to vector<16x1xf32>
    %335 = arith.divf %333, %334 : vector<16x1xf32>
    %336 = vector.broadcast %335 : vector<16x1xf32> to vector<16x32xf32>
    %337 = arith.subf %331, %336 : vector<16x32xf32>
    %338 = arith.mulf %337, %337 : vector<16x32xf32>
    %cst_169 = arith.constant dense<0.000000e+00> : vector<16xf32>
    %339 = vector.multi_reduction <add>, %338, %cst_169 [1] : vector<16x32xf32> to vector<16xf32>
    %340 = vector.shape_cast %339 : vector<16xf32> to vector<16x1xf32>
    %cst_170 = arith.constant 3.200000e+01 : f32
    %341 = vector.broadcast %cst_170 : f32 to vector<16x1xf32>
    %342 = arith.divf %340, %341 : vector<16x1xf32>
    %343 = vector.broadcast %335 : vector<16x1xf32> to vector<16x32xf32>
    %344 = arith.subf %331, %343 : vector<16x32xf32>
    %cst_171 = arith.constant 9.99999996E-13 : f32
    %345 = vector.broadcast %cst_171 : f32 to vector<16x1xf32>
    %346 = arith.addf %342, %345 : vector<16x1xf32>
    %347 = math.rsqrt %346 : vector<16x1xf32>
    %348 = vector.broadcast %347 : vector<16x1xf32> to vector<16x32xf32>
    %349 = arith.mulf %344, %348 : vector<16x32xf32>
    %350 = vector.broadcast %323 : vector<1x32xf32> to vector<16x32xf32>
    %351 = arith.mulf %349, %350 : vector<16x32xf32>
    %352 = vector.broadcast %324 : vector<1x32xf32> to vector<16x32xf32>
    %353 = arith.addf %351, %352 : vector<16x32xf32>
    %354 = arith.truncf %353 : vector<16x32xf32> to vector<16x32xbf16>
    %c1_172 = arith.constant 1 : index
    %c0_173 = arith.constant 0 : index
    %c0_174 = arith.constant 0 : index
    %355 = vector.load %arg10[%c1_172, %c0_173, %c0_174] : memref<2x32x128xbf16, #tpu.memory_space<vmem>>, vector<1x32x128xbf16>
    %356 = vector.shape_cast %355 : vector<1x32x128xbf16> to vector<32x128xbf16>
    %cst_175 = arith.constant dense<0.000000e+00> : vector<16x128xf32>
    %357 = tpu.matmul %354, %356, %cst_175 {dimension_numbers = #tpu.dot_dimension_numbers<[1], [0], [0], [1], [0, 0, 1, 1], [], []>} : vector<16x32xbf16>, vector<32x128xbf16>, vector<16x128xf32> -> vector<16x128xf32>
    %358 = vector.broadcast %325 : vector<1x128xf32> to vector<16x128xf32>
    %359 = arith.addf %357, %358 : vector<16x128xf32>
    %cst_176 = arith.constant 5.000000e-01 : f32
    %360 = vector.broadcast %cst_176 : f32 to vector<16x128xf32>
    %361 = arith.mulf %360, %359 : vector<16x128xf32>
    %cst_177 = arith.constant 4.471500e-02 : f32
    %362 = vector.broadcast %cst_177 : f32 to vector<16x128xf32>
    %363 = arith.mulf %362, %359 : vector<16x128xf32>
    %364 = arith.mulf %363, %359 : vector<16x128xf32>
    %365 = arith.mulf %364, %359 : vector<16x128xf32>
    %366 = arith.addf %359, %365 : vector<16x128xf32>
    %cst_178 = arith.constant 0.797884583 : f32
    %367 = vector.broadcast %cst_178 : f32 to vector<16x128xf32>
    %368 = arith.mulf %367, %366 : vector<16x128xf32>
    %369 = math.tanh %368 : vector<16x128xf32>
    %cst_179 = arith.constant 1.000000e+00 : f32
    %370 = vector.broadcast %cst_179 : f32 to vector<16x128xf32>
    %371 = arith.addf %370, %369 : vector<16x128xf32>
    %372 = arith.mulf %361, %371 : vector<16x128xf32>
    %373 = arith.truncf %372 : vector<16x128xf32> to vector<16x128xbf16>
    %c1_180 = arith.constant 1 : index
    %c0_181 = arith.constant 0 : index
    %c0_182 = arith.constant 0 : index
    %374 = vector.load %arg11[%c1_180, %c0_181, %c0_182] : memref<2x128x32xbf16, #tpu.memory_space<vmem>>, vector<1x128x32xbf16>
    %375 = vector.shape_cast %374 : vector<1x128x32xbf16> to vector<128x32xbf16>
    %cst_183 = arith.constant dense<0.000000e+00> : vector<16x32xf32>
    %376 = tpu.matmul %373, %375, %cst_183 {dimension_numbers = #tpu.dot_dimension_numbers<[1], [0], [0], [1], [0, 0, 1, 1], [], []>} : vector<16x128xbf16>, vector<128x32xbf16>, vector<16x32xf32> -> vector<16x32xf32>
    %377 = vector.broadcast %326 : vector<1x32xf32> to vector<16x32xf32>
    %378 = arith.addf %376, %377 : vector<16x32xf32>
    %379 = arith.addf %353, %378 : vector<16x32xf32>
    %cst_184 = arith.constant dense<0.000000e+00> : vector<16xf32>
    %380 = vector.multi_reduction <add>, %379, %cst_184 [1] : vector<16x32xf32> to vector<16xf32>
    %381 = vector.shape_cast %380 : vector<16xf32> to vector<16x1xf32>
    %cst_185 = arith.constant 3.200000e+01 : f32
    %382 = vector.broadcast %cst_185 : f32 to vector<16x1xf32>
    %383 = arith.divf %381, %382 : vector<16x1xf32>
    %384 = vector.broadcast %383 : vector<16x1xf32> to vector<16x32xf32>
    %385 = arith.subf %379, %384 : vector<16x32xf32>
    %386 = arith.mulf %385, %385 : vector<16x32xf32>
    %cst_186 = arith.constant dense<0.000000e+00> : vector<16xf32>
    %387 = vector.multi_reduction <add>, %386, %cst_186 [1] : vector<16x32xf32> to vector<16xf32>
    %388 = vector.shape_cast %387 : vector<16xf32> to vector<16x1xf32>
    %cst_187 = arith.constant 3.200000e+01 : f32
    %389 = vector.broadcast %cst_187 : f32 to vector<16x1xf32>
    %390 = arith.divf %388, %389 : vector<16x1xf32>
    %391 = vector.broadcast %383 : vector<16x1xf32> to vector<16x32xf32>
    %392 = arith.subf %379, %391 : vector<16x32xf32>
    %cst_188 = arith.constant 9.99999996E-13 : f32
    %393 = vector.broadcast %cst_188 : f32 to vector<16x1xf32>
    %394 = arith.addf %390, %393 : vector<16x1xf32>
    %395 = math.rsqrt %394 : vector<16x1xf32>
    %396 = vector.broadcast %395 : vector<16x1xf32> to vector<16x32xf32>
    %397 = arith.mulf %392, %396 : vector<16x32xf32>
    %398 = vector.broadcast %327 : vector<1x32xf32> to vector<16x32xf32>
    %399 = arith.mulf %397, %398 : vector<16x32xf32>
    %400 = vector.broadcast %328 : vector<1x32xf32> to vector<16x32xf32>
    %401 = arith.addf %399, %400 : vector<16x32xf32>
    %402 = vector.extract_strided_slice %401 {offsets = [0, 0], sizes = [1, 32], strides = [1, 1]} : vector<16x32xf32> to vector<1x32xf32>
    %403 = vector.extract_strided_slice %401 {offsets = [8, 0], sizes = [1, 32], strides = [1, 1]} : vector<16x32xf32> to vector<1x32xf32>
    %404 = tpu.concatenate %402, %403 in 0 : vector<1x32xf32>, vector<1x32xf32> -> vector<2x32xf32>
    %405 = arith.truncf %404 : vector<2x32xf32> to vector<2x32xbf16>
    %c0_189 = arith.constant 0 : index
    %c0_190 = arith.constant 0 : index
    %c0_191 = arith.constant 0 : index
    %406 = vector.load %arg13[%c0_189, %c0_190, %c0_191] : memref<4x32x32xbf16, #tpu.memory_space<vmem>>, vector<1x32x32xbf16>
    %407 = vector.shape_cast %406 : vector<1x32x32xbf16> to vector<32x32xbf16>
    %cst_192 = arith.constant dense<0.000000e+00> : vector<2x32xf32>
    %408 = tpu.matmul %405, %407, %cst_192 {dimension_numbers = #tpu.dot_dimension_numbers<[1], [0], [0], [1], [0, 0, 1, 1], [], []>} : vector<2x32xbf16>, vector<32x32xbf16>, vector<2x32xf32> -> vector<2x32xf32>
    %c0_193 = arith.constant 0 : index
    %c0_194 = arith.constant 0 : index
    %c0_195 = arith.constant 0 : index
    %409 = vector.load %arg14[%c0_193, %c0_194, %c0_195] : memref<4x1x32xf32, #tpu.memory_space<vmem>>, vector<1x1x32xf32>
    %410 = vector.shape_cast %409 : vector<1x1x32xf32> to vector<1x32xf32>
    %411 = vector.broadcast %410 : vector<1x32xf32> to vector<2x32xf32>
    %412 = arith.addf %408, %411 : vector<2x32xf32>
    %cst_196 = arith.constant 0.000000e+00 : f32
    %413 = vector.broadcast %cst_196 : f32 to vector<2x32xf32>
    %414 = arith.maximumf %412, %413 : vector<2x32xf32>
    %415 = arith.truncf %414 : vector<2x32xf32> to vector<2x32xbf16>
    %c1_197 = arith.constant 1 : index
    %c0_198 = arith.constant 0 : index
    %c0_199 = arith.constant 0 : index
    %416 = vector.load %arg13[%c1_197, %c0_198, %c0_199] : memref<4x32x32xbf16, #tpu.memory_space<vmem>>, vector<1x32x32xbf16>
    %417 = vector.shape_cast %416 : vector<1x32x32xbf16> to vector<32x32xbf16>
    %cst_200 = arith.constant dense<0.000000e+00> : vector<2x32xf32>
    %418 = tpu.matmul %415, %417, %cst_200 {dimension_numbers = #tpu.dot_dimension_numbers<[1], [0], [0], [1], [0, 0, 1, 1], [], []>} : vector<2x32xbf16>, vector<32x32xbf16>, vector<2x32xf32> -> vector<2x32xf32>
    %c1_201 = arith.constant 1 : index
    %c0_202 = arith.constant 0 : index
    %c0_203 = arith.constant 0 : index
    %419 = vector.load %arg14[%c1_201, %c0_202, %c0_203] : memref<4x1x32xf32, #tpu.memory_space<vmem>>, vector<1x1x32xf32>
    %420 = vector.shape_cast %419 : vector<1x1x32xf32> to vector<1x32xf32>
    %421 = vector.broadcast %420 : vector<1x32xf32> to vector<2x32xf32>
    %422 = arith.addf %418, %421 : vector<2x32xf32>
    %cst_204 = arith.constant 0.000000e+00 : f32
    %423 = vector.broadcast %cst_204 : f32 to vector<2x32xf32>
    %424 = arith.maximumf %422, %423 : vector<2x32xf32>
    %425 = arith.truncf %424 : vector<2x32xf32> to vector<2x32xbf16>
    %c2_205 = arith.constant 2 : index
    %c0_206 = arith.constant 0 : index
    %c0_207 = arith.constant 0 : index
    %426 = vector.load %arg13[%c2_205, %c0_206, %c0_207] : memref<4x32x32xbf16, #tpu.memory_space<vmem>>, vector<1x32x32xbf16>
    %427 = vector.shape_cast %426 : vector<1x32x32xbf16> to vector<32x32xbf16>
    %cst_208 = arith.constant dense<0.000000e+00> : vector<2x32xf32>
    %428 = tpu.matmul %425, %427, %cst_208 {dimension_numbers = #tpu.dot_dimension_numbers<[1], [0], [0], [1], [0, 0, 1, 1], [], []>} : vector<2x32xbf16>, vector<32x32xbf16>, vector<2x32xf32> -> vector<2x32xf32>
    %c2_209 = arith.constant 2 : index
    %c0_210 = arith.constant 0 : index
    %c0_211 = arith.constant 0 : index
    %429 = vector.load %arg14[%c2_209, %c0_210, %c0_211] : memref<4x1x32xf32, #tpu.memory_space<vmem>>, vector<1x1x32xf32>
    %430 = vector.shape_cast %429 : vector<1x1x32xf32> to vector<1x32xf32>
    %431 = vector.broadcast %430 : vector<1x32xf32> to vector<2x32xf32>
    %432 = arith.addf %428, %431 : vector<2x32xf32>
    %cst_212 = arith.constant 0.000000e+00 : f32
    %433 = vector.broadcast %cst_212 : f32 to vector<2x32xf32>
    %434 = arith.maximumf %432, %433 : vector<2x32xf32>
    %435 = arith.truncf %434 : vector<2x32xf32> to vector<2x32xbf16>
    %c3_213 = arith.constant 3 : index
    %c0_214 = arith.constant 0 : index
    %c0_215 = arith.constant 0 : index
    %436 = vector.load %arg13[%c3_213, %c0_214, %c0_215] : memref<4x32x32xbf16, #tpu.memory_space<vmem>>, vector<1x32x32xbf16>
    %437 = vector.shape_cast %436 : vector<1x32x32xbf16> to vector<32x32xbf16>
    %cst_216 = arith.constant dense<0.000000e+00> : vector<2x32xf32>
    %438 = tpu.matmul %435, %437, %cst_216 {dimension_numbers = #tpu.dot_dimension_numbers<[1], [0], [0], [1], [0, 0, 1, 1], [], []>} : vector<2x32xbf16>, vector<32x32xbf16>, vector<2x32xf32> -> vector<2x32xf32>
    %c3_217 = arith.constant 3 : index
    %c0_218 = arith.constant 0 : index
    %c0_219 = arith.constant 0 : index
    %439 = vector.load %arg14[%c3_217, %c0_218, %c0_219] : memref<4x1x32xf32, #tpu.memory_space<vmem>>, vector<1x1x32xf32>
    %440 = vector.shape_cast %439 : vector<1x1x32xf32> to vector<1x32xf32>
    %441 = vector.broadcast %440 : vector<1x32xf32> to vector<2x32xf32>
    %442 = arith.addf %438, %441 : vector<2x32xf32>
    %cst_220 = arith.constant 0.000000e+00 : f32
    %443 = vector.broadcast %cst_220 : f32 to vector<2x64xf32>
    %444 = tpu.concatenate %404, %442, %443 in 1 : vector<2x32xf32>, vector<2x32xf32>, vector<2x64xf32> -> vector<2x128xf32>
    %c0_221 = arith.constant 0 : index
    %c0_222 = arith.constant 0 : index
    %445 = vector.load %arg15[%c0_221, %c0_222] : memref<2x128xf32, #tpu.memory_space<vmem>>, vector<2x128xf32>
    tpu.vector_store %arg15[%c0_221, %c0_222], %444 {strides = array<i32>} : memref<2x128xf32, #tpu.memory_space<vmem>>, vector<2x128xf32>,
    return
  }
}

</mosaic_0001>

<llo_original>
// kernel: mul.8
$region0: #{mul.8}
  %s0 = inlined_call_operand.vmem [shape: f32[2,1,8], index: 0, kind: input, shape index: {}]
  %s1 = inlined_call_operand.vmem [shape: f32[16], index: 1, kind: output, shape index: {}]
  $region1: #{mul.8} parent=0
    #allocation0 [shape = 'u8[4096]{0}', space=vmem, size = 0x1000, scoped, tag = 'scoped mem for output reshape']
    #allocation1 [shape = 'u8[4096]{0}', space=vmem, size = 0x1000, scoped, tag = 'scoped mem for input reshape']
    %s3 = sshllo.u32 0, 2
    %v4 = vld [vmem:[%s0] sm:%s3]
    %5 = vst [vmem:[#allocation1] sm:%s3] %v4
    %v6 = vld [vmem:[#allocation1] sm:$0x1]
    %vm7 = vcmask 64512
    %8 = vst.msk [vmem:[#allocation0] sm:$0x1] %vm7, %v6
    %s9 = scalar_lea.vmem [#allocation1], 1
    %v10 = vld [vmem:[%s9] sm:$0x1]
    %11 = vrot.lane.b32.xlu0 %v10, 8
    %v12 = vpop.permute.xlu0 %11
    %vm13 = vcmask 130112
    %14 = vst.msk [vmem:[#allocation0] sm:$0x1] %vm13, %v12
    %s16 = sshllo.u32 0, 1
    %v18 = vld [vmem:[#allocation0] sm:%s16]
    %s19 = sshllo.u32 0, 1
    %20 = vst [vmem:[%s1] sm:%s19] %v18

// kernel: eq.8
$region0: #{eq.8}
  %s0 = inlined_call_operand.vmem [shape: s32[2,8], index: 0, kind: input, shape index: {}]
  %s1 = inlined_call_operand.vmem [shape: s32[16], index: 1, kind: output, shape index: {}]
  $region1: #{eq.8} parent=0
    #allocation0 [shape = 'u8[4096]{0}', space=vmem, size = 0x1000, scoped, tag = 'scoped mem for output reshape']
    #allocation1 [shape = 'u8[4096]{0}', space=vmem, size = 0x1000, scoped, tag = 'scoped mem for input reshape']
    %s3 = sshllo.u32 0, 2
    %v4 = vld [vmem:[%s0] sm:%s3]
    %5 = vst [vmem:[#allocation1] sm:%s3] %v4
    %v6 = vld [vmem:[#allocation1] sm:$0x1]
    %vm7 = vcmask 64512
    %8 = vst.msk [vmem:[#allocation0] sm:$0x1] %vm7, %v6
    %s9 = scalar_lea.vmem [#allocation1], 1
    %v10 = vld [vmem:[%s9] sm:$0x1]
    %11 = vrot.lane.b32.xlu0 %v10, 8
    %v12 = vpop.permute.xlu0 %11
    %vm13 = vcmask 130112
    %14 = vst.msk [vmem:[#allocation0] sm:$0x1] %vm13, %v12
    %s16 = sshllo.u32 0, 1
    %v18 = vld [vmem:[#allocation0] sm:%s16]
    %s19 = sshllo.u32 0, 1
    %20 = vst [vmem:[%s1] sm:%s19] %v18

// kernel: bert_text_encoder_pretrain_forward.1
$region0: #{bert_text_encoder_pretrain_forward.1}
  #allocation0 [shape = 'u32[]', space=smem, size = 0x4, offset = 0x4, fixed_abs, tag = 'smem constant byte address 0x4 - core index']
  #allocation1 [shape = 'u32[144,128]{1,0:T(1,128)}', space=vmem, size = 0x12000, scoped, tag = 'internal scratch']
  %s0 = inlined_call_operand.vmem [shape: s32[16,1], index: 0, kind: input, shape index: {}]
  %s1 = inlined_call_operand.vmem [shape: s32[16,1], index: 1, kind: input, shape index: {}]
  %s2 = inlined_call_operand.vmem [shape: f32[16,16], index: 2, kind: input, shape index: {}]
  %s3 = inlined_call_operand.hbm [shape: bf16[64,32], index: 3, kind: input, shape index: {}]
  %s4 = inlined_call_operand.hbm [shape: f32[16,32], index: 4, kind: input, shape index: {}]
  %s5 = inlined_call_operand.vmem [shape: f32[2,1,32], index: 5, kind: input, shape index: {}]
  %s6 = inlined_call_operand.vmem [shape: f32[2,1,32], index: 6, kind: input, shape index: {}]
  %s7 = inlined_call_operand.hbm [shape: bf16[12,32,16], index: 7, kind: input, shape index: {}]
  %s8 = inlined_call_operand.vmem [shape: f32[12,1,16], index: 8, kind: input, shape index: {}]
  %s9 = inlined_call_operand.hbm [shape: bf16[4,16,32], index: 9, kind: input, shape index: {}]
  %s10 = inlined_call_operand.vmem [shape: bf16[2,32,128], index: 10, kind: input, shape index: {}]
  %s11 = inlined_call_operand.vmem [shape: bf16[2,128,32], index: 11, kind: input, shape index: {}]
  %s12 = inlined_call_operand.hbm [shape: f32[2,8,128], index: 12, kind: input, shape index: {}]
  %s13 = inlined_call_operand.hbm [shape: bf16[4,32,32], index: 13, kind: input, shape index: {}]
  %s14 = inlined_call_operand.vmem [shape: f32[4,1,32], index: 14, kind: input, shape index: {}]
  %s15 = inlined_call_operand.vmem [shape: f32[2,128], index: 15, kind: output, shape index: {}]
  %s16 = sld [smem:[#allocation0]]
  $region94: #{bert_text_encoder_pretrain_forward.1} parent=0
    _
  %s18 = ssub.s32 1, %s16
  %s19 = scalar_select 0, %s18, %s16
  $region1: #{bert_text_encoder_pretrain_forward.1} parent=0
    #allocation2 [shape = 'u8[16384]{0}', space=vmem, size = 0x4000, scoped, tag = 'input window, operand 3, single buffered']
    #allocation3 [shape = 's32[1]{0}', space=sflag, size = 0x4, scoped, tag = 'scoped memory for bert_text_encoder_pretrain_forward.1']
    #allocation4 [shape = 'u8[8192]{0}', space=vmem, size = 0x2000, scoped, tag = 'input window, operand 4, single buffered']
    #allocation5 [shape = 's32[1]{0}', space=sflag, size = 0x4, scoped, tag = 'scoped memory for bert_text_encoder_pretrain_forward.1']
    #allocation6 [shape = 'u8[98304]{0}', space=vmem, size = 0x18000, scoped, tag = 'input window, operand 7, single buffered']
    #allocation7 [shape = 'u8[16384]{0}', space=vmem, size = 0x4000, scoped, tag = 'input window, operand 9, single buffered']
    #allocation8 [shape = 's32[1]{0}', space=sflag, size = 0x4, scoped, tag = 'scoped memory for bert_text_encoder_pretrain_forward.1']
    #allocation9 [shape = 'u8[8192]{0}', space=vmem, size = 0x2000, scoped, tag = 'input window, operand 12, single buffered']
    #allocation10 [shape = 'u8[32768]{0}', space=vmem, size = 0x8000, scoped, tag = 'input window, operand 13, single buffered']
    #allocation11 [shape = 's32[1]{0}', space=sflag, size = 0x4, scoped, tag = 'scoped memory for bert_text_encoder_pretrain_forward.1']
    %20 = vsyncpa [#allocation3], 0
    %21 = vsyncpa [#allocation5], 0
    %22 = vsyncpa [#allocation8], 0
    %23 = vsyncpa [#allocation11], 0
    // Predicated region
    $region2: #{bert_text_encoder_pretrain_forward.1} parent=1 // pred_check
      _
    $region3: #{bert_text_encoder_pretrain_forward.1} parent=1 // pred_check_branch
      %25 = sbr.rel (0) target = $region5
    $region4: #{bert_text_encoder_pretrain_forward.1} parent=1 // pred_region
      _
    $region5: #{bert_text_encoder_pretrain_forward.1} parent=1 // pred_fallthru
      _
    // Predicated region
    $region6: #{bert_text_encoder_pretrain_forward.1} parent=1 // pred_check
      _
    $region7: #{bert_text_encoder_pretrain_forward.1} parent=1 // pred_check_branch
      %27 = sbr.rel (0) target = $region9
    $region8: #{bert_text_encoder_pretrain_forward.1} parent=1 // pred_region
      _
    $region9: #{bert_text_encoder_pretrain_forward.1} parent=1 // pred_fallthru
      _
    // Predicated region
    $region10: #{bert_text_encoder_pretrain_forward.1} parent=1 // pred_check
      _
    $region11: #{bert_text_encoder_pretrain_forward.1} parent=1 // pred_check_branch
      %29 = sbr.rel (0) target = $region13
    $region12: #{bert_text_encoder_pretrain_forward.1} parent=1 // pred_region
      _
    $region13: #{bert_text_encoder_pretrain_forward.1} parent=1 // pred_fallthru
      _
    // Predicated region
    $region14: #{bert_text_encoder_pretrain_forward.1} parent=1 // pred_check
      _
    $region15: #{bert_text_encoder_pretrain_forward.1} parent=1 // pred_check_branch
      %31 = sbr.rel (0) target = $region17
    $region16: #{bert_text_encoder_pretrain_forward.1} parent=1 // pred_region
      %s33 = ssub.s32 512, 512
      %34 = vsyncadd [#allocation3], %s33
      %s35 = sshll.u32 [#allocation2], 4
      %s36 = int_to_ptr.vmem [resolvable:$true] %s35
      %41 = dma.hbm_to_vmem [thread:$0]  %s3, 512, %s36, [#allocation3], 64, 64, 4
    $region17: #{bert_text_encoder_pretrain_forward.1} parent=1 // pred_fallthru
      _
    // Predicated region
    $region18: #{bert_text_encoder_pretrain_forward.1} parent=1 // pred_check
      _
    $region19: #{bert_text_encoder_pretrain_forward.1} parent=1 // pred_check_branch
      %43 = sbr.rel (0) target = $region21
    $region20: #{bert_text_encoder_pretrain_forward.1} parent=1 // pred_region
      %s45 = ssub.s32 256, 256
      %46 = vsyncadd [#allocation5], %s45
      %s47 = sshll.u32 [#allocation4], 4
      %s48 = int_to_ptr.vmem [resolvable:$true] %s47
      %53 = dma.hbm_to_vmem [thread:$0]  %s4, 256, %s48, [#allocation5], 128, 128, 8
    $region21: #{bert_text_encoder_pretrain_forward.1} parent=1 // pred_fallthru
      _
    // Predicated region
    $region22: #{bert_text_encoder_pretrain_forward.1} parent=1 // pred_check
      _
    $region23: #{bert_text_encoder_pretrain_forward.1} parent=1 // pred_check_branch
      %55 = sbr.rel (0) target = $region25
    $region24: #{bert_text_encoder_pretrain_forward.1} parent=1 // pred_region
      _
    $region25: #{bert_text_encoder_pretrain_forward.1} parent=1 // pred_fallthru
      _
    // Predicated region
    $region26: #{bert_text_encoder_pretrain_forward.1} parent=1 // pred_check
      _
    $region27: #{bert_text_encoder_pretrain_forward.1} parent=1 // pred_check_branch
      %57 = sbr.rel (0) target = $region29
    $region28: #{bert_text_encoder_pretrain_forward.1} parent=1 // pred_region
      _
    $region29: #{bert_text_encoder_pretrain_forward.1} parent=1 // pred_fallthru
      _
    // Predicated region
    $region30: #{bert_text_encoder_pretrain_forward.1} parent=1 // pred_check
      _
    $region31: #{bert_text_encoder_pretrain_forward.1} parent=1 // pred_check_branch
      %59 = sbr.rel (0) target = $region33
    $region32: #{bert_text_encoder_pretrain_forward.1} parent=1 // pred_region
      %s61 = ssub.s32 3072, 3072
      %62 = vsyncadd [#allocation5], %s61
      %s63 = sshll.u32 [#allocation6], 4
      %s64 = int_to_ptr.vmem [resolvable:$true] %s63
      %69 = dma.hbm_to_vmem [thread:$0]  %s7, 3072, %s64, [#allocation5], 64, 64, 4
    $region33: #{bert_text_encoder_pretrain_forward.1} parent=1 // pred_fallthru
      _
    // Predicated region
    $region34: #{bert_text_encoder_pretrain_forward.1} parent=1 // pred_check
      _
    $region35: #{bert_text_encoder_pretrain_forward.1} parent=1 // pred_check_branch
      %71 = sbr.rel (0) target = $region37
    $region36: #{bert_text_encoder_pretrain_forward.1} parent=1 // pred_region
      _
    $region37: #{bert_text_encoder_pretrain_forward.1} parent=1 // pred_fallthru
      _
    // Predicated region
    $region38: #{bert_text_encoder_pretrain_forward.1} parent=1 // pred_check
      _
    $region39: #{bert_text_encoder_pretrain_forward.1} parent=1 // pred_check_branch
      %73 = sbr.rel (0) target = $region41
    $region40: #{bert_text_encoder_pretrain_forward.1} parent=1 // pred_region
      %s75 = ssub.s32 512, 512
      %76 = vsyncadd [#allocation8], %s75
      %s77 = sshll.u32 [#allocation7], 4
      %s78 = int_to_ptr.vmem [resolvable:$true] %s77
      %83 = dma.hbm_to_vmem [thread:$0]  %s9, 512, %s78, [#allocation8], 64, 64, 4
    $region41: #{bert_text_encoder_pretrain_forward.1} parent=1 // pred_fallthru
      _
    // Predicated region
    $region42: #{bert_text_encoder_pretrain_forward.1} parent=1 // pred_check
      _
    $region43: #{bert_text_encoder_pretrain_forward.1} parent=1 // pred_check_branch
      %85 = sbr.rel (0) target = $region45
    $region44: #{bert_text_encoder_pretrain_forward.1} parent=1 // pred_region
      _
    $region45: #{bert_text_encoder_pretrain_forward.1} parent=1 // pred_fallthru
      _
    // Predicated region
    $region46: #{bert_text_encoder_pretrain_forward.1} parent=1 // pred_check
      _
    $region47: #{bert_text_encoder_pretrain_forward.1} parent=1 // pred_check_branch
      %87 = sbr.rel (0) target = $region49
    $region48: #{bert_text_encoder_pretrain_forward.1} parent=1 // pred_region
      _
    $region49: #{bert_text_encoder_pretrain_forward.1} parent=1 // pred_fallthru
      _
    // Predicated region
    $region50: #{bert_text_encoder_pretrain_forward.1} parent=1 // pred_check
      _
    $region51: #{bert_text_encoder_pretrain_forward.1} parent=1 // pred_check_branch
      %89 = sbr.rel (0) target = $region53
    $region52: #{bert_text_encoder_pretrain_forward.1} parent=1 // pred_region
      %s91 = ssub.s32 256, 256
      %92 = vsyncadd [#allocation8], %s91
      %s93 = sshll.u32 [#allocation9], 4
      %s94 = int_to_ptr.vmem [resolvable:$true] %s93
      %99 = dma.hbm_to_vmem [thread:$0]  %s12, 256, %s94, [#allocation8], 128, 128, 8
    $region53: #{bert_text_encoder_pretrain_forward.1} parent=1 // pred_fallthru
      _
    // Predicated region
    $region54: #{bert_text_encoder_pretrain_forward.1} parent=1 // pred_check
      _
    $region55: #{bert_text_encoder_pretrain_forward.1} parent=1 // pred_check_branch
      %101 = sbr.rel (0) target = $region57
    $region56: #{bert_text_encoder_pretrain_forward.1} parent=1 // pred_region
      %s103 = ssub.s32 1024, 1024
      %104 = vsyncadd [#allocation11], %s103
      %s105 = sshll.u32 [#allocation10], 4
      %s106 = int_to_ptr.vmem [resolvable:$true] %s105
      %111 = dma.hbm_to_vmem [thread:$0]  %s13, 1024, %s106, [#allocation11], 64, 64, 4
    $region57: #{bert_text_encoder_pretrain_forward.1} parent=1 // pred_fallthru
      _
    // Predicated region
    $region58: #{bert_text_encoder_pretrain_forward.1} parent=1 // pred_check
      _
    $region59: #{bert_text_encoder_pretrain_forward.1} parent=1 // pred_check_branch
      %113 = sbr.rel (0) target = $region61
    $region60: #{bert_text_encoder_pretrain_forward.1} parent=1 // pred_region
      _
    $region61: #{bert_text_encoder_pretrain_forward.1} parent=1 // pred_fallthru
      _
    // Predicated region
    $region62: #{bert_text_encoder_pretrain_forward.1} parent=1 // pred_check
      _
    $region63: #{bert_text_encoder_pretrain_forward.1} parent=1 // pred_check_branch
      %115 = sbr.rel (0) target = $region65
    $region64: #{bert_text_encoder_pretrain_forward.1} parent=1 // pred_region
      %116 = dma.done [#allocation3], 512
    $region65: #{bert_text_encoder_pretrain_forward.1} parent=1 // pred_fallthru
      _
    // Predicated region
    $region66: #{bert_text_encoder_pretrain_forward.1} parent=1 // pred_check
      _
    $region67: #{bert_text_encoder_pretrain_forward.1} parent=1 // pred_check_branch
      %118 = sbr.rel (0) target = $region69
    $region68: #{bert_text_encoder_pretrain_forward.1} parent=1 // pred_region
      %119 = dma.done [#allocation5], 256
    $region69: #{bert_text_encoder_pretrain_forward.1} parent=1 // pred_fallthru
      _
    // Predicated region
    $region70: #{bert_text_encoder_pretrain_forward.1} parent=1 // pred_check
      _
    $region71: #{bert_text_encoder_pretrain_forward.1} parent=1 // pred_check_branch
      %121 = sbr.rel (0) target = $region73
    $region72: #{bert_text_encoder_pretrain_forward.1} parent=1 // pred_region
      %122 = dma.done [#allocation5], 3072
    $region73: #{bert_text_encoder_pretrain_forward.1} parent=1 // pred_fallthru
      _
    // Predicated region
    $region74: #{bert_text_encoder_pretrain_forward.1} parent=1 // pred_check
      _
    $region75: #{bert_text_encoder_pretrain_forward.1} parent=1 // pred_check_branch
      %124 = sbr.rel (0) target = $region77
    $region76: #{bert_text_encoder_pretrain_forward.1} parent=1 // pred_region
      %125 = dma.done [#allocation8], 512
    $region77: #{bert_text_encoder_pretrain_forward.1} parent=1 // pred_fallthru
      _
    // Predicated region
    $region78: #{bert_text_encoder_pretrain_forward.1} parent=1 // pred_check
      _
    $region79: #{bert_text_encoder_pretrain_forward.1} parent=1 // pred_check_branch
      %127 = sbr.rel (0) target = $region81
    $region80: #{bert_text_encoder_pretrain_forward.1} parent=1 // pred_region
      %128 = dma.done [#allocation8], 256
    $region81: #{bert_text_encoder_pretrain_forward.1} parent=1 // pred_fallthru
      _
    // Predicated region
    $region82: #{bert_text_encoder_pretrain_forward.1} parent=1 // pred_check
      _
    $region83: #{bert_text_encoder_pretrain_forward.1} parent=1 // pred_check_branch
      %130 = sbr.rel (0) target = $region85
    $region84: #{bert_text_encoder_pretrain_forward.1} parent=1 // pred_region
      %131 = dma.done [#allocation11], 1024
    $region85: #{bert_text_encoder_pretrain_forward.1} parent=1 // pred_fallthru
      _
    %v133 = vlaneseq
    %v134 = vand.u32 %v133, 127
    %v135 = vld [vmem:[%s0] sm:$0xff]
    %v136 = vld [vmem:[%s0 + $0x8] sm:$0xff]
    %137 = vset.pattern.permute.xlu0 0
    %138 = vperm.xlu0 %137, %v135
    %v139 = vpop.permute.xlu0 %138
    %140 = vset.pattern.permute.xlu0 0
    %141 = vperm.xlu0 %140, %v136
    %v142 = vpop.permute.xlu0 %141
    %vm143 = vcmp.eq.s32.totalorder %v139, %v134
    %vm144 = vcmp.eq.s32.totalorder %v142, %v134
    %v145 = vsel %vm143, 1.0, 0.0
    %v146 = vsel %vm144, 1.0, 0.0
    %v147 = vpack.c.bf16 %v146, %v145
    %v148 = vld [vmem:[#allocation2] sm:$0xf]
    %v149 = vld [vmem:[#allocation2 + $0x4] sm:$0xf]
    %v150 = vld [vmem:[#allocation2 + $0x8] sm:$0xf]
    %v151 = vld [vmem:[#allocation2 + $0xc] sm:$0xf]
    %v152 = vld [vmem:[#allocation2 + $0x10] sm:$0xf]
    %v153 = vld [vmem:[#allocation2 + $0x14] sm:$0xf]
    %v154 = vld [vmem:[#allocation2 + $0x18] sm:$0xf]
    %v155 = vld [vmem:[#allocation2 + $0x1c] sm:$0xf]
    %v156 = vld [vmem:[%s1] sm:$0xff]
    %v157 = vld [vmem:[%s1 + $0x8] sm:$0xff]
    %vm158 = vcmp.eq.s32.totalorder %v156, 0
    %vm159 = vcmp.eq.s32.totalorder %v157, 0
    %v160 = vld [vmem:[%s5] sm:$0x1]
    %s161 = scalar_lea.vmem %s5, 1
    %v162 = vld [vmem:[%s161] sm:$0x1]
    %v163 = vsel %vm158, 1, 0
    %v164 = vsel %vm159, 1, 0
    %165 = vset.pattern.permute.xlu0 0
    %166 = vperm.xlu0 %165, %v163
    %v167 = vpop.permute.xlu0 %166
    %168 = vset.pattern.permute.xlu0 0
    %169 = vperm.xlu0 %168, %v164
    %v170 = vpop.permute.xlu0 %169
    %vm171 = vcmp.eq.s32.totalorder %v167, 1
    %vm172 = vcmp.eq.s32.totalorder %v170, 1
    %v174 = vlaneseq
    %v175 = vshrl.u32 %v174, 7
    %v176 = vsub.s32 0, %v175
    %v177 = vrot.slane %v160, %v176
    %v180 = vlaneseq
    %v181 = vshrl.u32 %v180, 7
    %v182 = vsub.s32 0, %v181
    %v183 = vrot.slane %v162, %v182
    %v185 = vsel %vm171, %v177, %v183
    %v186 = vsel %vm172, %v177, %v183
    %v187 = vld [vmem:[#allocation4] sm:$0xff]
    %v188 = vld [vmem:[#allocation4 + $0x8] sm:$0xff]
    %v197 = vunpack.c.l.b16 %v148
    %v198 = vunpack.c.l.b16 %v149
    %v199 = vunpack.c.l.b16 %v150
    %v200 = vunpack.c.l.b16 %v151
    %v201 = vunpack.c.l.b16 %v152
    %v202 = vunpack.c.l.b16 %v153
    %v203 = vunpack.c.l.b16 %v154
    %v204 = vunpack.c.l.b16 %v155
    %v205 = vpack.c.b16 %v198, %v197
    %v206 = vpack.c.b16 %v200, %v199
    %v207 = vpack.c.b16 %v202, %v201
    %v208 = vpack.c.b16 %v204, %v203
    %vm213 = vcmask 523264
    %v215 = vsel %vm213, %v147, 0
    %217 = vmatprep.subr.bf16.mxu0 0
    %218 = vmatpush1.bf16.msra.mxu0 %v205
    %219 = vmatprep.subr.bf16.mxu0 0
    %220 = vmatpush1.bf16.msra.mxu0 %v206
    %221 = vmatprep.subr.bf16.mxu0 0
    %222 = vmatpush1.bf16.msra.mxu0 %v207
    %223 = vmatprep.subr.bf16.mxu0 0
    %224 = vmatpush1.bf16.msra.mxu0 %v208
    %225 = vmatprep.subr.bf16.mxu0 0
    %226 = vmatpush1.bf16.msra.mxu0 0
    %227 = vmatprep.subr.bf16.mxu0 0
    %228 = vmatpush1.bf16.msra.mxu0 0
    %229 = vmatprep.subr.bf16.mxu0 0
    %230 = vmatpush1.bf16.msra.mxu0 0
    %231 = vmatprep.subr.bf16.mxu0 0
    %232 = vmatpush1.bf16.msra.mxu0 0
    %233 = vmatprep.subr.bf16.mxu0 0
    %234 = vmatpush1.bf16.msra.mxu0 0
    %235 = vmatprep.subr.bf16.mxu0 0
    %236 = vmatpush1.bf16.msra.mxu0 0
    %237 = vmatprep.subr.bf16.mxu0 0
    %238 = vmatpush1.bf16.msra.mxu0 0
    %239 = vmatprep.subr.bf16.mxu0 0
    %240 = vmatpush1.bf16.msra.mxu0 0
    %241 = vmatprep.subr.bf16.mxu0 0
    %242 = vmatpush1.bf16.msra.mxu0 0
    %243 = vmatprep.subr.bf16.mxu0 0
    %244 = vmatpush1.bf16.msra.mxu0 0
    %245 = vmatprep.subr.bf16.mxu0 0
    %246 = vmatpush1.bf16.msra.mxu0 0
    %247 = vmatprep.subr.bf16.mxu0 0
    %248 = vmatpush1.bf16.msra.mxu0 0
    %249 = vmatprep.mubr.bf16.mxu0 0
    %250 = vmatmul.mubr.bf16.gmra.mrb[0].mxu0 %v215
    %v251 = vpop.f32.mrb[0].mxu0
    %v252 = vadd.f32 %v187, %v251
    %v253 = vpop.f32.mrb[0].mxu0
    %v254 = vpop.f32.mrb[0].mxu0
    %v255 = vadd.f32 %v188, %v254
    %v256 = vpop.f32.mrb[0].mxu0
    %257 = vdwg.mxu0
    %v258 = vadd.f32 %v252, %v185
    %v259 = vadd.f32 %v255, %v186
    %v260 = vld [vmem:[%s6] sm:$0x1]
    %s261 = scalar_lea.vmem %s6, 1
    %v262 = vld [vmem:[%s261] sm:$0x1]
    %vm263 = vcmask 261120
    %v264 = vsel %vm263, %v258, 0.0
    %265 = vadd.xlane.f32.xlu0 %v264
    %v266 = vpop.xlane.xlu0 %265
    %v267 = vsel %vm263, %v259, 0.0
    %268 = vadd.xlane.f32.xlu0 %v267
    %v269 = vpop.xlane.xlu0 %268
    %v270 = vrcp.pop 32.0
    %v271 = vmul.f32 %v266, %v270
    %v272 = vmul.f32 %v269, %v270
    %v273 = vsub.f32 %v258, %v271
    %v274 = vsub.f32 %v259, %v272
    %v275 = vmul.f32 %v273, %v273
    %v276 = vmul.f32 %v274, %v274
    %v277 = vsel %vm263, %v275, 0.0
    %278 = vadd.xlane.f32.xlu0 %v277
    %v279 = vpop.xlane.xlu0 %278
    %v280 = vsel %vm263, %v276, 0.0
    %281 = vadd.xlane.f32.xlu0 %v280
    %v282 = vpop.xlane.xlu0 %281
    %v283 = vmul.f32 %v279, %v270
    %v284 = vmul.f32 %v282, %v270
    %v285 = vadd.f32 %v283, 1e-12
    %v286 = vadd.f32 %v284, 1e-12
    %v287 = vrsqrt.pop %v285
    %v288 = vrsqrt.pop %v286
    %v289 = vmul.f32 %v273, %v287
    %v290 = vmul.f32 %v274, %v288
    %v292 = vlaneseq
    %v293 = vshrl.u32 %v292, 7
    %v294 = vsub.s32 0, %v293
    %v295 = vrot.slane %v260, %v294
    %v297 = vmul.f32 %v289, %v295
    %v298 = vmul.f32 %v290, %v295
    %v300 = vlaneseq
    %v301 = vshrl.u32 %v300, 7
    %v302 = vsub.s32 0, %v301
    %v303 = vrot.slane %v262, %v302
    %v305 = vadd.f32 %v297, %v303
    %v306 = vadd.f32 %v298, %v303
    %v307 = vld [vmem:[%s2] sm:$0xff]
    %v308 = vld [vmem:[%s2 + $0x8] sm:$0xff]
    %v309 = vpack.c.bf16 %v306, %v305
    %v310 = vld [vmem:[#allocation6] sm:$0xf]
    %v311 = vld [vmem:[#allocation6 + $0x4] sm:$0xf]
    %v312 = vld [vmem:[#allocation6 + $0x8] sm:$0xf]
    %v313 = vld [vmem:[#allocation6 + $0xc] sm:$0xf]
    %v314 = vld [vmem:[%s8] sm:$0x1]
    %v316 = vlaneseq
    %v317 = vshrl.u32 %v316, 7
    %v318 = vsub.s32 0, %v317
    %v319 = vrot.slane %v314, %v318
    %v325 = vunpack.c.l.b16 %v310
    %v326 = vunpack.c.l.b16 %v311
    %v327 = vunpack.c.l.b16 %v312
    %v328 = vunpack.c.l.b16 %v313
    %v329 = vpack.c.b16 %v326, %v325
    %v330 = vpack.c.b16 %v328, %v327
    %v334 = vsel %vm263, %v309, 0
    %336 = vmatprep.subr.bf16.mxu0 0
    %337 = vmatpush1.bf16.msra.mxu0 %v329
    %338 = vmatprep.subr.bf16.mxu0 0
    %339 = vmatpush1.bf16.msra.mxu0 %v330
    %340 = vmatprep.subr.bf16.mxu0 0
    %341 = vmatpush1.bf16.msra.mxu0 0
    %342 = vmatprep.subr.bf16.mxu0 0
    %343 = vmatpush1.bf16.msra.mxu0 0
    %344 = vmatprep.subr.bf16.mxu0 0
    %345 = vmatpush1.bf16.msra.mxu0 0
    %346 = vmatprep.subr.bf16.mxu0 0
    %347 = vmatpush1.bf16.msra.mxu0 0
    %348 = vmatprep.subr.bf16.mxu0 0
    %349 = vmatpush1.bf16.msra.mxu0 0
    %350 = vmatprep.subr.bf16.mxu0 0
    %351 = vmatpush1.bf16.msra.mxu0 0
    %352 = vmatprep.subr.bf16.mxu0 0
    %353 = vmatpush1.bf16.msra.mxu0 0
    %354 = vmatprep.subr.bf16.mxu0 0
    %355 = vmatpush1.bf16.msra.mxu0 0
    %356 = vmatprep.subr.bf16.mxu0 0
    %357 = vmatpush1.bf16.msra.mxu0 0
    %358 = vmatprep.subr.bf16.mxu0 0
    %359 = vmatpush1.bf16.msra.mxu0 0
    %360 = vmatprep.subr.bf16.mxu0 0
    %361 = vmatpush1.bf16.msra.mxu0 0
    %362 = vmatprep.subr.bf16.mxu0 0
    %363 = vmatpush1.bf16.msra.mxu0 0
    %364 = vmatprep.subr.bf16.mxu0 0
    %365 = vmatpush1.bf16.msra.mxu0 0
    %366 = vmatprep.subr.bf16.mxu0 0
    %367 = vmatpush1.bf16.msra.mxu0 0
    %368 = vmatprep.mubr.bf16.mxu0 0
    %369 = vmatmul.mubr.bf16.gmra.mrb[0].mxu0 %v334
    %v370 = vpop.f32.mrb[0].mxu0
    %v371 = vadd.f32 %v319, %v370
    %v372 = vpop.f32.mrb[0].mxu0
    %v373 = vpop.f32.mrb[0].mxu0
    %v374 = vadd.f32 %v319, %v373
    %v375 = vpop.f32.mrb[0].mxu0
    %376 = vdwg.mxu0
    %s377 = scalar_lea.vmem [#allocation6], 32
    %v378 = vld [vmem:[%s377] sm:$0xf]
    %v379 = vld [vmem:[%s377 + $0x4] sm:$0xf]
    %v380 = vld [vmem:[%s377 + $0x8] sm:$0xf]
    %v381 = vld [vmem:[%s377 + $0xc] sm:$0xf]
    %s382 = scalar_lea.vmem %s8, 2
    %v383 = vld [vmem:[%s382] sm:$0x1]
    %v385 = vlaneseq
    %v386 = vshrl.u32 %v385, 7
    %v387 = vsub.s32 0, %v386
    %v388 = vrot.slane %v383, %v387
    %v394 = vunpack.c.l.b16 %v378
    %v395 = vunpack.c.l.b16 %v379
    %v396 = vunpack.c.l.b16 %v380
    %v397 = vunpack.c.l.b16 %v381
    %v398 = vpack.c.b16 %v395, %v394
    %v399 = vpack.c.b16 %v397, %v396
    %402 = vmatprep.subr.bf16.mxu0 0
    %403 = vmatpush1.bf16.msra.mxu0 %v398
    %404 = vmatprep.subr.bf16.mxu0 0
    %405 = vmatpush1.bf16.msra.mxu0 %v399
    %406 = vmatprep.subr.bf16.mxu0 0
    %407 = vmatpush1.bf16.msra.mxu0 0
    %408 = vmatprep.subr.bf16.mxu0 0
    %409 = vmatpush1.bf16.msra.mxu0 0
    %410 = vmatprep.subr.bf16.mxu0 0
    %411 = vmatpush1.bf16.msra.mxu0 0
    %412 = vmatprep.subr.bf16.mxu0 0
    %413 = vmatpush1.bf16.msra.mxu0 0
    %414 = vmatprep.subr.bf16.mxu0 0
    %415 = vmatpush1.bf16.msra.mxu0 0
    %416 = vmatprep.subr.bf16.mxu0 0
    %417 = vmatpush1.bf16.msra.mxu0 0
    %418 = vmatprep.subr.bf16.mxu0 0
    %419 = vmatpush1.bf16.msra.mxu0 0
    %420 = vmatprep.subr.bf16.mxu0 0
    %421 = vmatpush1.bf16.msra.mxu0 0
    %422 = vmatprep.subr.bf16.mxu0 0
    %423 = vmatpush1.bf16.msra.mxu0 0
    %424 = vmatprep.subr.bf16.mxu0 0
    %425 = vmatpush1.bf16.msra.mxu0 0
    %426 = vmatprep.subr.bf16.mxu0 0
    %427 = vmatpush1.bf16.msra.mxu0 0
    %428 = vmatprep.subr.bf16.mxu0 0
    %429 = vmatpush1.bf16.msra.mxu0 0
    %430 = vmatprep.subr.bf16.mxu0 0
    %431 = vmatpush1.bf16.msra.mxu0 0
    %432 = vmatprep.subr.bf16.mxu0 0
    %433 = vmatpush1.bf16.msra.mxu0 0
    %434 = vmatprep.mubr.bf16.mxu0 0
    %435 = vmatmul.mubr.bf16.gmra.mrb[0].mxu0 %v334
    %v436 = vpop.f32.mrb[0].mxu0
    %v437 = vadd.f32 %v388, %v436
    %v438 = vpop.f32.mrb[0].mxu0
    %v439 = vpop.f32.mrb[0].mxu0
    %v440 = vadd.f32 %v388, %v439
    %v441 = vpop.f32.mrb[0].mxu0
    %442 = vdwg.mxu0
    %s443 = scalar_lea.vmem [#allocation6], 64
    %v444 = vld [vmem:[%s443] sm:$0xf]
    %v445 = vld [vmem:[%s443 + $0x4] sm:$0xf]
    %v446 = vld [vmem:[%s443 + $0x8] sm:$0xf]
    %v447 = vld [vmem:[%s443 + $0xc] sm:$0xf]
    %s448 = scalar_lea.vmem %s8, 4
    %v449 = vld [vmem:[%s448] sm:$0x1]
    %v451 = vlaneseq
    %v452 = vshrl.u32 %v451, 7
    %v453 = vsub.s32 0, %v452
    %v454 = vrot.slane %v449, %v453
    %v460 = vunpack.c.l.b16 %v444
    %v461 = vunpack.c.l.b16 %v445
    %v462 = vunpack.c.l.b16 %v446
    %v463 = vunpack.c.l.b16 %v447
    %v464 = vpack.c.b16 %v461, %v460
    %v465 = vpack.c.b16 %v463, %v462
    %468 = vmatprep.subr.bf16.mxu0 0
    %469 = vmatpush1.bf16.msra.mxu0 %v464
    %470 = vmatprep.subr.bf16.mxu0 0
    %471 = vmatpush1.bf16.msra.mxu0 %v465
    %472 = vmatprep.subr.bf16.mxu0 0
    %473 = vmatpush1.bf16.msra.mxu0 0
    %474 = vmatprep.subr.bf16.mxu0 0
    %475 = vmatpush1.bf16.msra.mxu0 0
    %476 = vmatprep.subr.bf16.mxu0 0
    %477 = vmatpush1.bf16.msra.mxu0 0
    %478 = vmatprep.subr.bf16.mxu0 0
    %479 = vmatpush1.bf16.msra.mxu0 0
    %480 = vmatprep.subr.bf16.mxu0 0
    %481 = vmatpush1.bf16.msra.mxu0 0
    %482 = vmatprep.subr.bf16.mxu0 0
    %483 = vmatpush1.bf16.msra.mxu0 0
    %484 = vmatprep.subr.bf16.mxu0 0
    %485 = vmatpush1.bf16.msra.mxu0 0
    %486 = vmatprep.subr.bf16.mxu0 0
    %487 = vmatpush1.bf16.msra.mxu0 0
    %488 = vmatprep.subr.bf16.mxu0 0
    %489 = vmatpush1.bf16.msra.mxu0 0
    %490 = vmatprep.subr.bf16.mxu0 0
    %491 = vmatpush1.bf16.msra.mxu0 0
    %492 = vmatprep.subr.bf16.mxu0 0
    %493 = vmatpush1.bf16.msra.mxu0 0
    %494 = vmatprep.subr.bf16.mxu0 0
    %495 = vmatpush1.bf16.msra.mxu0 0
    %496 = vmatprep.subr.bf16.mxu0 0
    %497 = vmatpush1.bf16.msra.mxu0 0
    %498 = vmatprep.subr.bf16.mxu0 0
    %499 = vmatpush1.bf16.msra.mxu0 0
    %500 = vmatprep.mubr.bf16.mxu0 0
    %501 = vmatmul.mubr.bf16.gmra.mrb[0].mxu0 %v334
    %v502 = vpop.f32.mrb[0].mxu0
    %v503 = vadd.f32 %v454, %v502
    %v504 = vpop.f32.mrb[0].mxu0
    %v505 = vpop.f32.mrb[0].mxu0
    %v506 = vadd.f32 %v454, %v505
    %v507 = vpop.f32.mrb[0].mxu0
    %508 = vdwg.mxu0
    %v509 = vpack.c.bf16 %v374, %v371
    %v510 = vpack.c.bf16 %v440, %v437
    %vm511 = vcmask 130048
    %v513 = vsel %vm511, %v509, 0
    %v516 = vsel %vm511, %v510, 0
    %518 = vmatprep.subr.bf16.mxu0 0
    %519 = vmatpush1.bf16.xpose.msra.mxu0 %v516
    %520 = vmatprep.subr.bf16.mxu0 0
    %521 = vmatpush1.bf16.xpose.msra.mxu0 0
    %522 = vmatprep.subr.bf16.mxu0 0
    %523 = vmatpush1.bf16.xpose.msra.mxu0 0
    %524 = vmatprep.subr.bf16.mxu0 0
    %525 = vmatpush1.bf16.xpose.msra.mxu0 0
    %526 = vmatprep.subr.bf16.mxu0 0
    %527 = vmatpush1.bf16.xpose.msra.mxu0 0
    %528 = vmatprep.subr.bf16.mxu0 0
    %529 = vmatpush1.bf16.xpose.msra.mxu0 0
    %530 = vmatprep.subr.bf16.mxu0 0
    %531 = vmatpush1.bf16.xpose.msra.mxu0 0
    %532 = vmatprep.subr.bf16.mxu0 0
    %533 = vmatpush1.bf16.xpose.msra.mxu0 0
    %534 = vmatprep.subr.bf16.mxu0 0
    %535 = vmatpush1.bf16.xpose.msra.mxu0 0
    %536 = vmatprep.subr.bf16.mxu0 0
    %537 = vmatpush1.bf16.xpose.msra.mxu0 0
    %538 = vmatprep.subr.bf16.mxu0 0
    %539 = vmatpush1.bf16.xpose.msra.mxu0 0
    %540 = vmatprep.subr.bf16.mxu0 0
    %541 = vmatpush1.bf16.xpose.msra.mxu0 0
    %542 = vmatprep.subr.bf16.mxu0 0
    %543 = vmatpush1.bf16.xpose.msra.mxu0 0
    %544 = vmatprep.subr.bf16.mxu0 0
    %545 = vmatpush1.bf16.xpose.msra.mxu0 0
    %546 = vmatprep.subr.bf16.mxu0 0
    %547 = vmatpush1.bf16.xpose.msra.mxu0 0
    %548 = vmatprep.subr.bf16.mxu0 0
    %549 = vmatpush1.bf16.xpose.msra.mxu0 0
    %550 = vmatprep.mubr.bf16.mxu0 0
    %551 = vmatmul.mubr.bf16.gmra.mrb[0].mxu0 %v513
    %v552 = vpop.f32.mrb[0].mxu0
    %v553 = vadd.f32 0.0, %v552
    %v554 = vpop.f32.mrb[0].mxu0
    %v555 = vpop.f32.mrb[0].mxu0
    %v556 = vadd.f32 0.0, %v555
    %v557 = vpop.f32.mrb[0].mxu0
    %558 = vdwg.mxu0
    %v559 = vmul.f32 %v553, 0.25
    %v560 = vmul.f32 %v556, 0.25
    %v561 = vadd.f32 %v559, %v307
    %v562 = vadd.f32 %v560, %v308
    %v563 = vsel %vm511, %v561, -inf
    %564 = vmax.xlane.f32.xlu0 %v563
    %v565 = vpop.xlane.xlu0 %564
    %v566 = vsel %vm511, %v562, -inf
    %567 = vmax.xlane.f32.xlu0 %v566
    %v568 = vpop.xlane.xlu0 %567
    %v569 = vsub.f32 %v561, %v565
    %v570 = vsub.f32 %v562, %v568
    %v571 = vmul.f32 %v569, 1.442695
    %v572 = vpow.pop %v571
    %v573 = vmul.f32 %v570, 1.442695
    %v574 = vpow.pop %v573
    %v575 = vsel %vm511, %v572, 0.0
    %576 = vadd.xlane.f32.xlu0 %v575
    %v577 = vpop.xlane.xlu0 %576
    %v578 = vsel %vm511, %v574, 0.0
    %579 = vadd.xlane.f32.xlu0 %v578
    %v580 = vpop.xlane.xlu0 %579
    %v581 = vrcp.pop %v577
    %v582 = vrcp.pop %v580
    %v583 = vmul.f32 %v572, %v581
    %v584 = vmul.f32 %v574, %v582
    %v585 = vpack.c.bf16 %v584, %v583
    %v586 = vpack.c.bf16 %v506, %v503
    %v588 = vsel %vm511, %v585, 0
    %590 = vmatprep.subr.bf16.mxu0 0
    %591 = vmatpush1.bf16.msra.mxu0 %v586
    %592 = vmatprep.subr.bf16.mxu0 0
    %593 = vmatpush1.bf16.msra.mxu0 0
    %594 = vmatprep.subr.bf16.mxu0 0
    %595 = vmatpush1.bf16.msra.mxu0 0
    %596 = vmatprep.subr.bf16.mxu0 0
    %597 = vmatpush1.bf16.msra.mxu0 0
    %598 = vmatprep.subr.bf16.mxu0 0
    %599 = vmatpush1.bf16.msra.mxu0 0
    %600 = vmatprep.subr.bf16.mxu0 0
    %601 = vmatpush1.bf16.msra.mxu0 0
    %602 = vmatprep.subr.bf16.mxu0 0
    %603 = vmatpush1.bf16.msra.mxu0 0
    %604 = vmatprep.subr.bf16.mxu0 0
    %605 = vmatpush1.bf16.msra.mxu0 0
    %606 = vmatprep.subr.bf16.mxu0 0
    %607 = vmatpush1.bf16.msra.mxu0 0
    %608 = vmatprep.subr.bf16.mxu0 0
    %609 = vmatpush1.bf16.msra.mxu0 0
    %610 = vmatprep.subr.bf16.mxu0 0
    %611 = vmatpush1.bf16.msra.mxu0 0
    %612 = vmatprep.subr.bf16.mxu0 0
    %613 = vmatpush1.bf16.msra.mxu0 0
    %614 = vmatprep.subr.bf16.mxu0 0
    %615 = vmatpush1.bf16.msra.mxu0 0
    %616 = vmatprep.subr.bf16.mxu0 0
    %617 = vmatpush1.bf16.msra.mxu0 0
    %618 = vmatprep.subr.bf16.mxu0 0
    %619 = vmatpush1.bf16.msra.mxu0 0
    %620 = vmatprep.subr.bf16.mxu0 0
    %621 = vmatpush1.bf16.msra.mxu0 0
    %622 = vmatprep.mubr.bf16.mxu0 0
    %623 = vmatmul.mubr.bf16.gmra.mrb[0].mxu0 %v588
    %v624 = vpop.f32.mrb[0].mxu0
    %v625 = vadd.f32 0.0, %v624
    %v626 = vpop.f32.mrb[0].mxu0
    %v627 = vpop.f32.mrb[0].mxu0
    %v628 = vadd.f32 0.0, %v627
    %v629 = vpop.f32.mrb[0].mxu0
    %630 = vdwg.mxu0
    %v631 = vpack.c.bf16 %v628, %v625
    %v632 = vld [vmem:[#allocation7] sm:$0xf]
    %v633 = vld [vmem:[#allocation7 + $0x4] sm:$0xf]
    %s634 = scalar_lea.vmem [#allocation6], 16
    %v635 = vld [vmem:[%s634] sm:$0xf]
    %v636 = vld [vmem:[%s634 + $0x4] sm:$0xf]
    %v637 = vld [vmem:[%s634 + $0x8] sm:$0xf]
    %v638 = vld [vmem:[%s634 + $0xc] sm:$0xf]
    %s639 = scalar_lea.vmem %s8, 1
    %v640 = vld [vmem:[%s639] sm:$0x1]
    %v642 = vlaneseq
    %v643 = vshrl.u32 %v642, 7
    %v644 = vsub.s32 0, %v643
    %v645 = vrot.slane %v640, %v644
    %v651 = vunpack.c.l.b16 %v635
    %v652 = vunpack.c.l.b16 %v636
    %v653 = vunpack.c.l.b16 %v637
    %v654 = vunpack.c.l.b16 %v638
    %v655 = vpack.c.b16 %v652, %v651
    %v656 = vpack.c.b16 %v654, %v653
    %659 = vmatprep.subr.bf16.mxu0 0
    %660 = vmatpush1.bf16.msra.mxu0 %v655
    %661 = vmatprep.subr.bf16.mxu0 0
    %662 = vmatpush1.bf16.msra.mxu0 %v656
    %663 = vmatprep.subr.bf16.mxu0 0
    %664 = vmatpush1.bf16.msra.mxu0 0
    %665 = vmatprep.subr.bf16.mxu0 0
    %666 = vmatpush1.bf16.msra.mxu0 0
    %667 = vmatprep.subr.bf16.mxu0 0
    %668 = vmatpush1.bf16.msra.mxu0 0
    %669 = vmatprep.subr.bf16.mxu0 0
    %670 = vmatpush1.bf16.msra.mxu0 0
    %671 = vmatprep.subr.bf16.mxu0 0
    %672 = vmatpush1.bf16.msra.mxu0 0
    %673 = vmatprep.subr.bf16.mxu0 0
    %674 = vmatpush1.bf16.msra.mxu0 0
    %675 = vmatprep.subr.bf16.mxu0 0
    %676 = vmatpush1.bf16.msra.mxu0 0
    %677 = vmatprep.subr.bf16.mxu0 0
    %678 = vmatpush1.bf16.msra.mxu0 0
    %679 = vmatprep.subr.bf16.mxu0 0
    %680 = vmatpush1.bf16.msra.mxu0 0
    %681 = vmatprep.subr.bf16.mxu0 0
    %682 = vmatpush1.bf16.msra.mxu0 0
    %683 = vmatprep.subr.bf16.mxu0 0
    %684 = vmatpush1.bf16.msra.mxu0 0
    %685 = vmatprep.subr.bf16.mxu0 0
    %686 = vmatpush1.bf16.msra.mxu0 0
    %687 = vmatprep.subr.bf16.mxu0 0
    %688 = vmatpush1.bf16.msra.mxu0 0
    %689 = vmatprep.subr.bf16.mxu0 0
    %690 = vmatpush1.bf16.msra.mxu0 0
    %691 = vmatprep.mubr.bf16.mxu0 0
    %692 = vmatmul.mubr.bf16.gmra.mrb[0].mxu0 %v334
    %v693 = vpop.f32.mrb[0].mxu0
    %v694 = vadd.f32 %v645, %v693
    %v695 = vpop.f32.mrb[0].mxu0
    %v696 = vpop.f32.mrb[0].mxu0
    %v697 = vadd.f32 %v645, %v696
    %v698 = vpop.f32.mrb[0].mxu0
    %699 = vdwg.mxu0
    %s700 = scalar_lea.vmem [#allocation6], 48
    %v701 = vld [vmem:[%s700] sm:$0xf]
    %v702 = vld [vmem:[%s700 + $0x4] sm:$0xf]
    %v703 = vld [vmem:[%s700 + $0x8] sm:$0xf]
    %v704 = vld [vmem:[%s700 + $0xc] sm:$0xf]
    %s705 = scalar_lea.vmem %s8, 3
    %v706 = vld [vmem:[%s705] sm:$0x1]
    %v708 = vlaneseq
    %v709 = vshrl.u32 %v708, 7
    %v710 = vsub.s32 0, %v709
    %v711 = vrot.slane %v706, %v710
    %v717 = vunpack.c.l.b16 %v701
    %v718 = vunpack.c.l.b16 %v702
    %v719 = vunpack.c.l.b16 %v703
    %v720 = vunpack.c.l.b16 %v704
    %v721 = vpack.c.b16 %v718, %v717
    %v722 = vpack.c.b16 %v720, %v719
    %725 = vmatprep.subr.bf16.mxu0 0
    %726 = vmatpush1.bf16.msra.mxu0 %v721
    %727 = vmatprep.subr.bf16.mxu0 0
    %728 = vmatpush1.bf16.msra.mxu0 %v722
    %729 = vmatprep.subr.bf16.mxu0 0
    %730 = vmatpush1.bf16.msra.mxu0 0
    %731 = vmatprep.subr.bf16.mxu0 0
    %732 = vmatpush1.bf16.msra.mxu0 0
    %733 = vmatprep.subr.bf16.mxu0 0
    %734 = vmatpush1.bf16.msra.mxu0 0
    %735 = vmatprep.subr.bf16.mxu0 0
    %736 = vmatpush1.bf16.msra.mxu0 0
    %737 = vmatprep.subr.bf16.mxu0 0
    %738 = vmatpush1.bf16.msra.mxu0 0
    %739 = vmatprep.subr.bf16.mxu0 0
    %740 = vmatpush1.bf16.msra.mxu0 0
    %741 = vmatprep.subr.bf16.mxu0 0
    %742 = vmatpush1.bf16.msra.mxu0 0
    %743 = vmatprep.subr.bf16.mxu0 0
    %744 = vmatpush1.bf16.msra.mxu0 0
    %745 = vmatprep.subr.bf16.mxu0 0
    %746 = vmatpush1.bf16.msra.mxu0 0
    %747 = vmatprep.subr.bf16.mxu0 0
    %748 = vmatpush1.bf16.msra.mxu0 0
    %749 = vmatprep.subr.bf16.mxu0 0
    %750 = vmatpush1.bf16.msra.mxu0 0
    %751 = vmatprep.subr.bf16.mxu0 0
    %752 = vmatpush1.bf16.msra.mxu0 0
    %753 = vmatprep.subr.bf16.mxu0 0
    %754 = vmatpush1.bf16.msra.mxu0 0
    %755 = vmatprep.subr.bf16.mxu0 0
    %756 = vmatpush1.bf16.msra.mxu0 0
    %757 = vmatprep.mubr.bf16.mxu0 0
    %758 = vmatmul.mubr.bf16.gmra.mrb[0].mxu0 %v334
    %v759 = vpop.f32.mrb[0].mxu0
    %v760 = vadd.f32 %v711, %v759
    %v761 = vpop.f32.mrb[0].mxu0
    %v762 = vpop.f32.mrb[0].mxu0
    %v763 = vadd.f32 %v711, %v762
    %v764 = vpop.f32.mrb[0].mxu0
    %765 = vdwg.mxu0
    %s766 = scalar_lea.vmem [#allocation6], 80
    %v767 = vld [vmem:[%s766] sm:$0xf]
    %v768 = vld [vmem:[%s766 + $0x4] sm:$0xf]
    %v769 = vld [vmem:[%s766 + $0x8] sm:$0xf]
    %v770 = vld [vmem:[%s766 + $0xc] sm:$0xf]
    %s771 = scalar_lea.vmem %s8, 5
    %v772 = vld [vmem:[%s771] sm:$0x1]
    %v774 = vlaneseq
    %v775 = vshrl.u32 %v774, 7
    %v776 = vsub.s32 0, %v775
    %v777 = vrot.slane %v772, %v776
    %v783 = vunpack.c.l.b16 %v767
    %v784 = vunpack.c.l.b16 %v768
    %v785 = vunpack.c.l.b16 %v769
    %v786 = vunpack.c.l.b16 %v770
    %v787 = vpack.c.b16 %v784, %v783
    %v788 = vpack.c.b16 %v786, %v785
    %791 = vmatprep.subr.bf16.mxu0 0
    %792 = vmatpush1.bf16.msra.mxu0 %v787
    %793 = vmatprep.subr.bf16.mxu0 0
    %794 = vmatpush1.bf16.msra.mxu0 %v788
    %795 = vmatprep.subr.bf16.mxu0 0
    %796 = vmatpush1.bf16.msra.mxu0 0
    %797 = vmatprep.subr.bf16.mxu0 0
    %798 = vmatpush1.bf16.msra.mxu0 0
    %799 = vmatprep.subr.bf16.mxu0 0
    %800 = vmatpush1.bf16.msra.mxu0 0
    %801 = vmatprep.subr.bf16.mxu0 0
    %802 = vmatpush1.bf16.msra.mxu0 0
    %803 = vmatprep.subr.bf16.mxu0 0
    %804 = vmatpush1.bf16.msra.mxu0 0
    %805 = vmatprep.subr.bf16.mxu0 0
    %806 = vmatpush1.bf16.msra.mxu0 0
    %807 = vmatprep.subr.bf16.mxu0 0
    %808 = vmatpush1.bf16.msra.mxu0 0
    %809 = vmatprep.subr.bf16.mxu0 0
    %810 = vmatpush1.bf16.msra.mxu0 0
    %811 = vmatprep.subr.bf16.mxu0 0
    %812 = vmatpush1.bf16.msra.mxu0 0
    %813 = vmatprep.subr.bf16.mxu0 0
    %814 = vmatpush1.bf16.msra.mxu0 0
    %815 = vmatprep.subr.bf16.mxu0 0
    %816 = vmatpush1.bf16.msra.mxu0 0
    %817 = vmatprep.subr.bf16.mxu0 0
    %818 = vmatpush1.bf16.msra.mxu0 0
    %819 = vmatprep.subr.bf16.mxu0 0
    %820 = vmatpush1.bf16.msra.mxu0 0
    %821 = vmatprep.subr.bf16.mxu0 0
    %822 = vmatpush1.bf16.msra.mxu0 0
    %823 = vmatprep.mubr.bf16.mxu0 0
    %824 = vmatmul.mubr.bf16.gmra.mrb[0].mxu0 %v334
    %v825 = vpop.f32.mrb[0].mxu0
    %v826 = vadd.f32 %v777, %v825
    %v827 = vpop.f32.mrb[0].mxu0
    %v828 = vpop.f32.mrb[0].mxu0
    %v829 = vadd.f32 %v777, %v828
    %v830 = vpop.f32.mrb[0].mxu0
    %831 = vdwg.mxu0
    %v832 = vpack.c.bf16 %v697, %v694
    %v833 = vpack.c.bf16 %v763, %v760
    %v835 = vsel %vm511, %v832, 0
    %v838 = vsel %vm511, %v833, 0
    %840 = vmatprep.subr.bf16.mxu0 0
    %841 = vmatpush1.bf16.xpose.msra.mxu0 %v838
    %842 = vmatprep.subr.bf16.mxu0 0
    %843 = vmatpush1.bf16.xpose.msra.mxu0 0
    %844 = vmatprep.subr.bf16.mxu0 0
    %845 = vmatpush1.bf16.xpose.msra.mxu0 0
    %846 = vmatprep.subr.bf16.mxu0 0
    %847 = vmatpush1.bf16.xpose.msra.mxu0 0
    %848 = vmatprep.subr.bf16.mxu0 0
    %849 = vmatpush1.bf16.xpose.msra.mxu0 0
    %850 = vmatprep.subr.bf16.mxu0 0
    %851 = vmatpush1.bf16.xpose.msra.mxu0 0
    %852 = vmatprep.subr.bf16.mxu0 0
    %853 = vmatpush1.bf16.xpose.msra.mxu0 0
    %854 = vmatprep.subr.bf16.mxu0 0
    %855 = vmatpush1.bf16.xpose.msra.mxu0 0
    %856 = vmatprep.subr.bf16.mxu0 0
    %857 = vmatpush1.bf16.xpose.msra.mxu0 0
    %858 = vmatprep.subr.bf16.mxu0 0
    %859 = vmatpush1.bf16.xpose.msra.mxu0 0
    %860 = vmatprep.subr.bf16.mxu0 0
    %861 = vmatpush1.bf16.xpose.msra.mxu0 0
    %862 = vmatprep.subr.bf16.mxu0 0
    %863 = vmatpush1.bf16.xpose.msra.mxu0 0
    %864 = vmatprep.subr.bf16.mxu0 0
    %865 = vmatpush1.bf16.xpose.msra.mxu0 0
    %866 = vmatprep.subr.bf16.mxu0 0
    %867 = vmatpush1.bf16.xpose.msra.mxu0 0
    %868 = vmatprep.subr.bf16.mxu0 0
    %869 = vmatpush1.bf16.xpose.msra.mxu0 0
    %870 = vmatprep.subr.bf16.mxu0 0
    %871 = vmatpush1.bf16.xpose.msra.mxu0 0
    %872 = vmatprep.mubr.bf16.mxu0 0
    %873 = vmatmul.mubr.bf16.gmra.mrb[0].mxu0 %v835
    %v874 = vpop.f32.mrb[0].mxu0
    %v875 = vadd.f32 0.0, %v874
    %v876 = vpop.f32.mrb[0].mxu0
    %v877 = vpop.f32.mrb[0].mxu0
    %v878 = vadd.f32 0.0, %v877
    %v879 = vpop.f32.mrb[0].mxu0
    %880 = vdwg.mxu0
    %v881 = vmul.f32 %v875, 0.25
    %v882 = vmul.f32 %v878, 0.25
    %v883 = vadd.f32 %v881, %v307
    %v884 = vadd.f32 %v882, %v308
    %v885 = vsel %vm511, %v883, -inf
    %886 = vmax.xlane.f32.xlu0 %v885
    %v887 = vpop.xlane.xlu0 %886
    %v888 = vsel %vm511, %v884, -inf
    %889 = vmax.xlane.f32.xlu0 %v888
    %v890 = vpop.xlane.xlu0 %889
    %v891 = vsub.f32 %v883, %v887
    %v892 = vsub.f32 %v884, %v890
    %v893 = vmul.f32 %v891, 1.442695
    %v894 = vpow.pop %v893
    %v895 = vmul.f32 %v892, 1.442695
    %v896 = vpow.pop %v895
    %v897 = vsel %vm511, %v894, 0.0
    %898 = vadd.xlane.f32.xlu0 %v897
    %v899 = vpop.xlane.xlu0 %898
    %v900 = vsel %vm511, %v896, 0.0
    %901 = vadd.xlane.f32.xlu0 %v900
    %v902 = vpop.xlane.xlu0 %901
    %v903 = vrcp.pop %v899
    %v904 = vrcp.pop %v902
    %v905 = vmul.f32 %v894, %v903
    %v906 = vmul.f32 %v896, %v904
    %v907 = vpack.c.bf16 %v906, %v905
    %v908 = vpack.c.bf16 %v829, %v826
    %v910 = vsel %vm511, %v907, 0
    %912 = vmatprep.subr.bf16.mxu0 0
    %913 = vmatpush1.bf16.msra.mxu0 %v908
    %914 = vmatprep.subr.bf16.mxu0 0
    %915 = vmatpush1.bf16.msra.mxu0 0
    %916 = vmatprep.subr.bf16.mxu0 0
    %917 = vmatpush1.bf16.msra.mxu0 0
    %918 = vmatprep.subr.bf16.mxu0 0
    %919 = vmatpush1.bf16.msra.mxu0 0
    %920 = vmatprep.subr.bf16.mxu0 0
    %921 = vmatpush1.bf16.msra.mxu0 0
    %922 = vmatprep.subr.bf16.mxu0 0
    %923 = vmatpush1.bf16.msra.mxu0 0
    %924 = vmatprep.subr.bf16.mxu0 0
    %925 = vmatpush1.bf16.msra.mxu0 0
    %926 = vmatprep.subr.bf16.mxu0 0
    %927 = vmatpush1.bf16.msra.mxu0 0
    %928 = vmatprep.subr.bf16.mxu0 0
    %929 = vmatpush1.bf16.msra.mxu0 0
    %930 = vmatprep.subr.bf16.mxu0 0
    %931 = vmatpush1.bf16.msra.mxu0 0
    %932 = vmatprep.subr.bf16.mxu0 0
    %933 = vmatpush1.bf16.msra.mxu0 0
    %934 = vmatprep.subr.bf16.mxu0 0
    %935 = vmatpush1.bf16.msra.mxu0 0
    %936 = vmatprep.subr.bf16.mxu0 0
    %937 = vmatpush1.bf16.msra.mxu0 0
    %938 = vmatprep.subr.bf16.mxu0 0
    %939 = vmatpush1.bf16.msra.mxu0 0
    %940 = vmatprep.subr.bf16.mxu0 0
    %941 = vmatpush1.bf16.msra.mxu0 0
    %942 = vmatprep.subr.bf16.mxu0 0
    %943 = vmatpush1.bf16.msra.mxu0 0
    %944 = vmatprep.mubr.bf16.mxu0 0
    %945 = vmatmul.mubr.bf16.gmra.mrb[0].mxu0 %v910
    %v946 = vpop.f32.mrb[0].mxu0
    %v947 = vadd.f32 0.0, %v946
    %v948 = vpop.f32.mrb[0].mxu0
    %v949 = vpop.f32.mrb[0].mxu0
    %v950 = vadd.f32 0.0, %v949
    %v951 = vpop.f32.mrb[0].mxu0
    %952 = vdwg.mxu0
    %v953 = vpack.c.bf16 %v950, %v947
    %s954 = scalar_lea.vmem [#allocation7], 8
    %v955 = vld [vmem:[%s954] sm:$0xf]
    %v956 = vld [vmem:[%s954 + $0x4] sm:$0xf]
    %v959 = vunpack.c.l.b16 %v955
    %v960 = vunpack.c.l.b16 %v956
    %v961 = vpack.c.b16 %v960, %v959
    %v964 = vsel %vm511, %v953, 0
    %966 = vmatprep.subr.bf16.mxu0 0
    %967 = vmatpush1.bf16.msra.mxu0 %v961
    %968 = vmatprep.subr.bf16.mxu0 0
    %969 = vmatpush1.bf16.msra.mxu0 0
    %970 = vmatprep.subr.bf16.mxu0 0
    %971 = vmatpush1.bf16.msra.mxu0 0
    %972 = vmatprep.subr.bf16.mxu0 0
    %973 = vmatpush1.bf16.msra.mxu0 0
    %974 = vmatprep.subr.bf16.mxu0 0
    %975 = vmatpush1.bf16.msra.mxu0 0
    %976 = vmatprep.subr.bf16.mxu0 0
    %977 = vmatpush1.bf16.msra.mxu0 0
    %978 = vmatprep.subr.bf16.mxu0 0
    %979 = vmatpush1.bf16.msra.mxu0 0
    %980 = vmatprep.subr.bf16.mxu0 0
    %981 = vmatpush1.bf16.msra.mxu0 0
    %982 = vmatprep.subr.bf16.mxu0 0
    %983 = vmatpush1.bf16.msra.mxu0 0
    %984 = vmatprep.subr.bf16.mxu0 0
    %985 = vmatpush1.bf16.msra.mxu0 0
    %986 = vmatprep.subr.bf16.mxu0 0
    %987 = vmatpush1.bf16.msra.mxu0 0
    %988 = vmatprep.subr.bf16.mxu0 0
    %989 = vmatpush1.bf16.msra.mxu0 0
    %990 = vmatprep.subr.bf16.mxu0 0
    %991 = vmatpush1.bf16.msra.mxu0 0
    %992 = vmatprep.subr.bf16.mxu0 0
    %993 = vmatpush1.bf16.msra.mxu0 0
    %994 = vmatprep.subr.bf16.mxu0 0
    %995 = vmatpush1.bf16.msra.mxu0 0
    %996 = vmatprep.subr.bf16.mxu0 0
    %997 = vmatpush1.bf16.msra.mxu0 0
    %998 = vmatprep.mubr.bf16.mxu0 0
    %999 = vmatmul.mubr.bf16.gmra.mrb[0].mxu0 %v964
    %v1000 = vpop.f32.mrb[0].mxu0
    %v1001 = vadd.f32 0.0, %v1000
    %v1002 = vpop.f32.mrb[0].mxu0
    %v1003 = vpop.f32.mrb[0].mxu0
    %v1004 = vadd.f32 0.0, %v1003
    %v1005 = vpop.f32.mrb[0].mxu0
    %1006 = vdwg.mxu0
    %v1009 = vunpack.c.l.b16 %v632
    %v1010 = vunpack.c.l.b16 %v633
    %v1011 = vpack.c.b16 %v1010, %v1009
    %v1014 = vsel %vm511, %v631, 0
    %1016 = vmatprep.subr.bf16.mxu0 0
    %1017 = vmatpush1.bf16.msra.mxu0 %v1011
    %1018 = vmatprep.subr.bf16.mxu0 0
    %1019 = vmatpush1.bf16.msra.mxu0 0
    %1020 = vmatprep.subr.bf16.mxu0 0
    %1021 = vmatpush1.bf16.msra.mxu0 0
    %1022 = vmatprep.subr.bf16.mxu0 0
    %1023 = vmatpush1.bf16.msra.mxu0 0
    %1024 = vmatprep.subr.bf16.mxu0 0
    %1025 = vmatpush1.bf16.msra.mxu0 0
    %1026 = vmatprep.subr.bf16.mxu0 0
    %1027 = vmatpush1.bf16.msra.mxu0 0
    %1028 = vmatprep.subr.bf16.mxu0 0
    %1029 = vmatpush1.bf16.msra.mxu0 0
    %1030 = vmatprep.subr.bf16.mxu0 0
    %1031 = vmatpush1.bf16.msra.mxu0 0
    %1032 = vmatprep.subr.bf16.mxu0 0
    %1033 = vmatpush1.bf16.msra.mxu0 0
    %1034 = vmatprep.subr.bf16.mxu0 0
    %1035 = vmatpush1.bf16.msra.mxu0 0
    %1036 = vmatprep.subr.bf16.mxu0 0
    %1037 = vmatpush1.bf16.msra.mxu0 0
    %1038 = vmatprep.subr.bf16.mxu0 0
    %1039 = vmatpush1.bf16.msra.mxu0 0
    %1040 = vmatprep.subr.bf16.mxu0 0
    %1041 = vmatpush1.bf16.msra.mxu0 0
    %1042 = vmatprep.subr.bf16.mxu0 0
    %1043 = vmatpush1.bf16.msra.mxu0 0
    %1044 = vmatprep.subr.bf16.mxu0 0
    %1045 = vmatpush1.bf16.msra.mxu0 0
    %1046 = vmatprep.subr.bf16.mxu0 0
    %1047 = vmatpush1.bf16.msra.mxu0 0
    %1048 = vmatprep.mubr.bf16.mxu0 0
    %1049 = vmatmul.mubr.bf16.gmra.mrb[0].mxu0 %v1014
    %v1050 = vpop.f32.mrb[0].mxu0
    %v1051 = vadd.f32 %v1001, %v1050
    %v1052 = vpop.f32.mrb[0].mxu0
    %v1053 = vpop.f32.mrb[0].mxu0
    %v1054 = vadd.f32 %v1004, %v1053
    %v1055 = vpop.f32.mrb[0].mxu0
    %1056 = vdwg.mxu0
    %v1057 = vld [vmem:[#allocation9] sm:$0xff]
    %v1058 = vadd.f32 %v305, %v1051
    %v1059 = vadd.f32 %v306, %v1054
    %v1060 = vlaneseq
    %v1061 = vshrl.u32 %v1060, 7
    %v1062 = vsub.s32 0, %v1061
    %v1063 = vrot.slane %v1057, %v1062
    %v1064 = vadd.f32 %v1058, %v1063
    %v1065 = vadd.f32 %v1059, %v1063
    %v1066 = vsel %vm263, %v1064, 0.0
    %1067 = vadd.xlane.f32.xlu0 %v1066
    %v1068 = vpop.xlane.xlu0 %1067
    %v1069 = vsel %vm263, %v1065, 0.0
    %1070 = vadd.xlane.f32.xlu0 %v1069
    %v1071 = vpop.xlane.xlu0 %1070
    %v1072 = vmul.f32 %v1068, %v270
    %v1073 = vmul.f32 %v1071, %v270
    %v1074 = vsub.f32 %v1064, %v1072
    %v1075 = vsub.f32 %v1065, %v1073
    %v1076 = vmul.f32 %v1074, %v1074
    %v1077 = vmul.f32 %v1075, %v1075
    %v1078 = vsel %vm263, %v1076, 0.0
    %1079 = vadd.xlane.f32.xlu0 %v1078
    %v1080 = vpop.xlane.xlu0 %1079
    %v1081 = vsel %vm263, %v1077, 0.0
    %1082 = vadd.xlane.f32.xlu0 %v1081
    %v1083 = vpop.xlane.xlu0 %1082
    %v1084 = vmul.f32 %v1080, %v270
    %v1085 = vmul.f32 %v1083, %v270
    %v1086 = vadd.f32 %v1084, 1e-12
    %v1087 = vadd.f32 %v1085, 1e-12
    %v1088 = vrsqrt.pop %v1086
    %v1089 = vrsqrt.pop %v1087
    %v1090 = vmul.f32 %v1074, %v1088
    %v1091 = vmul.f32 %v1075, %v1089
    %v1092 = vlaneseq
    %v1093 = vshrl.u32 %v1092, 7
    %v1094 = vsub.s32 1, %v1093
    %v1095 = vrot.slane %v1057, %v1094
    %v1096 = vmul.f32 %v1090, %v1095
    %v1097 = vmul.f32 %v1091, %v1095
    %v1098 = vlaneseq
    %v1099 = vshrl.u32 %v1098, 7
    %v1100 = vsub.s32 2, %v1099
    %v1101 = vrot.slane %v1057, %v1100
    %v1102 = vadd.f32 %v1096, %v1101
    %v1103 = vadd.f32 %v1097, %v1101
    %v1104 = vpack.c.bf16 %v1103, %v1102
    %v1105 = vld [vmem:[%s10] sm:$0xf]
    %v1106 = vld [vmem:[%s10 + $0x4] sm:$0xf]
    %v1107 = vld [vmem:[%s10 + $0x8] sm:$0xf]
    %v1108 = vld [vmem:[%s10 + $0xc] sm:$0xf]
    %v1109 = vlaneseq
    %v1110 = vshrl.u32 %v1109, 7
    %v1111 = vsub.s32 3, %v1110
    %v1112 = vrot.slane %v1057, %v1111
    %v1117 = vunpack.c.l.b16 %v1105
    %v1118 = vunpack.c.l.b16 %v1106
    %v1119 = vunpack.c.l.b16 %v1107
    %v1120 = vunpack.c.l.b16 %v1108
    %v1121 = vpack.c.b16 %v1118, %v1117
    %v1122 = vpack.c.b16 %v1120, %v1119
    %v1126 = vsel %vm263, %v1104, 0
    %1128 = vmatprep.subr.bf16.mxu0 0
    %1129 = vmatpush1.bf16.msra.mxu0 %v1121
    %1130 = vmatprep.subr.bf16.mxu0 0
    %1131 = vmatpush1.bf16.msra.mxu0 %v1122
    %1132 = vmatprep.subr.bf16.mxu0 0
    %1133 = vmatpush1.bf16.msra.mxu0 0
    %1134 = vmatprep.subr.bf16.mxu0 0
    %1135 = vmatpush1.bf16.msra.mxu0 0
    %1136 = vmatprep.subr.bf16.mxu0 0
    %1137 = vmatpush1.bf16.msra.mxu0 0
    %1138 = vmatprep.subr.bf16.mxu0 0
    %1139 = vmatpush1.bf16.msra.mxu0 0
    %1140 = vmatprep.subr.bf16.mxu0 0
    %1141 = vmatpush1.bf16.msra.mxu0 0
    %1142 = vmatprep.subr.bf16.mxu0 0
    %1143 = vmatpush1.bf16.msra.mxu0 0
    %1144 = vmatprep.subr.bf16.mxu0 0
    %1145 = vmatpush1.bf16.msra.mxu0 0
    %1146 = vmatprep.subr.bf16.mxu0 0
    %1147 = vmatpush1.bf16.msra.mxu0 0
    %1148 = vmatprep.subr.bf16.mxu0 0
    %1149 = vmatpush1.bf16.msra.mxu0 0
    %1150 = vmatprep.subr.bf16.mxu0 0
    %1151 = vmatpush1.bf16.msra.mxu0 0
    %1152 = vmatprep.subr.bf16.mxu0 0
    %1153 = vmatpush1.bf16.msra.mxu0 0
    %1154 = vmatprep.subr.bf16.mxu0 0
    %1155 = vmatpush1.bf16.msra.mxu0 0
    %1156 = vmatprep.subr.bf16.mxu0 0
    %1157 = vmatpush1.bf16.msra.mxu0 0
    %1158 = vmatprep.subr.bf16.mxu0 0
    %1159 = vmatpush1.bf16.msra.mxu0 0
    %1160 = vmatprep.mubr.bf16.mxu0 0
    %1161 = vmatmul.mubr.bf16.gmra.mrb[0].mxu0 %v1126
    %v1162 = vpop.f32.mrb[0].mxu0
    %v1163 = vadd.f32 %v1112, %v1162
    %v1164 = vpop.f32.mrb[0].mxu0
    %v1165 = vpop.f32.mrb[0].mxu0
    %v1166 = vadd.f32 %v1112, %v1165
    %v1167 = vpop.f32.mrb[0].mxu0
    %1168 = vdwg.mxu0
    %v1169 = vmul.f32 %v1163, 0.5
    %v1170 = vmul.f32 %v1166, 0.5
    %v1171 = vmul.f32 %v1163, 0.044715
    %v1172 = vmul.f32 %v1166, 0.044715
    %v1173 = vmul.f32 %v1171, %v1163
    %v1174 = vmul.f32 %v1172, %v1166
    %v1175 = vmul.f32 %v1173, %v1163
    %v1176 = vmul.f32 %v1174, %v1166
    %v1177 = vadd.f32 %v1163, %v1175
    %v1178 = vadd.f32 %v1166, %v1176
    %v1179 = vmul.f32 %v1177, 0.7978846
    %v1180 = vmul.f32 %v1178, 0.7978846
    %v1181 = vtanh.pop %v1179
    %v1182 = vtanh.pop %v1180
    %v1183 = vadd.f32 %v1181, 1.0
    %v1184 = vadd.f32 %v1182, 1.0
    %v1185 = vmul.f32 %v1169, %v1183
    %v1186 = vmul.f32 %v1170, %v1184
    %v1187 = vpack.c.bf16 %v1186, %v1185
    %v1188 = vld [vmem:[%s11] sm:$0xf]
    %v1189 = vld [vmem:[%s11 + $0x4] sm:$0xf]
    %v1190 = vld [vmem:[%s11 + $0x8] sm:$0xf]
    %v1191 = vld [vmem:[%s11 + $0xc] sm:$0xf]
    %v1192 = vld [vmem:[%s11 + $0x10] sm:$0xf]
    %v1193 = vld [vmem:[%s11 + $0x14] sm:$0xf]
    %v1194 = vld [vmem:[%s11 + $0x18] sm:$0xf]
    %v1195 = vld [vmem:[%s11 + $0x1c] sm:$0xf]
    %v1196 = vld [vmem:[%s11 + $0x20] sm:$0xf]
    %v1197 = vld [vmem:[%s11 + $0x24] sm:$0xf]
    %v1198 = vld [vmem:[%s11 + $0x28] sm:$0xf]
    %v1199 = vld [vmem:[%s11 + $0x2c] sm:$0xf]
    %v1200 = vld [vmem:[%s11 + $0x30] sm:$0xf]
    %v1201 = vld [vmem:[%s11 + $0x34] sm:$0xf]
    %v1202 = vld [vmem:[%s11 + $0x38] sm:$0xf]
    %v1203 = vld [vmem:[%s11 + $0x3c] sm:$0xf]
    %v1204 = vlaneseq
    %v1205 = vshrl.u32 %v1204, 7
    %v1206 = vsub.s32 4, %v1205
    %v1207 = vrot.slane %v1057, %v1206
    %v1224 = vunpack.c.l.b16 %v1188
    %v1225 = vunpack.c.l.b16 %v1189
    %v1226 = vunpack.c.l.b16 %v1190
    %v1227 = vunpack.c.l.b16 %v1191
    %v1228 = vunpack.c.l.b16 %v1192
    %v1229 = vunpack.c.l.b16 %v1193
    %v1230 = vunpack.c.l.b16 %v1194
    %v1231 = vunpack.c.l.b16 %v1195
    %v1232 = vunpack.c.l.b16 %v1196
    %v1233 = vunpack.c.l.b16 %v1197
    %v1234 = vunpack.c.l.b16 %v1198
    %v1235 = vunpack.c.l.b16 %v1199
    %v1236 = vunpack.c.l.b16 %v1200
    %v1237 = vunpack.c.l.b16 %v1201
    %v1238 = vunpack.c.l.b16 %v1202
    %v1239 = vunpack.c.l.b16 %v1203
    %v1240 = vpack.c.b16 %v1225, %v1224
    %v1241 = vpack.c.b16 %v1227, %v1226
    %v1242 = vpack.c.b16 %v1229, %v1228
    %v1243 = vpack.c.b16 %v1231, %v1230
    %v1244 = vpack.c.b16 %v1233, %v1232
    %v1245 = vpack.c.b16 %v1235, %v1234
    %v1246 = vpack.c.b16 %v1237, %v1236
    %v1247 = vpack.c.b16 %v1239, %v1238
    %1256 = vmatprep.subr.bf16.mxu0 0
    %1257 = vmatpush1.bf16.msra.mxu0 %v1240
    %1258 = vmatprep.subr.bf16.mxu0 0
    %1259 = vmatpush1.bf16.msra.mxu0 %v1241
    %1260 = vmatprep.subr.bf16.mxu0 0
    %1261 = vmatpush1.bf16.msra.mxu0 %v1242
    %1262 = vmatprep.subr.bf16.mxu0 0
    %1263 = vmatpush1.bf16.msra.mxu0 %v1243
    %1264 = vmatprep.subr.bf16.mxu0 0
    %1265 = vmatpush1.bf16.msra.mxu0 %v1244
    %1266 = vmatprep.subr.bf16.mxu0 0
    %1267 = vmatpush1.bf16.msra.mxu0 %v1245
    %1268 = vmatprep.subr.bf16.mxu0 0
    %1269 = vmatpush1.bf16.msra.mxu0 %v1246
    %1270 = vmatprep.subr.bf16.mxu0 0
    %1271 = vmatpush1.bf16.msra.mxu0 %v1247
    %1272 = vmatprep.subr.bf16.mxu0 0
    %1273 = vmatpush1.bf16.msra.mxu0 0
    %1274 = vmatprep.subr.bf16.mxu0 0
    %1275 = vmatpush1.bf16.msra.mxu0 0
    %1276 = vmatprep.subr.bf16.mxu0 0
    %1277 = vmatpush1.bf16.msra.mxu0 0
    %1278 = vmatprep.subr.bf16.mxu0 0
    %1279 = vmatpush1.bf16.msra.mxu0 0
    %1280 = vmatprep.subr.bf16.mxu0 0
    %1281 = vmatpush1.bf16.msra.mxu0 0
    %1282 = vmatprep.subr.bf16.mxu0 0
    %1283 = vmatpush1.bf16.msra.mxu0 0
    %1284 = vmatprep.subr.bf16.mxu0 0
    %1285 = vmatpush1.bf16.msra.mxu0 0
    %1286 = vmatprep.subr.bf16.mxu0 0
    %1287 = vmatpush1.bf16.msra.mxu0 0
    %1288 = vmatprep.mubr.bf16.mxu0 0
    %1289 = vmatmul.mubr.bf16.gmra.mrb[0].mxu0 %v1187
    %v1290 = vpop.f32.mrb[0].mxu0
    %v1291 = vadd.f32 %v1207, %v1290
    %v1292 = vpop.f32.mrb[0].mxu0
    %v1293 = vpop.f32.mrb[0].mxu0
    %v1294 = vadd.f32 %v1207, %v1293
    %v1295 = vpop.f32.mrb[0].mxu0
    %1296 = vdwg.mxu0
    %v1297 = vadd.f32 %v1102, %v1291
    %v1298 = vadd.f32 %v1103, %v1294
    %v1299 = vsel %vm263, %v1297, 0.0
    %1300 = vadd.xlane.f32.xlu0 %v1299
    %v1301 = vpop.xlane.xlu0 %1300
    %v1302 = vsel %vm263, %v1298, 0.0
    %1303 = vadd.xlane.f32.xlu0 %v1302
    %v1304 = vpop.xlane.xlu0 %1303
    %v1305 = vmul.f32 %v1301, %v270
    %v1306 = vmul.f32 %v1304, %v270
    %v1307 = vsub.f32 %v1297, %v1305
    %v1308 = vsub.f32 %v1298, %v1306
    %v1309 = vmul.f32 %v1307, %v1307
    %v1310 = vmul.f32 %v1308, %v1308
    %v1311 = vsel %vm263, %v1309, 0.0
    %1312 = vadd.xlane.f32.xlu0 %v1311
    %v1313 = vpop.xlane.xlu0 %1312
    %v1314 = vsel %vm263, %v1310, 0.0
    %1315 = vadd.xlane.f32.xlu0 %v1314
    %v1316 = vpop.xlane.xlu0 %1315
    %v1317 = vmul.f32 %v1313, %v270
    %v1318 = vmul.f32 %v1316, %v270
    %v1319 = vadd.f32 %v1317, 1e-12
    %v1320 = vadd.f32 %v1318, 1e-12
    %v1321 = vrsqrt.pop %v1319
    %v1322 = vrsqrt.pop %v1320
    %v1323 = vmul.f32 %v1307, %v1321
    %v1324 = vmul.f32 %v1308, %v1322
    %v1325 = vlaneseq
    %v1326 = vshrl.u32 %v1325, 7
    %v1327 = vsub.s32 5, %v1326
    %v1328 = vrot.slane %v1057, %v1327
    %v1329 = vmul.f32 %v1323, %v1328
    %v1330 = vmul.f32 %v1324, %v1328
    %v1331 = vlaneseq
    %v1332 = vshrl.u32 %v1331, 7
    %v1333 = vsub.s32 6, %v1332
    %v1334 = vrot.slane %v1057, %v1333
    %v1335 = vadd.f32 %v1329, %v1334
    %v1336 = vadd.f32 %v1330, %v1334
    %v1337 = vpack.c.bf16 %v1336, %v1335
    %s1338 = scalar_lea.vmem [#allocation6], 96
    %v1339 = vld [vmem:[%s1338] sm:$0xf]
    %v1340 = vld [vmem:[%s1338 + $0x4] sm:$0xf]
    %v1341 = vld [vmem:[%s1338 + $0x8] sm:$0xf]
    %v1342 = vld [vmem:[%s1338 + $0xc] sm:$0xf]
    %s1343 = scalar_lea.vmem %s8, 6
    %v1344 = vld [vmem:[%s1343] sm:$0x1]
    %v1346 = vlaneseq
    %v1347 = vshrl.u32 %v1346, 7
    %v1348 = vsub.s32 0, %v1347
    %v1349 = vrot.slane %v1344, %v1348
    %v1355 = vunpack.c.l.b16 %v1339
    %v1356 = vunpack.c.l.b16 %v1340
    %v1357 = vunpack.c.l.b16 %v1341
    %v1358 = vunpack.c.l.b16 %v1342
    %v1359 = vpack.c.b16 %v1356, %v1355
    %v1360 = vpack.c.b16 %v1358, %v1357
    %v1364 = vsel %vm263, %v1337, 0
    %1366 = vmatprep.subr.bf16.mxu0 0
    %1367 = vmatpush1.bf16.msra.mxu0 %v1359
    %1368 = vmatprep.subr.bf16.mxu0 0
    %1369 = vmatpush1.bf16.msra.mxu0 %v1360
    %1370 = vmatprep.subr.bf16.mxu0 0
    %1371 = vmatpush1.bf16.msra.mxu0 0
    %1372 = vmatprep.subr.bf16.mxu0 0
    %1373 = vmatpush1.bf16.msra.mxu0 0
    %1374 = vmatprep.subr.bf16.mxu0 0
    %1375 = vmatpush1.bf16.msra.mxu0 0
    %1376 = vmatprep.subr.bf16.mxu0 0
    %1377 = vmatpush1.bf16.msra.mxu0 0
    %1378 = vmatprep.subr.bf16.mxu0 0
    %1379 = vmatpush1.bf16.msra.mxu0 0
    %1380 = vmatprep.subr.bf16.mxu0 0
    %1381 = vmatpush1.bf16.msra.mxu0 0
    %1382 = vmatprep.subr.bf16.mxu0 0
    %1383 = vmatpush1.bf16.msra.mxu0 0
    %1384 = vmatprep.subr.bf16.mxu0 0
    %1385 = vmatpush1.bf16.msra.mxu0 0
    %1386 = vmatprep.subr.bf16.mxu0 0
    %1387 = vmatpush1.bf16.msra.mxu0 0
    %1388 = vmatprep.subr.bf16.mxu0 0
    %1389 = vmatpush1.bf16.msra.mxu0 0
    %1390 = vmatprep.subr.bf16.mxu0 0
    %1391 = vmatpush1.bf16.msra.mxu0 0
    %1392 = vmatprep.subr.bf16.mxu0 0
    %1393 = vmatpush1.bf16.msra.mxu0 0
    %1394 = vmatprep.subr.bf16.mxu0 0
    %1395 = vmatpush1.bf16.msra.mxu0 0
    %1396 = vmatprep.subr.bf16.mxu0 0
    %1397 = vmatpush1.bf16.msra.mxu0 0
    %1398 = vmatprep.mubr.bf16.mxu0 0
    %1399 = vmatmul.mubr.bf16.gmra.mrb[0].mxu0 %v1364
    %v1400 = vpop.f32.mrb[0].mxu0
    %v1401 = vadd.f32 %v1349, %v1400
    %v1402 = vpop.f32.mrb[0].mxu0
    %v1403 = vpop.f32.mrb[0].mxu0
    %v1404 = vadd.f32 %v1349, %v1403
    %v1405 = vpop.f32.mrb[0].mxu0
    %1406 = vdwg.mxu0
    %s1407 = scalar_lea.vmem [#allocation6], 128
    %v1408 = vld [vmem:[%s1407] sm:$0xf]
    %v1409 = vld [vmem:[%s1407 + $0x4] sm:$0xf]
    %v1410 = vld [vmem:[%s1407 + $0x8] sm:$0xf]
    %v1411 = vld [vmem:[%s1407 + $0xc] sm:$0xf]
    %s1412 = scalar_lea.vmem %s8, 8
    %v1413 = vld [vmem:[%s1412] sm:$0x1]
    %v1415 = vlaneseq
    %v1416 = vshrl.u32 %v1415, 7
    %v1417 = vsub.s32 0, %v1416
    %v1418 = vrot.slane %v1413, %v1417
    %v1424 = vunpack.c.l.b16 %v1408
    %v1425 = vunpack.c.l.b16 %v1409
    %v1426 = vunpack.c.l.b16 %v1410
    %v1427 = vunpack.c.l.b16 %v1411
    %v1428 = vpack.c.b16 %v1425, %v1424
    %v1429 = vpack.c.b16 %v1427, %v1426
    %1432 = vmatprep.subr.bf16.mxu0 0
    %1433 = vmatpush1.bf16.msra.mxu0 %v1428
    %1434 = vmatprep.subr.bf16.mxu0 0
    %1435 = vmatpush1.bf16.msra.mxu0 %v1429
    %1436 = vmatprep.subr.bf16.mxu0 0
    %1437 = vmatpush1.bf16.msra.mxu0 0
    %1438 = vmatprep.subr.bf16.mxu0 0
    %1439 = vmatpush1.bf16.msra.mxu0 0
    %1440 = vmatprep.subr.bf16.mxu0 0
    %1441 = vmatpush1.bf16.msra.mxu0 0
    %1442 = vmatprep.subr.bf16.mxu0 0
    %1443 = vmatpush1.bf16.msra.mxu0 0
    %1444 = vmatprep.subr.bf16.mxu0 0
    %1445 = vmatpush1.bf16.msra.mxu0 0
    %1446 = vmatprep.subr.bf16.mxu0 0
    %1447 = vmatpush1.bf16.msra.mxu0 0
    %1448 = vmatprep.subr.bf16.mxu0 0
    %1449 = vmatpush1.bf16.msra.mxu0 0
    %1450 = vmatprep.subr.bf16.mxu0 0
    %1451 = vmatpush1.bf16.msra.mxu0 0
    %1452 = vmatprep.subr.bf16.mxu0 0
    %1453 = vmatpush1.bf16.msra.mxu0 0
    %1454 = vmatprep.subr.bf16.mxu0 0
    %1455 = vmatpush1.bf16.msra.mxu0 0
    %1456 = vmatprep.subr.bf16.mxu0 0
    %1457 = vmatpush1.bf16.msra.mxu0 0
    %1458 = vmatprep.subr.bf16.mxu0 0
    %1459 = vmatpush1.bf16.msra.mxu0 0
    %1460 = vmatprep.subr.bf16.mxu0 0
    %1461 = vmatpush1.bf16.msra.mxu0 0
    %1462 = vmatprep.subr.bf16.mxu0 0
    %1463 = vmatpush1.bf16.msra.mxu0 0
    %1464 = vmatprep.mubr.bf16.mxu0 0
    %1465 = vmatmul.mubr.bf16.gmra.mrb[0].mxu0 %v1364
    %v1466 = vpop.f32.mrb[0].mxu0
    %v1467 = vadd.f32 %v1418, %v1466
    %v1468 = vpop.f32.mrb[0].mxu0
    %v1469 = vpop.f32.mrb[0].mxu0
    %v1470 = vadd.f32 %v1418, %v1469
    %v1471 = vpop.f32.mrb[0].mxu0
    %1472 = vdwg.mxu0
    %s1473 = scalar_lea.vmem [#allocation6], 160
    %v1474 = vld [vmem:[%s1473] sm:$0xf]
    %v1475 = vld [vmem:[%s1473 + $0x4] sm:$0xf]
    %v1476 = vld [vmem:[%s1473 + $0x8] sm:$0xf]
    %v1477 = vld [vmem:[%s1473 + $0xc] sm:$0xf]
    %s1478 = scalar_lea.vmem %s8, 10
    %v1479 = vld [vmem:[%s1478] sm:$0x1]
    %v1481 = vlaneseq
    %v1482 = vshrl.u32 %v1481, 7
    %v1483 = vsub.s32 0, %v1482
    %v1484 = vrot.slane %v1479, %v1483
    %v1490 = vunpack.c.l.b16 %v1474
    %v1491 = vunpack.c.l.b16 %v1475
    %v1492 = vunpack.c.l.b16 %v1476
    %v1493 = vunpack.c.l.b16 %v1477
    %v1494 = vpack.c.b16 %v1491, %v1490
    %v1495 = vpack.c.b16 %v1493, %v1492
    %1498 = vmatprep.subr.bf16.mxu0 0
    %1499 = vmatpush1.bf16.msra.mxu0 %v1494
    %1500 = vmatprep.subr.bf16.mxu0 0
    %1501 = vmatpush1.bf16.msra.mxu0 %v1495
    %1502 = vmatprep.subr.bf16.mxu0 0
    %1503 = vmatpush1.bf16.msra.mxu0 0
    %1504 = vmatprep.subr.bf16.mxu0 0
    %1505 = vmatpush1.bf16.msra.mxu0 0
    %1506 = vmatprep.subr.bf16.mxu0 0
    %1507 = vmatpush1.bf16.msra.mxu0 0
    %1508 = vmatprep.subr.bf16.mxu0 0
    %1509 = vmatpush1.bf16.msra.mxu0 0
    %1510 = vmatprep.subr.bf16.mxu0 0
    %1511 = vmatpush1.bf16.msra.mxu0 0
    %1512 = vmatprep.subr.bf16.mxu0 0
    %1513 = vmatpush1.bf16.msra.mxu0 0
    %1514 = vmatprep.subr.bf16.mxu0 0
    %1515 = vmatpush1.bf16.msra.mxu0 0
    %1516 = vmatprep.subr.bf16.mxu0 0
    %1517 = vmatpush1.bf16.msra.mxu0 0
    %1518 = vmatprep.subr.bf16.mxu0 0
    %1519 = vmatpush1.bf16.msra.mxu0 0
    %1520 = vmatprep.subr.bf16.mxu0 0
    %1521 = vmatpush1.bf16.msra.mxu0 0
    %1522 = vmatprep.subr.bf16.mxu0 0
    %1523 = vmatpush1.bf16.msra.mxu0 0
    %1524 = vmatprep.subr.bf16.mxu0 0
    %1525 = vmatpush1.bf16.msra.mxu0 0
    %1526 = vmatprep.subr.bf16.mxu0 0
    %1527 = vmatpush1.bf16.msra.mxu0 0
    %1528 = vmatprep.subr.bf16.mxu0 0
    %1529 = vmatpush1.bf16.msra.mxu0 0
    %1530 = vmatprep.mubr.bf16.mxu0 0
    %1531 = vmatmul.mubr.bf16.gmra.mrb[0].mxu0 %v1364
    %v1532 = vpop.f32.mrb[0].mxu0
    %v1533 = vadd.f32 %v1484, %v1532
    %v1534 = vpop.f32.mrb[0].mxu0
    %v1535 = vpop.f32.mrb[0].mxu0
    %v1536 = vadd.f32 %v1484, %v1535
    %v1537 = vpop.f32.mrb[0].mxu0
    %1538 = vdwg.mxu0
    %v1539 = vpack.c.bf16 %v1404, %v1401
    %v1540 = vpack.c.bf16 %v1470, %v1467
    %v1542 = vsel %vm511, %v1539, 0
    %v1545 = vsel %vm511, %v1540, 0
    %1547 = vmatprep.subr.bf16.mxu0 0
    %1548 = vmatpush1.bf16.xpose.msra.mxu0 %v1545
    %1549 = vmatprep.subr.bf16.mxu0 0
    %1550 = vmatpush1.bf16.xpose.msra.mxu0 0
    %1551 = vmatprep.subr.bf16.mxu0 0
    %1552 = vmatpush1.bf16.xpose.msra.mxu0 0
    %1553 = vmatprep.subr.bf16.mxu0 0
    %1554 = vmatpush1.bf16.xpose.msra.mxu0 0
    %1555 = vmatprep.subr.bf16.mxu0 0
    %1556 = vmatpush1.bf16.xpose.msra.mxu0 0
    %1557 = vmatprep.subr.bf16.mxu0 0
    %1558 = vmatpush1.bf16.xpose.msra.mxu0 0
    %1559 = vmatprep.subr.bf16.mxu0 0
    %1560 = vmatpush1.bf16.xpose.msra.mxu0 0
    %1561 = vmatprep.subr.bf16.mxu0 0
    %1562 = vmatpush1.bf16.xpose.msra.mxu0 0
    %1563 = vmatprep.subr.bf16.mxu0 0
    %1564 = vmatpush1.bf16.xpose.msra.mxu0 0
    %1565 = vmatprep.subr.bf16.mxu0 0
    %1566 = vmatpush1.bf16.xpose.msra.mxu0 0
    %1567 = vmatprep.subr.bf16.mxu0 0
    %1568 = vmatpush1.bf16.xpose.msra.mxu0 0
    %1569 = vmatprep.subr.bf16.mxu0 0
    %1570 = vmatpush1.bf16.xpose.msra.mxu0 0
    %1571 = vmatprep.subr.bf16.mxu0 0
    %1572 = vmatpush1.bf16.xpose.msra.mxu0 0
    %1573 = vmatprep.subr.bf16.mxu0 0
    %1574 = vmatpush1.bf16.xpose.msra.mxu0 0
    %1575 = vmatprep.subr.bf16.mxu0 0
    %1576 = vmatpush1.bf16.xpose.msra.mxu0 0
    %1577 = vmatprep.subr.bf16.mxu0 0
    %1578 = vmatpush1.bf16.xpose.msra.mxu0 0
    %1579 = vmatprep.mubr.bf16.mxu0 0
    %1580 = vmatmul.mubr.bf16.gmra.mrb[0].mxu0 %v1542
    %v1581 = vpop.f32.mrb[0].mxu0
    %v1582 = vadd.f32 0.0, %v1581
    %v1583 = vpop.f32.mrb[0].mxu0
    %v1584 = vpop.f32.mrb[0].mxu0
    %v1585 = vadd.f32 0.0, %v1584
    %v1586 = vpop.f32.mrb[0].mxu0
    %1587 = vdwg.mxu0
    %v1588 = vmul.f32 %v1582, 0.25
    %v1589 = vmul.f32 %v1585, 0.25
    %v1590 = vadd.f32 %v1588, %v307
    %v1591 = vadd.f32 %v1589, %v308
    %v1592 = vsel %vm511, %v1590, -inf
    %1593 = vmax.xlane.f32.xlu0 %v1592
    %v1594 = vpop.xlane.xlu0 %1593
    %v1595 = vsel %vm511, %v1591, -inf
    %1596 = vmax.xlane.f32.xlu0 %v1595
    %v1597 = vpop.xlane.xlu0 %1596
    %v1598 = vsub.f32 %v1590, %v1594
    %v1599 = vsub.f32 %v1591, %v1597
    %v1600 = vmul.f32 %v1598, 1.442695
    %v1601 = vpow.pop %v1600
    %v1602 = vmul.f32 %v1599, 1.442695
    %v1603 = vpow.pop %v1602
    %v1604 = vsel %vm511, %v1601, 0.0
    %1605 = vadd.xlane.f32.xlu0 %v1604
    %v1606 = vpop.xlane.xlu0 %1605
    %v1607 = vsel %vm511, %v1603, 0.0
    %1608 = vadd.xlane.f32.xlu0 %v1607
    %v1609 = vpop.xlane.xlu0 %1608
    %v1610 = vrcp.pop %v1606
    %v1611 = vrcp.pop %v1609
    %v1612 = vmul.f32 %v1601, %v1610
    %v1613 = vmul.f32 %v1603, %v1611
    %v1614 = vpack.c.bf16 %v1613, %v1612
    %v1615 = vpack.c.bf16 %v1536, %v1533
    %v1617 = vsel %vm511, %v1614, 0
    %1619 = vmatprep.subr.bf16.mxu0 0
    %1620 = vmatpush1.bf16.msra.mxu0 %v1615
    %1621 = vmatprep.subr.bf16.mxu0 0
    %1622 = vmatpush1.bf16.msra.mxu0 0
    %1623 = vmatprep.subr.bf16.mxu0 0
    %1624 = vmatpush1.bf16.msra.mxu0 0
    %1625 = vmatprep.subr.bf16.mxu0 0
    %1626 = vmatpush1.bf16.msra.mxu0 0
    %1627 = vmatprep.subr.bf16.mxu0 0
    %1628 = vmatpush1.bf16.msra.mxu0 0
    %1629 = vmatprep.subr.bf16.mxu0 0
    %1630 = vmatpush1.bf16.msra.mxu0 0
    %1631 = vmatprep.subr.bf16.mxu0 0
    %1632 = vmatpush1.bf16.msra.mxu0 0
    %1633 = vmatprep.subr.bf16.mxu0 0
    %1634 = vmatpush1.bf16.msra.mxu0 0
    %1635 = vmatprep.subr.bf16.mxu0 0
    %1636 = vmatpush1.bf16.msra.mxu0 0
    %1637 = vmatprep.subr.bf16.mxu0 0
    %1638 = vmatpush1.bf16.msra.mxu0 0
    %1639 = vmatprep.subr.bf16.mxu0 0
    %1640 = vmatpush1.bf16.msra.mxu0 0
    %1641 = vmatprep.subr.bf16.mxu0 0
    %1642 = vmatpush1.bf16.msra.mxu0 0
    %1643 = vmatprep.subr.bf16.mxu0 0
    %1644 = vmatpush1.bf16.msra.mxu0 0
    %1645 = vmatprep.subr.bf16.mxu0 0
    %1646 = vmatpush1.bf16.msra.mxu0 0
    %1647 = vmatprep.subr.bf16.mxu0 0
    %1648 = vmatpush1.bf16.msra.mxu0 0
    %1649 = vmatprep.subr.bf16.mxu0 0
    %1650 = vmatpush1.bf16.msra.mxu0 0
    %1651 = vmatprep.mubr.bf16.mxu0 0
    %1652 = vmatmul.mubr.bf16.gmra.mrb[0].mxu0 %v1617
    %v1653 = vpop.f32.mrb[0].mxu0
    %v1654 = vadd.f32 0.0, %v1653
    %v1655 = vpop.f32.mrb[0].mxu0
    %v1656 = vpop.f32.mrb[0].mxu0
    %v1657 = vadd.f32 0.0, %v1656
    %v1658 = vpop.f32.mrb[0].mxu0
    %1659 = vdwg.mxu0
    %v1660 = vpack.c.bf16 %v1657, %v1654
    %s1661 = scalar_lea.vmem [#allocation7], 16
    %v1662 = vld [vmem:[%s1661] sm:$0xf]
    %v1663 = vld [vmem:[%s1661 + $0x4] sm:$0xf]
    %s1664 = scalar_lea.vmem [#allocation6], 112
    %v1665 = vld [vmem:[%s1664] sm:$0xf]
    %v1666 = vld [vmem:[%s1664 + $0x4] sm:$0xf]
    %v1667 = vld [vmem:[%s1664 + $0x8] sm:$0xf]
    %v1668 = vld [vmem:[%s1664 + $0xc] sm:$0xf]
    %s1669 = scalar_lea.vmem %s8, 7
    %v1670 = vld [vmem:[%s1669] sm:$0x1]
    %v1672 = vlaneseq
    %v1673 = vshrl.u32 %v1672, 7
    %v1674 = vsub.s32 0, %v1673
    %v1675 = vrot.slane %v1670, %v1674
    %v1681 = vunpack.c.l.b16 %v1665
    %v1682 = vunpack.c.l.b16 %v1666
    %v1683 = vunpack.c.l.b16 %v1667
    %v1684 = vunpack.c.l.b16 %v1668
    %v1685 = vpack.c.b16 %v1682, %v1681
    %v1686 = vpack.c.b16 %v1684, %v1683
    %1689 = vmatprep.subr.bf16.mxu0 0
    %1690 = vmatpush1.bf16.msra.mxu0 %v1685
    %1691 = vmatprep.subr.bf16.mxu0 0
    %1692 = vmatpush1.bf16.msra.mxu0 %v1686
    %1693 = vmatprep.subr.bf16.mxu0 0
    %1694 = vmatpush1.bf16.msra.mxu0 0
    %1695 = vmatprep.subr.bf16.mxu0 0
    %1696 = vmatpush1.bf16.msra.mxu0 0
    %1697 = vmatprep.subr.bf16.mxu0 0
    %1698 = vmatpush1.bf16.msra.mxu0 0
    %1699 = vmatprep.subr.bf16.mxu0 0
    %1700 = vmatpush1.bf16.msra.mxu0 0
    %1701 = vmatprep.subr.bf16.mxu0 0
    %1702 = vmatpush1.bf16.msra.mxu0 0
    %1703 = vmatprep.subr.bf16.mxu0 0
    %1704 = vmatpush1.bf16.msra.mxu0 0
    %1705 = vmatprep.subr.bf16.mxu0 0
    %1706 = vmatpush1.bf16.msra.mxu0 0
    %1707 = vmatprep.subr.bf16.mxu0 0
    %1708 = vmatpush1.bf16.msra.mxu0 0
    %1709 = vmatprep.subr.bf16.mxu0 0
    %1710 = vmatpush1.bf16.msra.mxu0 0
    %1711 = vmatprep.subr.bf16.mxu0 0
    %1712 = vmatpush1.bf16.msra.mxu0 0
    %1713 = vmatprep.subr.bf16.mxu0 0
    %1714 = vmatpush1.bf16.msra.mxu0 0
    %1715 = vmatprep.subr.bf16.mxu0 0
    %1716 = vmatpush1.bf16.msra.mxu0 0
    %1717 = vmatprep.subr.bf16.mxu0 0
    %1718 = vmatpush1.bf16.msra.mxu0 0
    %1719 = vmatprep.subr.bf16.mxu0 0
    %1720 = vmatpush1.bf16.msra.mxu0 0
    %1721 = vmatprep.mubr.bf16.mxu0 0
    %1722 = vmatmul.mubr.bf16.gmra.mrb[0].mxu0 %v1364
    %v1723 = vpop.f32.mrb[0].mxu0
    %v1724 = vadd.f32 %v1675, %v1723
    %v1725 = vpop.f32.mrb[0].mxu0
    %v1726 = vpop.f32.mrb[0].mxu0
    %v1727 = vadd.f32 %v1675, %v1726
    %v1728 = vpop.f32.mrb[0].mxu0
    %1729 = vdwg.mxu0
    %s1730 = scalar_lea.vmem [#allocation6], 144
    %v1731 = vld [vmem:[%s1730] sm:$0xf]
    %v1732 = vld [vmem:[%s1730 + $0x4] sm:$0xf]
    %v1733 = vld [vmem:[%s1730 + $0x8] sm:$0xf]
    %v1734 = vld [vmem:[%s1730 + $0xc] sm:$0xf]
    %s1735 = scalar_lea.vmem %s8, 9
    %v1736 = vld [vmem:[%s1735] sm:$0x1]
    %v1738 = vlaneseq
    %v1739 = vshrl.u32 %v1738, 7
    %v1740 = vsub.s32 0, %v1739
    %v1741 = vrot.slane %v1736, %v1740
    %v1747 = vunpack.c.l.b16 %v1731
    %v1748 = vunpack.c.l.b16 %v1732
    %v1749 = vunpack.c.l.b16 %v1733
    %v1750 = vunpack.c.l.b16 %v1734
    %v1751 = vpack.c.b16 %v1748, %v1747
    %v1752 = vpack.c.b16 %v1750, %v1749
    %1755 = vmatprep.subr.bf16.mxu0 0
    %1756 = vmatpush1.bf16.msra.mxu0 %v1751
    %1757 = vmatprep.subr.bf16.mxu0 0
    %1758 = vmatpush1.bf16.msra.mxu0 %v1752
    %1759 = vmatprep.subr.bf16.mxu0 0
    %1760 = vmatpush1.bf16.msra.mxu0 0
    %1761 = vmatprep.subr.bf16.mxu0 0
    %1762 = vmatpush1.bf16.msra.mxu0 0
    %1763 = vmatprep.subr.bf16.mxu0 0
    %1764 = vmatpush1.bf16.msra.mxu0 0
    %1765 = vmatprep.subr.bf16.mxu0 0
    %1766 = vmatpush1.bf16.msra.mxu0 0
    %1767 = vmatprep.subr.bf16.mxu0 0
    %1768 = vmatpush1.bf16.msra.mxu0 0
    %1769 = vmatprep.subr.bf16.mxu0 0
    %1770 = vmatpush1.bf16.msra.mxu0 0
    %1771 = vmatprep.subr.bf16.mxu0 0
    %1772 = vmatpush1.bf16.msra.mxu0 0
    %1773 = vmatprep.subr.bf16.mxu0 0
    %1774 = vmatpush1.bf16.msra.mxu0 0
    %1775 = vmatprep.subr.bf16.mxu0 0
    %1776 = vmatpush1.bf16.msra.mxu0 0
    %1777 = vmatprep.subr.bf16.mxu0 0
    %1778 = vmatpush1.bf16.msra.mxu0 0
    %1779 = vmatprep.subr.bf16.mxu0 0
    %1780 = vmatpush1.bf16.msra.mxu0 0
    %1781 = vmatprep.subr.bf16.mxu0 0
    %1782 = vmatpush1.bf16.msra.mxu0 0
    %1783 = vmatprep.subr.bf16.mxu0 0
    %1784 = vmatpush1.bf16.msra.mxu0 0
    %1785 = vmatprep.subr.bf16.mxu0 0
    %1786 = vmatpush1.bf16.msra.mxu0 0
    %1787 = vmatprep.mubr.bf16.mxu0 0
    %1788 = vmatmul.mubr.bf16.gmra.mrb[0].mxu0 %v1364
    %v1789 = vpop.f32.mrb[0].mxu0
    %v1790 = vadd.f32 %v1741, %v1789
    %v1791 = vpop.f32.mrb[0].mxu0
    %v1792 = vpop.f32.mrb[0].mxu0
    %v1793 = vadd.f32 %v1741, %v1792
    %v1794 = vpop.f32.mrb[0].mxu0
    %1795 = vdwg.mxu0
    %s1796 = scalar_lea.vmem [#allocation6], 176
    %v1797 = vld [vmem:[%s1796] sm:$0xf]
    %v1798 = vld [vmem:[%s1796 + $0x4] sm:$0xf]
    %v1799 = vld [vmem:[%s1796 + $0x8] sm:$0xf]
    %v1800 = vld [vmem:[%s1796 + $0xc] sm:$0xf]
    %s1801 = scalar_lea.vmem %s8, 11
    %v1802 = vld [vmem:[%s1801] sm:$0x1]
    %v1804 = vlaneseq
    %v1805 = vshrl.u32 %v1804, 7
    %v1806 = vsub.s32 0, %v1805
    %v1807 = vrot.slane %v1802, %v1806
    %v1813 = vunpack.c.l.b16 %v1797
    %v1814 = vunpack.c.l.b16 %v1798
    %v1815 = vunpack.c.l.b16 %v1799
    %v1816 = vunpack.c.l.b16 %v1800
    %v1817 = vpack.c.b16 %v1814, %v1813
    %v1818 = vpack.c.b16 %v1816, %v1815
    %1821 = vmatprep.subr.bf16.mxu0 0
    %1822 = vmatpush1.bf16.msra.mxu0 %v1817
    %1823 = vmatprep.subr.bf16.mxu0 0
    %1824 = vmatpush1.bf16.msra.mxu0 %v1818
    %1825 = vmatprep.subr.bf16.mxu0 0
    %1826 = vmatpush1.bf16.msra.mxu0 0
    %1827 = vmatprep.subr.bf16.mxu0 0
    %1828 = vmatpush1.bf16.msra.mxu0 0
    %1829 = vmatprep.subr.bf16.mxu0 0
    %1830 = vmatpush1.bf16.msra.mxu0 0
    %1831 = vmatprep.subr.bf16.mxu0 0
    %1832 = vmatpush1.bf16.msra.mxu0 0
    %1833 = vmatprep.subr.bf16.mxu0 0
    %1834 = vmatpush1.bf16.msra.mxu0 0
    %1835 = vmatprep.subr.bf16.mxu0 0
    %1836 = vmatpush1.bf16.msra.mxu0 0
    %1837 = vmatprep.subr.bf16.mxu0 0
    %1838 = vmatpush1.bf16.msra.mxu0 0
    %1839 = vmatprep.subr.bf16.mxu0 0
    %1840 = vmatpush1.bf16.msra.mxu0 0
    %1841 = vmatprep.subr.bf16.mxu0 0
    %1842 = vmatpush1.bf16.msra.mxu0 0
    %1843 = vmatprep.subr.bf16.mxu0 0
    %1844 = vmatpush1.bf16.msra.mxu0 0
    %1845 = vmatprep.subr.bf16.mxu0 0
    %1846 = vmatpush1.bf16.msra.mxu0 0
    %1847 = vmatprep.subr.bf16.mxu0 0
    %1848 = vmatpush1.bf16.msra.mxu0 0
    %1849 = vmatprep.subr.bf16.mxu0 0
    %1850 = vmatpush1.bf16.msra.mxu0 0
    %1851 = vmatprep.subr.bf16.mxu0 0
    %1852 = vmatpush1.bf16.msra.mxu0 0
    %1853 = vmatprep.mubr.bf16.mxu0 0
    %1854 = vmatmul.mubr.bf16.gmra.mrb[0].mxu0 %v1364
    %v1855 = vpop.f32.mrb[0].mxu0
    %v1856 = vadd.f32 %v1807, %v1855
    %v1857 = vpop.f32.mrb[0].mxu0
    %v1858 = vpop.f32.mrb[0].mxu0
    %v1859 = vadd.f32 %v1807, %v1858
    %v1860 = vpop.f32.mrb[0].mxu0
    %1861 = vdwg.mxu0
    %v1862 = vpack.c.bf16 %v1727, %v1724
    %v1863 = vpack.c.bf16 %v1793, %v1790
    %v1865 = vsel %vm511, %v1862, 0
    %v1868 = vsel %vm511, %v1863, 0
    %1870 = vmatprep.subr.bf16.mxu0 0
    %1871 = vmatpush1.bf16.xpose.msra.mxu0 %v1868
    %1872 = vmatprep.subr.bf16.mxu0 0
    %1873 = vmatpush1.bf16.xpose.msra.mxu0 0
    %1874 = vmatprep.subr.bf16.mxu0 0
    %1875 = vmatpush1.bf16.xpose.msra.mxu0 0
    %1876 = vmatprep.subr.bf16.mxu0 0
    %1877 = vmatpush1.bf16.xpose.msra.mxu0 0
    %1878 = vmatprep.subr.bf16.mxu0 0
    %1879 = vmatpush1.bf16.xpose.msra.mxu0 0
    %1880 = vmatprep.subr.bf16.mxu0 0
    %1881 = vmatpush1.bf16.xpose.msra.mxu0 0
    %1882 = vmatprep.subr.bf16.mxu0 0
    %1883 = vmatpush1.bf16.xpose.msra.mxu0 0
    %1884 = vmatprep.subr.bf16.mxu0 0
    %1885 = vmatpush1.bf16.xpose.msra.mxu0 0
    %1886 = vmatprep.subr.bf16.mxu0 0
    %1887 = vmatpush1.bf16.xpose.msra.mxu0 0
    %1888 = vmatprep.subr.bf16.mxu0 0
    %1889 = vmatpush1.bf16.xpose.msra.mxu0 0
    %1890 = vmatprep.subr.bf16.mxu0 0
    %1891 = vmatpush1.bf16.xpose.msra.mxu0 0
    %1892 = vmatprep.subr.bf16.mxu0 0
    %1893 = vmatpush1.bf16.xpose.msra.mxu0 0
    %1894 = vmatprep.subr.bf16.mxu0 0
    %1895 = vmatpush1.bf16.xpose.msra.mxu0 0
    %1896 = vmatprep.subr.bf16.mxu0 0
    %1897 = vmatpush1.bf16.xpose.msra.mxu0 0
    %1898 = vmatprep.subr.bf16.mxu0 0
    %1899 = vmatpush1.bf16.xpose.msra.mxu0 0
    %1900 = vmatprep.subr.bf16.mxu0 0
    %1901 = vmatpush1.bf16.xpose.msra.mxu0 0
    %1902 = vmatprep.mubr.bf16.mxu0 0
    %1903 = vmatmul.mubr.bf16.gmra.mrb[0].mxu0 %v1865
    %v1904 = vpop.f32.mrb[0].mxu0
    %v1905 = vadd.f32 0.0, %v1904
    %v1906 = vpop.f32.mrb[0].mxu0
    %v1907 = vpop.f32.mrb[0].mxu0
    %v1908 = vadd.f32 0.0, %v1907
    %v1909 = vpop.f32.mrb[0].mxu0
    %1910 = vdwg.mxu0
    %v1911 = vmul.f32 %v1905, 0.25
    %v1912 = vmul.f32 %v1908, 0.25
    %v1913 = vadd.f32 %v1911, %v307
    %v1914 = vadd.f32 %v1912, %v308
    %v1915 = vsel %vm511, %v1913, -inf
    %1916 = vmax.xlane.f32.xlu0 %v1915
    %v1917 = vpop.xlane.xlu0 %1916
    %v1918 = vsel %vm511, %v1914, -inf
    %1919 = vmax.xlane.f32.xlu0 %v1918
    %v1920 = vpop.xlane.xlu0 %1919
    %v1921 = vsub.f32 %v1913, %v1917
    %v1922 = vsub.f32 %v1914, %v1920
    %v1923 = vmul.f32 %v1921, 1.442695
    %v1924 = vpow.pop %v1923
    %v1925 = vmul.f32 %v1922, 1.442695
    %v1926 = vpow.pop %v1925
    %v1927 = vsel %vm511, %v1924, 0.0
    %1928 = vadd.xlane.f32.xlu0 %v1927
    %v1929 = vpop.xlane.xlu0 %1928
    %v1930 = vsel %vm511, %v1926, 0.0
    %1931 = vadd.xlane.f32.xlu0 %v1930
    %v1932 = vpop.xlane.xlu0 %1931
    %v1933 = vrcp.pop %v1929
    %v1934 = vrcp.pop %v1932
    %v1935 = vmul.f32 %v1924, %v1933
    %v1936 = vmul.f32 %v1926, %v1934
    %v1937 = vpack.c.bf16 %v1936, %v1935
    %v1938 = vpack.c.bf16 %v1859, %v1856
    %v1940 = vsel %vm511, %v1937, 0
    %1942 = vmatprep.subr.bf16.mxu0 0
    %1943 = vmatpush1.bf16.msra.mxu0 %v1938
    %1944 = vmatprep.subr.bf16.mxu0 0
    %1945 = vmatpush1.bf16.msra.mxu0 0
    %1946 = vmatprep.subr.bf16.mxu0 0
    %1947 = vmatpush1.bf16.msra.mxu0 0
    %1948 = vmatprep.subr.bf16.mxu0 0
    %1949 = vmatpush1.bf16.msra.mxu0 0
    %1950 = vmatprep.subr.bf16.mxu0 0
    %1951 = vmatpush1.bf16.msra.mxu0 0
    %1952 = vmatprep.subr.bf16.mxu0 0
    %1953 = vmatpush1.bf16.msra.mxu0 0
    %1954 = vmatprep.subr.bf16.mxu0 0
    %1955 = vmatpush1.bf16.msra.mxu0 0
    %1956 = vmatprep.subr.bf16.mxu0 0
    %1957 = vmatpush1.bf16.msra.mxu0 0
    %1958 = vmatprep.subr.bf16.mxu0 0
    %1959 = vmatpush1.bf16.msra.mxu0 0
    %1960 = vmatprep.subr.bf16.mxu0 0
    %1961 = vmatpush1.bf16.msra.mxu0 0
    %1962 = vmatprep.subr.bf16.mxu0 0
    %1963 = vmatpush1.bf16.msra.mxu0 0
    %1964 = vmatprep.subr.bf16.mxu0 0
    %1965 = vmatpush1.bf16.msra.mxu0 0
    %1966 = vmatprep.subr.bf16.mxu0 0
    %1967 = vmatpush1.bf16.msra.mxu0 0
    %1968 = vmatprep.subr.bf16.mxu0 0
    %1969 = vmatpush1.bf16.msra.mxu0 0
    %1970 = vmatprep.subr.bf16.mxu0 0
    %1971 = vmatpush1.bf16.msra.mxu0 0
    %1972 = vmatprep.subr.bf16.mxu0 0
    %1973 = vmatpush1.bf16.msra.mxu0 0
    %1974 = vmatprep.mubr.bf16.mxu0 0
    %1975 = vmatmul.mubr.bf16.gmra.mrb[0].mxu0 %v1940
    %v1976 = vpop.f32.mrb[0].mxu0
    %v1977 = vadd.f32 0.0, %v1976
    %v1978 = vpop.f32.mrb[0].mxu0
    %v1979 = vpop.f32.mrb[0].mxu0
    %v1980 = vadd.f32 0.0, %v1979
    %v1981 = vpop.f32.mrb[0].mxu0
    %1982 = vdwg.mxu0
    %v1983 = vpack.c.bf16 %v1980, %v1977
    %s1984 = scalar_lea.vmem [#allocation7], 24
    %v1985 = vld [vmem:[%s1984] sm:$0xf]
    %v1986 = vld [vmem:[%s1984 + $0x4] sm:$0xf]
    %v1989 = vunpack.c.l.b16 %v1985
    %v1990 = vunpack.c.l.b16 %v1986
    %v1991 = vpack.c.b16 %v1990, %v1989
    %v1994 = vsel %vm511, %v1983, 0
    %1996 = vmatprep.subr.bf16.mxu0 0
    %1997 = vmatpush1.bf16.msra.mxu0 %v1991
    %1998 = vmatprep.subr.bf16.mxu0 0
    %1999 = vmatpush1.bf16.msra.mxu0 0
    %2000 = vmatprep.subr.bf16.mxu0 0
    %2001 = vmatpush1.bf16.msra.mxu0 0
    %2002 = vmatprep.subr.bf16.mxu0 0
    %2003 = vmatpush1.bf16.msra.mxu0 0
    %2004 = vmatprep.subr.bf16.mxu0 0
    %2005 = vmatpush1.bf16.msra.mxu0 0
    %2006 = vmatprep.subr.bf16.mxu0 0
    %2007 = vmatpush1.bf16.msra.mxu0 0
    %2008 = vmatprep.subr.bf16.mxu0 0
    %2009 = vmatpush1.bf16.msra.mxu0 0
    %2010 = vmatprep.subr.bf16.mxu0 0
    %2011 = vmatpush1.bf16.msra.mxu0 0
    %2012 = vmatprep.subr.bf16.mxu0 0
    %2013 = vmatpush1.bf16.msra.mxu0 0
    %2014 = vmatprep.subr.bf16.mxu0 0
    %2015 = vmatpush1.bf16.msra.mxu0 0
    %2016 = vmatprep.subr.bf16.mxu0 0
    %2017 = vmatpush1.bf16.msra.mxu0 0
    %2018 = vmatprep.subr.bf16.mxu0 0
    %2019 = vmatpush1.bf16.msra.mxu0 0
    %2020 = vmatprep.subr.bf16.mxu0 0
    %2021 = vmatpush1.bf16.msra.mxu0 0
    %2022 = vmatprep.subr.bf16.mxu0 0
    %2023 = vmatpush1.bf16.msra.mxu0 0
    %2024 = vmatprep.subr.bf16.mxu0 0
    %2025 = vmatpush1.bf16.msra.mxu0 0
    %2026 = vmatprep.subr.bf16.mxu0 0
    %2027 = vmatpush1.bf16.msra.mxu0 0
    %2028 = vmatprep.mubr.bf16.mxu0 0
    %2029 = vmatmul.mubr.bf16.gmra.mrb[0].mxu0 %v1994
    %v2030 = vpop.f32.mrb[0].mxu0
    %v2031 = vadd.f32 0.0, %v2030
    %v2032 = vpop.f32.mrb[0].mxu0
    %v2033 = vpop.f32.mrb[0].mxu0
    %v2034 = vadd.f32 0.0, %v2033
    %v2035 = vpop.f32.mrb[0].mxu0
    %2036 = vdwg.mxu0
    %v2039 = vunpack.c.l.b16 %v1662
    %v2040 = vunpack.c.l.b16 %v1663
    %v2041 = vpack.c.b16 %v2040, %v2039
    %v2044 = vsel %vm511, %v1660, 0
    %2046 = vmatprep.subr.bf16.mxu0 0
    %2047 = vmatpush1.bf16.msra.mxu0 %v2041
    %2048 = vmatprep.subr.bf16.mxu0 0
    %2049 = vmatpush1.bf16.msra.mxu0 0
    %2050 = vmatprep.subr.bf16.mxu0 0
    %2051 = vmatpush1.bf16.msra.mxu0 0
    %2052 = vmatprep.subr.bf16.mxu0 0
    %2053 = vmatpush1.bf16.msra.mxu0 0
    %2054 = vmatprep.subr.bf16.mxu0 0
    %2055 = vmatpush1.bf16.msra.mxu0 0
    %2056 = vmatprep.subr.bf16.mxu0 0
    %2057 = vmatpush1.bf16.msra.mxu0 0
    %2058 = vmatprep.subr.bf16.mxu0 0
    %2059 = vmatpush1.bf16.msra.mxu0 0
    %2060 = vmatprep.subr.bf16.mxu0 0
    %2061 = vmatpush1.bf16.msra.mxu0 0
    %2062 = vmatprep.subr.bf16.mxu0 0
    %2063 = vmatpush1.bf16.msra.mxu0 0
    %2064 = vmatprep.subr.bf16.mxu0 0
    %2065 = vmatpush1.bf16.msra.mxu0 0
    %2066 = vmatprep.subr.bf16.mxu0 0
    %2067 = vmatpush1.bf16.msra.mxu0 0
    %2068 = vmatprep.subr.bf16.mxu0 0
    %2069 = vmatpush1.bf16.msra.mxu0 0
    %2070 = vmatprep.subr.bf16.mxu0 0
    %2071 = vmatpush1.bf16.msra.mxu0 0
    %2072 = vmatprep.subr.bf16.mxu0 0
    %2073 = vmatpush1.bf16.msra.mxu0 0
    %2074 = vmatprep.subr.bf16.mxu0 0
    %2075 = vmatpush1.bf16.msra.mxu0 0
    %2076 = vmatprep.subr.bf16.mxu0 0
    %2077 = vmatpush1.bf16.msra.mxu0 0
    %2078 = vmatprep.mubr.bf16.mxu0 0
    %2079 = vmatmul.mubr.bf16.gmra.mrb[0].mxu0 %v2044
    %v2080 = vpop.f32.mrb[0].mxu0
    %v2081 = vadd.f32 %v2031, %v2080
    %v2082 = vpop.f32.mrb[0].mxu0
    %v2083 = vpop.f32.mrb[0].mxu0
    %v2084 = vadd.f32 %v2034, %v2083
    %v2085 = vpop.f32.mrb[0].mxu0
    %2086 = vdwg.mxu0
    %s2087 = scalar_lea.vmem [#allocation9], 8
    %v2088 = vld [vmem:[%s2087] sm:$0xff]
    %v2089 = vadd.f32 %v1335, %v2081
    %v2090 = vadd.f32 %v1336, %v2084
    %v2091 = vlaneseq
    %v2092 = vshrl.u32 %v2091, 7
    %v2093 = vsub.s32 0, %v2092
    %v2094 = vrot.slane %v2088, %v2093
    %v2095 = vadd.f32 %v2089, %v2094
    %v2096 = vadd.f32 %v2090, %v2094
    %v2097 = vsel %vm263, %v2095, 0.0
    %2098 = vadd.xlane.f32.xlu0 %v2097
    %v2099 = vpop.xlane.xlu0 %2098
    %v2100 = vsel %vm263, %v2096, 0.0
    %2101 = vadd.xlane.f32.xlu0 %v2100
    %v2102 = vpop.xlane.xlu0 %2101
    %v2103 = vmul.f32 %v2099, %v270
    %v2104 = vmul.f32 %v2102, %v270
    %v2105 = vsub.f32 %v2095, %v2103
    %v2106 = vsub.f32 %v2096, %v2104
    %v2107 = vmul.f32 %v2105, %v2105
    %v2108 = vmul.f32 %v2106, %v2106
    %v2109 = vsel %vm263, %v2107, 0.0
    %2110 = vadd.xlane.f32.xlu0 %v2109
    %v2111 = vpop.xlane.xlu0 %2110
    %v2112 = vsel %vm263, %v2108, 0.0
    %2113 = vadd.xlane.f32.xlu0 %v2112
    %v2114 = vpop.xlane.xlu0 %2113
    %v2115 = vmul.f32 %v2111, %v270
    %v2116 = vmul.f32 %v2114, %v270
    %v2117 = vadd.f32 %v2115, 1e-12
    %v2118 = vadd.f32 %v2116, 1e-12
    %v2119 = vrsqrt.pop %v2117
    %v2120 = vrsqrt.pop %v2118
    %v2121 = vmul.f32 %v2105, %v2119
    %v2122 = vmul.f32 %v2106, %v2120
    %v2123 = vlaneseq
    %v2124 = vshrl.u32 %v2123, 7
    %v2125 = vsub.s32 1, %v2124
    %v2126 = vrot.slane %v2088, %v2125
    %v2127 = vmul.f32 %v2121, %v2126
    %v2128 = vmul.f32 %v2122, %v2126
    %v2129 = vlaneseq
    %v2130 = vshrl.u32 %v2129, 7
    %v2131 = vsub.s32 2, %v2130
    %v2132 = vrot.slane %v2088, %v2131
    %v2133 = vadd.f32 %v2127, %v2132
    %v2134 = vadd.f32 %v2128, %v2132
    %v2135 = vpack.c.bf16 %v2134, %v2133
    %s2136 = scalar_lea.vmem %s10, 16
    %v2137 = vld [vmem:[%s2136] sm:$0xf]
    %v2138 = vld [vmem:[%s2136 + $0x4] sm:$0xf]
    %v2139 = vld [vmem:[%s2136 + $0x8] sm:$0xf]
    %v2140 = vld [vmem:[%s2136 + $0xc] sm:$0xf]
    %v2141 = vlaneseq
    %v2142 = vshrl.u32 %v2141, 7
    %v2143 = vsub.s32 3, %v2142
    %v2144 = vrot.slane %v2088, %v2143
    %v2149 = vunpack.c.l.b16 %v2137
    %v2150 = vunpack.c.l.b16 %v2138
    %v2151 = vunpack.c.l.b16 %v2139
    %v2152 = vunpack.c.l.b16 %v2140
    %v2153 = vpack.c.b16 %v2150, %v2149
    %v2154 = vpack.c.b16 %v2152, %v2151
    %v2158 = vsel %vm263, %v2135, 0
    %2160 = vmatprep.subr.bf16.mxu0 0
    %2161 = vmatpush1.bf16.msra.mxu0 %v2153
    %2162 = vmatprep.subr.bf16.mxu0 0
    %2163 = vmatpush1.bf16.msra.mxu0 %v2154
    %2164 = vmatprep.subr.bf16.mxu0 0
    %2165 = vmatpush1.bf16.msra.mxu0 0
    %2166 = vmatprep.subr.bf16.mxu0 0
    %2167 = vmatpush1.bf16.msra.mxu0 0
    %2168 = vmatprep.subr.bf16.mxu0 0
    %2169 = vmatpush1.bf16.msra.mxu0 0
    %2170 = vmatprep.subr.bf16.mxu0 0
    %2171 = vmatpush1.bf16.msra.mxu0 0
    %2172 = vmatprep.subr.bf16.mxu0 0
    %2173 = vmatpush1.bf16.msra.mxu0 0
    %2174 = vmatprep.subr.bf16.mxu0 0
    %2175 = vmatpush1.bf16.msra.mxu0 0
    %2176 = vmatprep.subr.bf16.mxu0 0
    %2177 = vmatpush1.bf16.msra.mxu0 0
    %2178 = vmatprep.subr.bf16.mxu0 0
    %2179 = vmatpush1.bf16.msra.mxu0 0
    %2180 = vmatprep.subr.bf16.mxu0 0
    %2181 = vmatpush1.bf16.msra.mxu0 0
    %2182 = vmatprep.subr.bf16.mxu0 0
    %2183 = vmatpush1.bf16.msra.mxu0 0
    %2184 = vmatprep.subr.bf16.mxu0 0
    %2185 = vmatpush1.bf16.msra.mxu0 0
    %2186 = vmatprep.subr.bf16.mxu0 0
    %2187 = vmatpush1.bf16.msra.mxu0 0
    %2188 = vmatprep.subr.bf16.mxu0 0
    %2189 = vmatpush1.bf16.msra.mxu0 0
    %2190 = vmatprep.subr.bf16.mxu0 0
    %2191 = vmatpush1.bf16.msra.mxu0 0
    %2192 = vmatprep.mubr.bf16.mxu0 0
    %2193 = vmatmul.mubr.bf16.gmra.mrb[0].mxu0 %v2158
    %v2194 = vpop.f32.mrb[0].mxu0
    %v2195 = vadd.f32 %v2144, %v2194
    %v2196 = vpop.f32.mrb[0].mxu0
    %v2197 = vpop.f32.mrb[0].mxu0
    %v2198 = vadd.f32 %v2144, %v2197
    %v2199 = vpop.f32.mrb[0].mxu0
    %2200 = vdwg.mxu0
    %v2201 = vmul.f32 %v2195, 0.5
    %v2202 = vmul.f32 %v2198, 0.5
    %v2203 = vmul.f32 %v2195, 0.044715
    %v2204 = vmul.f32 %v2198, 0.044715
    %v2205 = vmul.f32 %v2203, %v2195
    %v2206 = vmul.f32 %v2204, %v2198
    %v2207 = vmul.f32 %v2205, %v2195
    %v2208 = vmul.f32 %v2206, %v2198
    %v2209 = vadd.f32 %v2195, %v2207
    %v2210 = vadd.f32 %v2198, %v2208
    %v2211 = vmul.f32 %v2209, 0.7978846
    %v2212 = vmul.f32 %v2210, 0.7978846
    %v2213 = vtanh.pop %v2211
    %v2214 = vtanh.pop %v2212
    %v2215 = vadd.f32 %v2213, 1.0
    %v2216 = vadd.f32 %v2214, 1.0
    %v2217 = vmul.f32 %v2201, %v2215
    %v2218 = vmul.f32 %v2202, %v2216
    %v2219 = vpack.c.bf16 %v2218, %v2217
    %s2220 = scalar_lea.vmem %s11, 64
    %v2221 = vld [vmem:[%s2220] sm:$0xf]
    %v2222 = vld [vmem:[%s2220 + $0x4] sm:$0xf]
    %v2223 = vld [vmem:[%s2220 + $0x8] sm:$0xf]
    %v2224 = vld [vmem:[%s2220 + $0xc] sm:$0xf]
    %v2225 = vld [vmem:[%s2220 + $0x10] sm:$0xf]
    %v2226 = vld [vmem:[%s2220 + $0x14] sm:$0xf]
    %v2227 = vld [vmem:[%s2220 + $0x18] sm:$0xf]
    %v2228 = vld [vmem:[%s2220 + $0x1c] sm:$0xf]
    %v2229 = vld [vmem:[%s2220 + $0x20] sm:$0xf]
    %v2230 = vld [vmem:[%s2220 + $0x24] sm:$0xf]
    %v2231 = vld [vmem:[%s2220 + $0x28] sm:$0xf]
    %v2232 = vld [vmem:[%s2220 + $0x2c] sm:$0xf]
    %v2233 = vld [vmem:[%s2220 + $0x30] sm:$0xf]
    %v2234 = vld [vmem:[%s2220 + $0x34] sm:$0xf]
    %v2235 = vld [vmem:[%s2220 + $0x38] sm:$0xf]
    %v2236 = vld [vmem:[%s2220 + $0x3c] sm:$0xf]
    %v2237 = vlaneseq
    %v2238 = vshrl.u32 %v2237, 7
    %v2239 = vsub.s32 4, %v2238
    %v2240 = vrot.slane %v2088, %v2239
    %v2257 = vunpack.c.l.b16 %v2221
    %v2258 = vunpack.c.l.b16 %v2222
    %v2259 = vunpack.c.l.b16 %v2223
    %v2260 = vunpack.c.l.b16 %v2224
    %v2261 = vunpack.c.l.b16 %v2225
    %v2262 = vunpack.c.l.b16 %v2226
    %v2263 = vunpack.c.l.b16 %v2227
    %v2264 = vunpack.c.l.b16 %v2228
    %v2265 = vunpack.c.l.b16 %v2229
    %v2266 = vunpack.c.l.b16 %v2230
    %v2267 = vunpack.c.l.b16 %v2231
    %v2268 = vunpack.c.l.b16 %v2232
    %v2269 = vunpack.c.l.b16 %v2233
    %v2270 = vunpack.c.l.b16 %v2234
    %v2271 = vunpack.c.l.b16 %v2235
    %v2272 = vunpack.c.l.b16 %v2236
    %v2273 = vpack.c.b16 %v2258, %v2257
    %v2274 = vpack.c.b16 %v2260, %v2259
    %v2275 = vpack.c.b16 %v2262, %v2261
    %v2276 = vpack.c.b16 %v2264, %v2263
    %v2277 = vpack.c.b16 %v2266, %v2265
    %v2278 = vpack.c.b16 %v2268, %v2267
    %v2279 = vpack.c.b16 %v2270, %v2269
    %v2280 = vpack.c.b16 %v2272, %v2271
    %2289 = vmatprep.subr.bf16.mxu0 0
    %2290 = vmatpush1.bf16.msra.mxu0 %v2273
    %2291 = vmatprep.subr.bf16.mxu0 0
    %2292 = vmatpush1.bf16.msra.mxu0 %v2274
    %2293 = vmatprep.subr.bf16.mxu0 0
    %2294 = vmatpush1.bf16.msra.mxu0 %v2275
    %2295 = vmatprep.subr.bf16.mxu0 0
    %2296 = vmatpush1.bf16.msra.mxu0 %v2276
    %2297 = vmatprep.subr.bf16.mxu0 0
    %2298 = vmatpush1.bf16.msra.mxu0 %v2277
    %2299 = vmatprep.subr.bf16.mxu0 0
    %2300 = vmatpush1.bf16.msra.mxu0 %v2278
    %2301 = vmatprep.subr.bf16.mxu0 0
    %2302 = vmatpush1.bf16.msra.mxu0 %v2279
    %2303 = vmatprep.subr.bf16.mxu0 0
    %2304 = vmatpush1.bf16.msra.mxu0 %v2280
    %2305 = vmatprep.subr.bf16.mxu0 0
    %2306 = vmatpush1.bf16.msra.mxu0 0
    %2307 = vmatprep.subr.bf16.mxu0 0
    %2308 = vmatpush1.bf16.msra.mxu0 0
    %2309 = vmatprep.subr.bf16.mxu0 0
    %2310 = vmatpush1.bf16.msra.mxu0 0
    %2311 = vmatprep.subr.bf16.mxu0 0
    %2312 = vmatpush1.bf16.msra.mxu0 0
    %2313 = vmatprep.subr.bf16.mxu0 0
    %2314 = vmatpush1.bf16.msra.mxu0 0
    %2315 = vmatprep.subr.bf16.mxu0 0
    %2316 = vmatpush1.bf16.msra.mxu0 0
    %2317 = vmatprep.subr.bf16.mxu0 0
    %2318 = vmatpush1.bf16.msra.mxu0 0
    %2319 = vmatprep.subr.bf16.mxu0 0
    %2320 = vmatpush1.bf16.msra.mxu0 0
    %2321 = vmatprep.mubr.bf16.mxu0 0
    %2322 = vmatmul.mubr.bf16.gmra.mrb[0].mxu0 %v2219
    %v2323 = vpop.f32.mrb[0].mxu0
    %v2324 = vadd.f32 %v2240, %v2323
    %v2325 = vpop.f32.mrb[0].mxu0
    %v2326 = vpop.f32.mrb[0].mxu0
    %v2327 = vadd.f32 %v2240, %v2326
    %v2328 = vpop.f32.mrb[0].mxu0
    %2329 = vdwg.mxu0
    %v2330 = vadd.f32 %v2133, %v2324
    %v2331 = vadd.f32 %v2134, %v2327
    %v2332 = vsel %vm263, %v2330, 0.0
    %2333 = vadd.xlane.f32.xlu0 %v2332
    %v2334 = vpop.xlane.xlu0 %2333
    %v2335 = vsel %vm263, %v2331, 0.0
    %2336 = vadd.xlane.f32.xlu0 %v2335
    %v2337 = vpop.xlane.xlu0 %2336
    %v2338 = vmul.f32 %v2334, %v270
    %v2339 = vmul.f32 %v2337, %v270
    %v2340 = vsub.f32 %v2330, %v2338
    %v2341 = vsub.f32 %v2331, %v2339
    %v2342 = vmul.f32 %v2340, %v2340
    %v2343 = vmul.f32 %v2341, %v2341
    %v2344 = vsel %vm263, %v2342, 0.0
    %2345 = vadd.xlane.f32.xlu0 %v2344
    %v2346 = vpop.xlane.xlu0 %2345
    %v2347 = vsel %vm263, %v2343, 0.0
    %2348 = vadd.xlane.f32.xlu0 %v2347
    %v2349 = vpop.xlane.xlu0 %2348
    %v2350 = vmul.f32 %v2346, %v270
    %v2351 = vmul.f32 %v2349, %v270
    %v2352 = vadd.f32 %v2350, 1e-12
    %v2353 = vadd.f32 %v2351, 1e-12
    %v2354 = vrsqrt.pop %v2352
    %v2355 = vrsqrt.pop %v2353
    %v2356 = vmul.f32 %v2340, %v2354
    %v2357 = vmul.f32 %v2341, %v2355
    %v2358 = vlaneseq
    %v2359 = vshrl.u32 %v2358, 7
    %v2360 = vsub.s32 5, %v2359
    %v2361 = vrot.slane %v2088, %v2360
    %v2362 = vmul.f32 %v2356, %v2361
    %v2363 = vmul.f32 %v2357, %v2361
    %v2364 = vlaneseq
    %v2365 = vshrl.u32 %v2364, 7
    %v2366 = vsub.s32 6, %v2365
    %v2367 = vrot.slane %v2088, %v2366
    %v2368 = vadd.f32 %v2362, %v2367
    %v2369 = vadd.f32 %v2363, %v2367
    %v2371 = vrot.slane %v2369, 7
    %vm2373 = vcmask 1040384
    %v2374 = vsel %vm2373, %v2368, %v2371
    %v2375 = vpack.c.bf16 %v2374, %v2374
    %v2376 = vld [vmem:[#allocation10] sm:$0xf]
    %v2377 = vld [vmem:[#allocation10 + $0x4] sm:$0xf]
    %v2378 = vld [vmem:[#allocation10 + $0x8] sm:$0xf]
    %v2379 = vld [vmem:[#allocation10 + $0xc] sm:$0xf]
    %v2380 = vld [vmem:[%s14] sm:$0x1]
    %v2382 = vlaneseq
    %v2383 = vshrl.u32 %v2382, 7
    %v2384 = vsub.s32 0, %v2383
    %v2385 = vrot.slane %v2380, %v2384
    %v2391 = vunpack.c.l.b16 %v2376
    %v2392 = vunpack.c.l.b16 %v2377
    %v2393 = vunpack.c.l.b16 %v2378
    %v2394 = vunpack.c.l.b16 %v2379
    %v2395 = vpack.c.b16 %v2392, %v2391
    %v2396 = vpack.c.b16 %v2394, %v2393
    %v2400 = vsel %vm263, %v2375, 0
    %2402 = vmatprep.subr.bf16.mxu0 0
    %2403 = vmatpush1.bf16.msra.mxu0 %v2395
    %2404 = vmatprep.subr.bf16.mxu0 0
    %2405 = vmatpush1.bf16.msra.mxu0 %v2396
    %2406 = vmatprep.subr.bf16.mxu0 0
    %2407 = vmatpush1.bf16.msra.mxu0 0
    %2408 = vmatprep.subr.bf16.mxu0 0
    %2409 = vmatpush1.bf16.msra.mxu0 0
    %2410 = vmatprep.subr.bf16.mxu0 0
    %2411 = vmatpush1.bf16.msra.mxu0 0
    %2412 = vmatprep.subr.bf16.mxu0 0
    %2413 = vmatpush1.bf16.msra.mxu0 0
    %2414 = vmatprep.subr.bf16.mxu0 0
    %2415 = vmatpush1.bf16.msra.mxu0 0
    %2416 = vmatprep.subr.bf16.mxu0 0
    %2417 = vmatpush1.bf16.msra.mxu0 0
    %2418 = vmatprep.subr.bf16.mxu0 0
    %2419 = vmatpush1.bf16.msra.mxu0 0
    %2420 = vmatprep.subr.bf16.mxu0 0
    %2421 = vmatpush1.bf16.msra.mxu0 0
    %2422 = vmatprep.subr.bf16.mxu0 0
    %2423 = vmatpush1.bf16.msra.mxu0 0
    %2424 = vmatprep.subr.bf16.mxu0 0
    %2425 = vmatpush1.bf16.msra.mxu0 0
    %2426 = vmatprep.subr.bf16.mxu0 0
    %2427 = vmatpush1.bf16.msra.mxu0 0
    %2428 = vmatprep.subr.bf16.mxu0 0
    %2429 = vmatpush1.bf16.msra.mxu0 0
    %2430 = vmatprep.subr.bf16.mxu0 0
    %2431 = vmatpush1.bf16.msra.mxu0 0
    %2432 = vmatprep.subr.bf16.mxu0 0
    %2433 = vmatpush1.bf16.msra.mxu0 0
    %2434 = vmatprep.mubr.bf16.mxu0 0
    %2435 = vmatmul.mubr.bf16.gmra.mrb[0].mxu0 %v2400
    %v2436 = vpop.f32.mrb[0].mxu0
    %v2437 = vadd.f32 %v2385, %v2436
    %v2438 = vpop.f32.mrb[0].mxu0
    %v2439 = vpop.f32.mrb[0].mxu0
    %v2440 = vpop.f32.mrb[0].mxu0
    %2441 = vdwg.mxu0
    %v2442 = vmax.f32 %v2437, 0.0
    %v2443 = vpack.c.bf16 %v2442, %v2442
    %s2444 = scalar_lea.vmem [#allocation10], 16
    %v2445 = vld [vmem:[%s2444] sm:$0xf]
    %v2446 = vld [vmem:[%s2444 + $0x4] sm:$0xf]
    %v2447 = vld [vmem:[%s2444 + $0x8] sm:$0xf]
    %v2448 = vld [vmem:[%s2444 + $0xc] sm:$0xf]
    %s2449 = scalar_lea.vmem %s14, 1
    %v2450 = vld [vmem:[%s2449] sm:$0x1]
    %v2452 = vlaneseq
    %v2453 = vshrl.u32 %v2452, 7
    %v2454 = vsub.s32 0, %v2453
    %v2455 = vrot.slane %v2450, %v2454
    %v2461 = vunpack.c.l.b16 %v2445
    %v2462 = vunpack.c.l.b16 %v2446
    %v2463 = vunpack.c.l.b16 %v2447
    %v2464 = vunpack.c.l.b16 %v2448
    %v2465 = vpack.c.b16 %v2462, %v2461
    %v2466 = vpack.c.b16 %v2464, %v2463
    %v2470 = vsel %vm263, %v2443, 0
    %2472 = vmatprep.subr.bf16.mxu0 0
    %2473 = vmatpush1.bf16.msra.mxu0 %v2465
    %2474 = vmatprep.subr.bf16.mxu0 0
    %2475 = vmatpush1.bf16.msra.mxu0 %v2466
    %2476 = vmatprep.subr.bf16.mxu0 0
    %2477 = vmatpush1.bf16.msra.mxu0 0
    %2478 = vmatprep.subr.bf16.mxu0 0
    %2479 = vmatpush1.bf16.msra.mxu0 0
    %2480 = vmatprep.subr.bf16.mxu0 0
    %2481 = vmatpush1.bf16.msra.mxu0 0
    %2482 = vmatprep.subr.bf16.mxu0 0
    %2483 = vmatpush1.bf16.msra.mxu0 0
    %2484 = vmatprep.subr.bf16.mxu0 0
    %2485 = vmatpush1.bf16.msra.mxu0 0
    %2486 = vmatprep.subr.bf16.mxu0 0
    %2487 = vmatpush1.bf16.msra.mxu0 0
    %2488 = vmatprep.subr.bf16.mxu0 0
    %2489 = vmatpush1.bf16.msra.mxu0 0
    %2490 = vmatprep.subr.bf16.mxu0 0
    %2491 = vmatpush1.bf16.msra.mxu0 0
    %2492 = vmatprep.subr.bf16.mxu0 0
    %2493 = vmatpush1.bf16.msra.mxu0 0
    %2494 = vmatprep.subr.bf16.mxu0 0
    %2495 = vmatpush1.bf16.msra.mxu0 0
    %2496 = vmatprep.subr.bf16.mxu0 0
    %2497 = vmatpush1.bf16.msra.mxu0 0
    %2498 = vmatprep.subr.bf16.mxu0 0
    %2499 = vmatpush1.bf16.msra.mxu0 0
    %2500 = vmatprep.subr.bf16.mxu0 0
    %2501 = vmatpush1.bf16.msra.mxu0 0
    %2502 = vmatprep.subr.bf16.mxu0 0
    %2503 = vmatpush1.bf16.msra.mxu0 0
    %2504 = vmatprep.mubr.bf16.mxu0 0
    %2505 = vmatmul.mubr.bf16.gmra.mrb[0].mxu0 %v2470
    %v2506 = vpop.f32.mrb[0].mxu0
    %v2507 = vadd.f32 %v2455, %v2506
    %v2508 = vpop.f32.mrb[0].mxu0
    %v2509 = vpop.f32.mrb[0].mxu0
    %v2510 = vpop.f32.mrb[0].mxu0
    %2511 = vdwg.mxu0
    %v2512 = vmax.f32 %v2507, 0.0
    %v2513 = vpack.c.bf16 %v2512, %v2512
    %s2514 = scalar_lea.vmem [#allocation10], 32
    %v2515 = vld [vmem:[%s2514] sm:$0xf]
    %v2516 = vld [vmem:[%s2514 + $0x4] sm:$0xf]
    %v2517 = vld [vmem:[%s2514 + $0x8] sm:$0xf]
    %v2518 = vld [vmem:[%s2514 + $0xc] sm:$0xf]
    %s2519 = scalar_lea.vmem %s14, 2
    %v2520 = vld [vmem:[%s2519] sm:$0x1]
    %v2522 = vlaneseq
    %v2523 = vshrl.u32 %v2522, 7
    %v2524 = vsub.s32 0, %v2523
    %v2525 = vrot.slane %v2520, %v2524
    %v2531 = vunpack.c.l.b16 %v2515
    %v2532 = vunpack.c.l.b16 %v2516
    %v2533 = vunpack.c.l.b16 %v2517
    %v2534 = vunpack.c.l.b16 %v2518
    %v2535 = vpack.c.b16 %v2532, %v2531
    %v2536 = vpack.c.b16 %v2534, %v2533
    %v2540 = vsel %vm263, %v2513, 0
    %2542 = vmatprep.subr.bf16.mxu0 0
    %2543 = vmatpush1.bf16.msra.mxu0 %v2535
    %2544 = vmatprep.subr.bf16.mxu0 0
    %2545 = vmatpush1.bf16.msra.mxu0 %v2536
    %2546 = vmatprep.subr.bf16.mxu0 0
    %2547 = vmatpush1.bf16.msra.mxu0 0
    %2548 = vmatprep.subr.bf16.mxu0 0
    %2549 = vmatpush1.bf16.msra.mxu0 0
    %2550 = vmatprep.subr.bf16.mxu0 0
    %2551 = vmatpush1.bf16.msra.mxu0 0
    %2552 = vmatprep.subr.bf16.mxu0 0
    %2553 = vmatpush1.bf16.msra.mxu0 0
    %2554 = vmatprep.subr.bf16.mxu0 0
    %2555 = vmatpush1.bf16.msra.mxu0 0
    %2556 = vmatprep.subr.bf16.mxu0 0
    %2557 = vmatpush1.bf16.msra.mxu0 0
    %2558 = vmatprep.subr.bf16.mxu0 0
    %2559 = vmatpush1.bf16.msra.mxu0 0
    %2560 = vmatprep.subr.bf16.mxu0 0
    %2561 = vmatpush1.bf16.msra.mxu0 0
    %2562 = vmatprep.subr.bf16.mxu0 0
    %2563 = vmatpush1.bf16.msra.mxu0 0
    %2564 = vmatprep.subr.bf16.mxu0 0
    %2565 = vmatpush1.bf16.msra.mxu0 0
    %2566 = vmatprep.subr.bf16.mxu0 0
    %2567 = vmatpush1.bf16.msra.mxu0 0
    %2568 = vmatprep.subr.bf16.mxu0 0
    %2569 = vmatpush1.bf16.msra.mxu0 0
    %2570 = vmatprep.subr.bf16.mxu0 0
    %2571 = vmatpush1.bf16.msra.mxu0 0
    %2572 = vmatprep.subr.bf16.mxu0 0
    %2573 = vmatpush1.bf16.msra.mxu0 0
    %2574 = vmatprep.mubr.bf16.mxu0 0
    %2575 = vmatmul.mubr.bf16.gmra.mrb[0].mxu0 %v2540
    %v2576 = vpop.f32.mrb[0].mxu0
    %v2577 = vadd.f32 %v2525, %v2576
    %v2578 = vpop.f32.mrb[0].mxu0
    %v2579 = vpop.f32.mrb[0].mxu0
    %v2580 = vpop.f32.mrb[0].mxu0
    %2581 = vdwg.mxu0
    %v2582 = vmax.f32 %v2577, 0.0
    %v2583 = vpack.c.bf16 %v2582, %v2582
    %s2584 = scalar_lea.vmem [#allocation10], 48
    %v2585 = vld [vmem:[%s2584] sm:$0xf]
    %v2586 = vld [vmem:[%s2584 + $0x4] sm:$0xf]
    %v2587 = vld [vmem:[%s2584 + $0x8] sm:$0xf]
    %v2588 = vld [vmem:[%s2584 + $0xc] sm:$0xf]
    %s2589 = scalar_lea.vmem %s14, 3
    %v2590 = vld [vmem:[%s2589] sm:$0x1]
    %v2592 = vlaneseq
    %v2593 = vshrl.u32 %v2592, 7
    %v2594 = vsub.s32 0, %v2593
    %v2595 = vrot.slane %v2590, %v2594
    %v2601 = vunpack.c.l.b16 %v2585
    %v2602 = vunpack.c.l.b16 %v2586
    %v2603 = vunpack.c.l.b16 %v2587
    %v2604 = vunpack.c.l.b16 %v2588
    %v2605 = vpack.c.b16 %v2602, %v2601
    %v2606 = vpack.c.b16 %v2604, %v2603
    %v2610 = vsel %vm263, %v2583, 0
    %2612 = vmatprep.subr.bf16.mxu0 0
    %2613 = vmatpush1.bf16.msra.mxu0 %v2605
    %2614 = vmatprep.subr.bf16.mxu0 0
    %2615 = vmatpush1.bf16.msra.mxu0 %v2606
    %2616 = vmatprep.subr.bf16.mxu0 0
    %2617 = vmatpush1.bf16.msra.mxu0 0
    %2618 = vmatprep.subr.bf16.mxu0 0
    %2619 = vmatpush1.bf16.msra.mxu0 0
    %2620 = vmatprep.subr.bf16.mxu0 0
    %2621 = vmatpush1.bf16.msra.mxu0 0
    %2622 = vmatprep.subr.bf16.mxu0 0
    %2623 = vmatpush1.bf16.msra.mxu0 0
    %2624 = vmatprep.subr.bf16.mxu0 0
    %2625 = vmatpush1.bf16.msra.mxu0 0
    %2626 = vmatprep.subr.bf16.mxu0 0
    %2627 = vmatpush1.bf16.msra.mxu0 0
    %2628 = vmatprep.subr.bf16.mxu0 0
    %2629 = vmatpush1.bf16.msra.mxu0 0
    %2630 = vmatprep.subr.bf16.mxu0 0
    %2631 = vmatpush1.bf16.msra.mxu0 0
    %2632 = vmatprep.subr.bf16.mxu0 0
    %2633 = vmatpush1.bf16.msra.mxu0 0
    %2634 = vmatprep.subr.bf16.mxu0 0
    %2635 = vmatpush1.bf16.msra.mxu0 0
    %2636 = vmatprep.subr.bf16.mxu0 0
    %2637 = vmatpush1.bf16.msra.mxu0 0
    %2638 = vmatprep.subr.bf16.mxu0 0
    %2639 = vmatpush1.bf16.msra.mxu0 0
    %2640 = vmatprep.subr.bf16.mxu0 0
    %2641 = vmatpush1.bf16.msra.mxu0 0
    %2642 = vmatprep.subr.bf16.mxu0 0
    %2643 = vmatpush1.bf16.msra.mxu0 0
    %2644 = vmatprep.mubr.bf16.mxu0 0
    %2645 = vmatmul.mubr.bf16.gmra.mrb[0].mxu0 %v2610
    %v2646 = vpop.f32.mrb[0].mxu0
    %v2647 = vadd.f32 %v2595, %v2646
    %v2648 = vpop.f32.mrb[0].mxu0
    %v2649 = vpop.f32.mrb[0].mxu0
    %v2650 = vpop.f32.mrb[0].mxu0
    %2651 = vdwg.mxu0
    %2653 = vrot.lane.b32.xlu0 %v2647, 32
    %v2654 = vpop.permute.xlu0 %2653
    %v2656 = vsel %vm263, %v2374, %v2654
    %v2657 = vsel %vm213, %v2656, 0.0
    %2658 = vst [vmem:[%s15] sm:$0x3] %v2657
    // Predicated region
    $region86: #{bert_text_encoder_pretrain_forward.1} parent=1 // pred_check
      _
    $region87: #{bert_text_encoder_pretrain_forward.1} parent=1 // pred_check_branch
      %2660 = sbr.rel (0) target = $region89
    $region88: #{bert_text_encoder_pretrain_forward.1} parent=1 // pred_region
      _
    $region89: #{bert_text_encoder_pretrain_forward.1} parent=1 // pred_fallthru
      _
    // Predicated region
    $region90: #{bert_text_encoder_pretrain_forward.1} parent=1 // pred_check
      _
    $region91: #{bert_text_encoder_pretrain_forward.1} parent=1 // pred_check_branch
      %2662 = sbr.rel (0) target = $region93
    $region92: #{bert_text_encoder_pretrain_forward.1} parent=1 // pred_region
      _
    $region93: #{bert_text_encoder_pretrain_forward.1} parent=1 // pred_fallthru
      _
    %2663 = vsyncpa [#allocation3], 1
    %2664 = vsyncpa [#allocation5], 1
    %2665 = vsyncpa [#allocation8], 1
    %2666 = vsyncpa [#allocation11], 1

</llo_original>
